<compile_context>
chip_gen: v7x
topology: tpu7x:2x2x1
jax: 0.10.0
libtpu: 0.0.40
codegen_flags: <defaults>
</compile_context>

<pallas_src>
import jax
import jax.numpy as jnp
from jax.experimental import pallas as pl
from jax.experimental.pallas import tpu as pltpu


INPUT_SIZE = 512 * 2      # 1024
HALF = INPUT_SIZE // 2    # 512
HIDDEN = 1024


def _round_up(x, m):
    return (x + m - 1) // m * m


def similarity_kernel(x1_ref, x2_ref,
                      w1_ref, b1_ref,
                      w2_ref, b2_ref,
                      w3t_ref, b3_ref,
                      o_ref):
    # fc1 on the concatenated input, expressed as two matmuls against the two
    # sublane halves of the resident W1 tile (static slices -> free views).
    h1 = jnp.dot(x1_ref[...], w1_ref[:HALF, :],
                 preferred_element_type=jnp.float32)
    h1 = h1 + jnp.dot(x2_ref[...], w1_ref[HALF:, :],
                      preferred_element_type=jnp.float32)
    h1 = jnp.maximum(h1 + b1_ref[...], 0.0)          # bias + ReLU in f32 (VPU)

    # fc2 + ReLU: bf16 MXU operands, f32 accumulation and elementwise math.
    h2 = jnp.dot(h1.astype(jnp.bfloat16), w2_ref[...],
                 preferred_element_type=jnp.float32)
    h2 = jnp.maximum(h2 + b2_ref[...], 0.0)

    # fc3 (N == 1): VPU multiply + lane reduction instead of a 1024x1 matmul.
    logit = jnp.sum(h2 * w3t_ref[...], axis=-1, keepdims=True) + b3_ref[...]
    o_ref[...] = jax.nn.sigmoid(logit).astype(o_ref.dtype)


def similarity_net(x1, x2, params, *, block_b=256):
    """y = sigmoid(fc3(relu(fc2(relu(fc1(cat(x1, x2)))))))  — one pallas_call."""
    w1, b1, w2, b2, w3, b3 = params
    B = x1.shape[0]

    # Batch tile: multiple of 8 sublanes; pad B up to a multiple of the tile.
    tb = min(block_b, _round_up(B, 8))
    Bp = _round_up(B, tb)
    if Bp != B:
        pad = ((0, Bp - B), (0, 0))
        x1 = jnp.pad(x1, pad)
        x2 = jnp.pad(x2, pad)

    # bf16 streams for the MXU / HBM; small params stay f32 for the VPU path.
    x1b = x1.astype(jnp.bfloat16)
    x2b = x2.astype(jnp.bfloat16)
    w1b = w1.astype(jnp.bfloat16)            # full (1024, 1024); sliced in-kernel
    w2b = w2.astype(jnp.bfloat16)
    w3t = w3.reshape(1, HIDDEN).astype(jnp.float32)   # (1, 1024) for VPU reduce
    b1f = b1.astype(jnp.float32)
    b2f = b2.astype(jnp.float32)
    b3f = b3.astype(jnp.float32)

    grid = (Bp // tb,)

    def weight_spec(shape):
        return pl.BlockSpec(shape, lambda i: (0,) * len(shape))

    flops = 2 * Bp * (INPUT_SIZE * HIDDEN + HIDDEN * HIDDEN + HIDDEN)
    bytes_accessed = (
        (w1b.size + w2b.size) * 2                        # bf16 weights
        + (b1f.size + b2f.size + w3t.size + b3f.size) * 4
        + (x1b.size + x2b.size) * 2                      # bf16 activations
        + Bp * 4                                         # f32 output
    )

    out = pl.pallas_call(
        similarity_kernel,
        out_shape=jax.ShapeDtypeStruct((Bp, 1), jnp.float32),
        grid=grid,
        in_specs=[
            pl.BlockSpec((tb, HALF), lambda i: (i, 0)),   # x1 tile
            pl.BlockSpec((tb, HALF), lambda i: (i, 0)),   # x2 tile
            weight_spec((INPUT_SIZE, HIDDEN)),            # w1 (resident)
            weight_spec((1, HIDDEN)),                     # b1
            weight_spec((HIDDEN, HIDDEN)),                # w2 (resident)
            weight_spec((1, HIDDEN)),                     # b2
            weight_spec((1, HIDDEN)),                     # w3^T
            weight_spec((1, 1)),                          # b3
        ],
        out_specs=pl.BlockSpec((tb, 1), lambda i: (i, 0)),
        compiler_params=pltpu.CompilerParams(
            dimension_semantics=("parallel",),
            vmem_limit_bytes=24 << 20,
        ),
        cost_estimate=pl.CostEstimate(
            flops=flops, transcendentals=Bp, bytes_accessed=bytes_accessed),
    )(x1b, x2b, w1b, b1f, w2b, b2f, w3t, b3f)

    return out[:B]


def init_params(key):
    """Deterministic synthetic parameters, shapes per SimilarityNet.__init__.

    Weights stored (in_features, out_features) so y = x @ W + b, equivalent to
    PyTorch's x @ weight.T + bias.
    """
    ks = jax.random.split(key, 6)
    scale1 = 1.0 / jnp.sqrt(INPUT_SIZE)
    scale2 = 1.0 / jnp.sqrt(HIDDEN)
    w1 = jax.random.uniform(ks[0], (INPUT_SIZE, HIDDEN), jnp.float32,
                            -scale1, scale1)
    b1 = jax.random.uniform(ks[1], (1, HIDDEN), jnp.float32, -scale1, scale1)
    w2 = jax.random.uniform(ks[2], (HIDDEN, HIDDEN), jnp.float32,
                            -scale2, scale2)
    b2 = jax.random.uniform(ks[3], (1, HIDDEN), jnp.float32, -scale2, scale2)
    w3 = jax.random.uniform(ks[4], (HIDDEN, 1), jnp.float32, -scale2, scale2)
    b3 = jax.random.uniform(ks[5], (1, 1), jnp.float32, -scale2, scale2)
    return (w1, b1, w2, b2, w3, b3)


def reference(x1, x2, params):
    """Pure-JAX f32 reference of the PyTorch forward."""
    w1, b1, w2, b2, w3, b3 = params
    x = jnp.concatenate([x1, x2], axis=1)
    h = jax.nn.relu(x @ w1 + b1)
    h = jax.nn.relu(h @ w2 + b2)
    return jax.nn.sigmoid(h @ w3 + b3)


if __name__ == "__main__":
    key = jax.random.PRNGKey(0)
    kp, kx1, kx2 = jax.random.split(key, 3)

    B = 8  # small batch
    params = init_params(kp)
    x1 = jax.random.normal(kx1, (B, HALF), jnp.float32)
    x2 = jax.random.normal(kx2, (B, HALF), jnp.float32)

    out = similarity_net(x1, x2, params)
    out = jax.block_until_ready(out)

    ref = jax.block_until_ready(reference(x1, x2, params))
    assert out.shape == (B, 1)
    # bf16 matmul operands -> relaxed tolerance vs. the f32 reference.
    assert jnp.allclose(out, ref, atol=2e-2, rtol=2e-2), (
        f"max abs err {jnp.max(jnp.abs(out - ref))}")
    print("KERNEL_OK")
</pallas_src>

<mosaic_0001>
module attributes {stable_mosaic.version = 11 : i64} {
  func.func @similarity_kernel(%arg0: i32, %arg1: memref<8x512xbf16, #tpu.memory_space<vmem>>, %arg2: memref<8x512xbf16, #tpu.memory_space<vmem>>, %arg3: memref<1024x1024xbf16, #tpu.memory_space<vmem>>, %arg4: memref<1x1024xf32, #tpu.memory_space<vmem>>, %arg5: memref<1024x1024xbf16, #tpu.memory_space<vmem>>, %arg6: memref<1x1024xf32, #tpu.memory_space<vmem>>, %arg7: memref<1x1024xf32, #tpu.memory_space<vmem>>, %arg8: memref<1x1xf32, #tpu.memory_space<vmem>>, %arg9: memref<8x1xf32, #tpu.memory_space<vmem>>) attributes {dimension_semantics = [#tpu.dimension_semantics<parallel>], iteration_bounds = array<i64: 1>, scalar_prefetch = 0 : i64, scratch_operands = 0 : i64, tpu.core_type = #tpu.core_type<tc>, window_params = [{transform_indices = @transform_0, window_bounds = array<i64: 8, 512>}, {transform_indices = @transform_1, window_bounds = array<i64: 8, 512>}, {pipeline_mode = #tpu.pipeline_mode<synchronous>, transform_indices = @transform_2, window_bounds = array<i64: 1024, 1024>}, {pipeline_mode = #tpu.pipeline_mode<synchronous>, transform_indices = @transform_3, window_bounds = array<i64: 1, 1024>}, {pipeline_mode = #tpu.pipeline_mode<synchronous>, transform_indices = @transform_4, window_bounds = array<i64: 1024, 1024>}, {pipeline_mode = #tpu.pipeline_mode<synchronous>, transform_indices = @transform_5, window_bounds = array<i64: 1, 1024>}, {pipeline_mode = #tpu.pipeline_mode<synchronous>, transform_indices = @transform_6, window_bounds = array<i64: 1, 1024>}, {pipeline_mode = #tpu.pipeline_mode<synchronous>, transform_indices = @transform_7, window_bounds = array<i64: 1, 1>}, {transform_indices = @transform_8, window_bounds = array<i64: 8, 1>}]} {
    %c0 = arith.constant 0 : index
    %c0_0 = arith.constant 0 : index
    %0 = vector.load %arg1[%c0, %c0_0] : memref<8x512xbf16, #tpu.memory_space<vmem>>, vector<8x512xbf16>
    %c0_1 = arith.constant 0 : index
    %c0_2 = arith.constant 0 : index
    %1 = vector.load %arg3[%c0_1, %c0_2] : memref<1024x1024xbf16, #tpu.memory_space<vmem>>, vector<512x1024xbf16>
    %cst = arith.constant dense<0.000000e+00> : vector<8x1024xf32>
    %2 = tpu.matmul %0, %1, %cst {dimension_numbers = #tpu.dot_dimension_numbers<[1], [0], [0], [1], [0, 0, 1, 1], [], []>} : vector<8x512xbf16>, vector<512x1024xbf16>, vector<8x1024xf32> -> vector<8x1024xf32>
    %c0_3 = arith.constant 0 : index
    %c0_4 = arith.constant 0 : index
    %3 = vector.load %arg2[%c0_3, %c0_4] : memref<8x512xbf16, #tpu.memory_space<vmem>>, vector<8x512xbf16>
    %c512 = arith.constant 512 : index
    %c0_5 = arith.constant 0 : index
    %4 = vector.load %arg3[%c512, %c0_5] : memref<1024x1024xbf16, #tpu.memory_space<vmem>>, vector<512x1024xbf16>
    %cst_6 = arith.constant dense<0.000000e+00> : vector<8x1024xf32>
    %5 = tpu.matmul %3, %4, %cst_6 {dimension_numbers = #tpu.dot_dimension_numbers<[1], [0], [0], [1], [0, 0, 1, 1], [], []>} : vector<8x512xbf16>, vector<512x1024xbf16>, vector<8x1024xf32> -> vector<8x1024xf32>
    %6 = arith.addf %2, %5 : vector<8x1024xf32>
    %c0_7 = arith.constant 0 : index
    %c0_8 = arith.constant 0 : index
    %7 = vector.load %arg4[%c0_7, %c0_8] : memref<1x1024xf32, #tpu.memory_space<vmem>>, vector<1x1024xf32>
    %8 = vector.broadcast %7 : vector<1x1024xf32> to vector<8x1024xf32>
    %9 = arith.addf %6, %8 : vector<8x1024xf32>
    %cst_9 = arith.constant 0.000000e+00 : f32
    %10 = vector.broadcast %cst_9 : f32 to vector<8x1024xf32>
    %11 = arith.maximumf %9, %10 : vector<8x1024xf32>
    %12 = arith.truncf %11 : vector<8x1024xf32> to vector<8x1024xbf16>
    %c0_10 = arith.constant 0 : index
    %c0_11 = arith.constant 0 : index
    %13 = vector.load %arg5[%c0_10, %c0_11] : memref<1024x1024xbf16, #tpu.memory_space<vmem>>, vector<1024x1024xbf16>
    %cst_12 = arith.constant dense<0.000000e+00> : vector<8x1024xf32>
    %14 = tpu.matmul %12, %13, %cst_12 {dimension_numbers = #tpu.dot_dimension_numbers<[1], [0], [0], [1], [0, 0, 1, 1], [], []>} : vector<8x1024xbf16>, vector<1024x1024xbf16>, vector<8x1024xf32> -> vector<8x1024xf32>
    %c0_13 = arith.constant 0 : index
    %c0_14 = arith.constant 0 : index
    %15 = vector.load %arg6[%c0_13, %c0_14] : memref<1x1024xf32, #tpu.memory_space<vmem>>, vector<1x1024xf32>
    %16 = vector.broadcast %15 : vector<1x1024xf32> to vector<8x1024xf32>
    %17 = arith.addf %14, %16 : vector<8x1024xf32>
    %cst_15 = arith.constant 0.000000e+00 : f32
    %18 = vector.broadcast %cst_15 : f32 to vector<8x1024xf32>
    %19 = arith.maximumf %17, %18 : vector<8x1024xf32>
    %c0_16 = arith.constant 0 : index
    %c0_17 = arith.constant 0 : index
    %20 = vector.load %arg7[%c0_16, %c0_17] : memref<1x1024xf32, #tpu.memory_space<vmem>>, vector<1x1024xf32>
    %21 = vector.broadcast %20 : vector<1x1024xf32> to vector<8x1024xf32>
    %22 = arith.mulf %19, %21 : vector<8x1024xf32>
    %cst_18 = arith.constant dense<0.000000e+00> : vector<8xf32>
    %23 = vector.multi_reduction <add>, %22, %cst_18 [1] : vector<8x1024xf32> to vector<8xf32>
    %24 = vector.shape_cast %23 : vector<8xf32> to vector<8x1xf32>
    %c0_19 = arith.constant 0 : index
    %c0_20 = arith.constant 0 : index
    %25 = vector.load %arg8[%c0_19, %c0_20] : memref<1x1xf32, #tpu.memory_space<vmem>>, vector<1x1xf32>
    %26 = vector.broadcast %25 : vector<1x1xf32> to vector<8x1xf32>
    %27 = arith.addf %24, %26 : vector<8x1xf32>
    %28 = arith.negf %27 : vector<8x1xf32>
    %29 = math.exp %28 : vector<8x1xf32>
    %cst_21 = arith.constant 1.000000e+00 : f32
    %30 = vector.broadcast %cst_21 : f32 to vector<8x1xf32>
    %31 = arith.addf %30, %29 : vector<8x1xf32>
    %32 = arith.divf %30, %31 : vector<8x1xf32>
    %c0_22 = arith.constant 0 : index
    %c0_23 = arith.constant 0 : index
    %33 = vector.load %arg9[%c0_22, %c0_23] : memref<8x1xf32, #tpu.memory_space<vmem>>, vector<8x1xf32>
    tpu.vector_store %arg9[%c0_22, %c0_23], %32 {strides = array<i32>} : memref<8x1xf32, #tpu.memory_space<vmem>>, vector<8x1xf32>,
    return
  }
  func.func @transform_0(%arg0: i32) -> (i32, i32) {
    %c0_i32 = arith.constant 0 : i32
    %c0_i32_0 = arith.constant 0 : i32
    return %arg0, %c0_i32 : i32, i32
  }
  func.func @transform_1(%arg0: i32) -> (i32, i32) {
    %c0_i32 = arith.constant 0 : i32
    %c0_i32_0 = arith.constant 0 : i32
    return %arg0, %c0_i32 : i32, i32
  }
  func.func @transform_2(%arg0: i32) -> (i32, i32) {
    %c0_i32 = arith.constant 0 : i32
    %c0_i32_0 = arith.constant 0 : i32
    %c0_i32_1 = arith.constant 0 : i32
    return %c0_i32, %c0_i32_0 : i32, i32
  }
  func.func @transform_3(%arg0: i32) -> (i32, i32) {
    %c0_i32 = arith.constant 0 : i32
    %c0_i32_0 = arith.constant 0 : i32
    %c0_i32_1 = arith.constant 0 : i32
    return %c0_i32, %c0_i32_0 : i32, i32
  }
  func.func @transform_4(%arg0: i32) -> (i32, i32) {
    %c0_i32 = arith.constant 0 : i32
    %c0_i32_0 = arith.constant 0 : i32
    %c0_i32_1 = arith.constant 0 : i32
    return %c0_i32, %c0_i32_0 : i32, i32
  }
  func.func @transform_5(%arg0: i32) -> (i32, i32) {
    %c0_i32 = arith.constant 0 : i32
    %c0_i32_0 = arith.constant 0 : i32
    %c0_i32_1 = arith.constant 0 : i32
    return %c0_i32, %c0_i32_0 : i32, i32
  }
  func.func @transform_6(%arg0: i32) -> (i32, i32) {
    %c0_i32 = arith.constant 0 : i32
    %c0_i32_0 = arith.constant 0 : i32
    %c0_i32_1 = arith.constant 0 : i32
    return %c0_i32, %c0_i32_0 : i32, i32
  }
  func.func @transform_7(%arg0: i32) -> (i32, i32) {
    %c0_i32 = arith.constant 0 : i32
    %c0_i32_0 = arith.constant 0 : i32
    %c0_i32_1 = arith.constant 0 : i32
    return %c0_i32, %c0_i32_0 : i32, i32
  }
  func.func @transform_8(%arg0: i32) -> (i32, i32) {
    %c0_i32 = arith.constant 0 : i32
    %c0_i32_0 = arith.constant 0 : i32
    return %arg0, %c0_i32 : i32, i32
  }
}

</mosaic_0001>

<llo_original>
// kernel: tpu_custom_call.1
$region0: #{tpu_custom_call.1}
  #allocation0 [shape = 'u32[]', space=smem, size = 0x4, offset = 0x4, fixed_abs, tag = 'smem constant byte address 0x4 - core index']
  #allocation1 [shape = 'u32[144,128]{1,0:T(1,128)}', space=vmem, size = 0x12000, scoped, tag = 'internal scratch']
  #allocation2 [shape = 'f32[1,1]{1,0:T(1,128)S(1)}', space=vmem, size = 0x200, scoped, tag = 'scoped memory for tpu_custom_call.1']
  %s0 = inlined_call_operand.hbm [shape: bf16[8,512], index: 0, kind: input, shape index: {}]
  %s1 = inlined_call_operand.hbm [shape: bf16[8,512], index: 1, kind: input, shape index: {}]
  %s2 = inlined_call_operand.hbm [shape: bf16[1024,1024], index: 2, kind: input, shape index: {}]
  %s3 = inlined_call_operand.hbm [shape: f32[1,1024], index: 3, kind: input, shape index: {}]
  %s4 = inlined_call_operand.hbm [shape: bf16[1024,1024], index: 4, kind: input, shape index: {}]
  %s5 = inlined_call_operand.hbm [shape: f32[1,1024], index: 5, kind: input, shape index: {}]
  %s6 = inlined_call_operand.hbm [shape: f32[1,1024], index: 6, kind: input, shape index: {}]
  %s7 = inlined_call_operand.<no memory space> [shape: f32[1,1], index: 7, kind: input, shape index: {}]
  %s8 = inlined_call_operand.vmem [shape: f32[8,1], index: 8, kind: output, shape index: {}]
  %s9 = sld [smem:[#allocation0]]
  $region70: #{tpu_custom_call.1} parent=0
    _
  %s11 = ssub.s32 1, %s9
  %s12 = scalar_select 0, %s11, %s9
  %v13 = vstv %s7
  %14 = vst [vmem:[#allocation2] sm:$0x1] %v13
  $region1: #{tpu_custom_call.1} parent=0
    #allocation3 [shape = 'u8[8192]{0}', space=vmem, size = 0x2000, scoped, tag = 'input window, operand 0, single buffered']
    #allocation4 [shape = 's32[1]{0}', space=sflag, size = 0x4, scoped, tag = 'scoped memory for tpu_custom_call.1']
    #allocation5 [shape = 'u8[8192]{0}', space=vmem, size = 0x2000, scoped, tag = 'input window, operand 1, single buffered']
    #allocation6 [shape = 's32[1]{0}', space=sflag, size = 0x4, scoped, tag = 'scoped memory for tpu_custom_call.1']
    #allocation7 [shape = 'u8[2097152]{0}', space=vmem, size = 0x200000, scoped, tag = 'input window, operand 2, single buffered']
    #allocation8 [shape = 'u8[4096]{0}', space=vmem, size = 0x1000, scoped, tag = 'input window, operand 3, single buffered']
    #allocation9 [shape = 's32[1]{0}', space=sflag, size = 0x4, scoped, tag = 'scoped memory for tpu_custom_call.1']
    #allocation10 [shape = 'u8[2097152]{0}', space=vmem, size = 0x200000, scoped, tag = 'input window, operand 4, single buffered']
    #allocation11 [shape = 'u8[4096]{0}', space=vmem, size = 0x1000, scoped, tag = 'input window, operand 5, single buffered']
    #allocation12 [shape = 's32[1]{0}', space=sflag, size = 0x4, scoped, tag = 'scoped memory for tpu_custom_call.1']
    #allocation13 [shape = 'u8[4096]{0}', space=vmem, size = 0x1000, scoped, tag = 'input window, operand 6, single buffered']
    %15 = vsyncpa [#allocation4], 0
    %16 = vsyncpa [#allocation6], 0
    %17 = vsyncpa [#allocation9], 0
    %18 = vsyncpa [#allocation12], 0
    // Predicated region
    $region2: #{tpu_custom_call.1} parent=1 // pred_check
      _
    $region3: #{tpu_custom_call.1} parent=1 // pred_check_branch
      %20 = sbr.rel (0) target = $region5
    $region4: #{tpu_custom_call.1} parent=1 // pred_region
      %s22 = ssub.s32 256, 256
      %23 = vsyncadd [#allocation4], %s22
      %s25 = sshll.u32 [#allocation3], 4
      %s26 = int_to_ptr.vmem [resolvable:$true] %s25
      %28 = dma.hbm_to_vmem [thread:$0]  %s0, 256, %s26, [#allocation4]
    $region5: #{tpu_custom_call.1} parent=1 // pred_fallthru
      _
    // Predicated region
    $region6: #{tpu_custom_call.1} parent=1 // pred_check
      _
    $region7: #{tpu_custom_call.1} parent=1 // pred_check_branch
      %30 = sbr.rel (0) target = $region9
    $region8: #{tpu_custom_call.1} parent=1 // pred_region
      %s32 = ssub.s32 256, 256
      %33 = vsyncadd [#allocation6], %s32
      %s35 = sshll.u32 [#allocation5], 4
      %s36 = int_to_ptr.vmem [resolvable:$true] %s35
      %38 = dma.hbm_to_vmem [thread:$0]  %s1, 256, %s36, [#allocation6]
    $region9: #{tpu_custom_call.1} parent=1 // pred_fallthru
      _
    // Predicated region
    $region10: #{tpu_custom_call.1} parent=1 // pred_check
      _
    $region11: #{tpu_custom_call.1} parent=1 // pred_check_branch
      %40 = sbr.rel (0) target = $region13
    $region12: #{tpu_custom_call.1} parent=1 // pred_region
      %s42 = ssub.s32 65536, 65536
      %43 = vsyncadd [#allocation6], %s42
      %s44 = sshll.u32 [#allocation7], 4
      %s45 = int_to_ptr.vmem [resolvable:$true] %s44
      %50 = dma.hbm_to_vmem [thread:$0]  %s2, 65536, %s45, [#allocation6], 512, 512, 32
    $region13: #{tpu_custom_call.1} parent=1 // pred_fallthru
      _
    // Predicated region
    $region14: #{tpu_custom_call.1} parent=1 // pred_check
      _
    $region15: #{tpu_custom_call.1} parent=1 // pred_check_branch
      %52 = sbr.rel (0) target = $region17
    $region16: #{tpu_custom_call.1} parent=1 // pred_region
      %s54 = ssub.s32 128, 128
      %55 = vsyncadd [#allocation9], %s54
      %s57 = sshll.u32 [#allocation8], 4
      %s58 = int_to_ptr.vmem [resolvable:$true] %s57
      %60 = dma.hbm_to_vmem [thread:$0]  %s3, 128, %s58, [#allocation9]
    $region17: #{tpu_custom_call.1} parent=1 // pred_fallthru
      _
    // Predicated region
    $region18: #{tpu_custom_call.1} parent=1 // pred_check
      _
    $region19: #{tpu_custom_call.1} parent=1 // pred_check_branch
      %62 = sbr.rel (0) target = $region21
    $region20: #{tpu_custom_call.1} parent=1 // pred_region
      %s64 = ssub.s32 65536, 65536
      %65 = vsyncadd [#allocation9], %s64
      %s66 = sshll.u32 [#allocation10], 4
      %s67 = int_to_ptr.vmem [resolvable:$true] %s66
      %72 = dma.hbm_to_vmem [thread:$0]  %s4, 65536, %s67, [#allocation9], 512, 512, 32
    $region21: #{tpu_custom_call.1} parent=1 // pred_fallthru
      _
    // Predicated region
    $region22: #{tpu_custom_call.1} parent=1 // pred_check
      _
    $region23: #{tpu_custom_call.1} parent=1 // pred_check_branch
      %74 = sbr.rel (0) target = $region25
    $region24: #{tpu_custom_call.1} parent=1 // pred_region
      %s76 = ssub.s32 128, 128
      %77 = vsyncadd [#allocation12], %s76
      %s79 = sshll.u32 [#allocation11], 4
      %s80 = int_to_ptr.vmem [resolvable:$true] %s79
      %82 = dma.hbm_to_vmem [thread:$0]  %s5, 128, %s80, [#allocation12]
    $region25: #{tpu_custom_call.1} parent=1 // pred_fallthru
      _
    // Predicated region
    $region26: #{tpu_custom_call.1} parent=1 // pred_check
      _
    $region27: #{tpu_custom_call.1} parent=1 // pred_check_branch
      %84 = sbr.rel (0) target = $region29
    $region28: #{tpu_custom_call.1} parent=1 // pred_region
      %s86 = ssub.s32 128, 128
      %87 = vsyncadd [#allocation12], %s86
      %s89 = sshll.u32 [#allocation13], 4
      %s90 = int_to_ptr.vmem [resolvable:$true] %s89
      %92 = dma.hbm_to_vmem [thread:$0]  %s6, 128, %s90, [#allocation12]
    $region29: #{tpu_custom_call.1} parent=1 // pred_fallthru
      _
    // Predicated region
    $region30: #{tpu_custom_call.1} parent=1 // pred_check
      _
    $region31: #{tpu_custom_call.1} parent=1 // pred_check_branch
      %94 = sbr.rel (0) target = $region33
    $region32: #{tpu_custom_call.1} parent=1 // pred_region
      _
    $region33: #{tpu_custom_call.1} parent=1 // pred_fallthru
      _
    // Predicated region
    $region34: #{tpu_custom_call.1} parent=1 // pred_check
      _
    $region35: #{tpu_custom_call.1} parent=1 // pred_check_branch
      %96 = sbr.rel (0) target = $region37
    $region36: #{tpu_custom_call.1} parent=1 // pred_region
      %97 = dma.done [#allocation4], 256
    $region37: #{tpu_custom_call.1} parent=1 // pred_fallthru
      _
    // Predicated region
    $region38: #{tpu_custom_call.1} parent=1 // pred_check
      _
    $region39: #{tpu_custom_call.1} parent=1 // pred_check_branch
      %99 = sbr.rel (0) target = $region41
    $region40: #{tpu_custom_call.1} parent=1 // pred_region
      %100 = dma.done [#allocation6], 256
    $region41: #{tpu_custom_call.1} parent=1 // pred_fallthru
      _
    // Predicated region
    $region42: #{tpu_custom_call.1} parent=1 // pred_check
      _
    $region43: #{tpu_custom_call.1} parent=1 // pred_check_branch
      %102 = sbr.rel (0) target = $region45
    $region44: #{tpu_custom_call.1} parent=1 // pred_region
      %103 = dma.done [#allocation6], 65536
    $region45: #{tpu_custom_call.1} parent=1 // pred_fallthru
      _
    // Predicated region
    $region46: #{tpu_custom_call.1} parent=1 // pred_check
      _
    $region47: #{tpu_custom_call.1} parent=1 // pred_check_branch
      %105 = sbr.rel (0) target = $region49
    $region48: #{tpu_custom_call.1} parent=1 // pred_region
      %106 = dma.done [#allocation9], 128
    $region49: #{tpu_custom_call.1} parent=1 // pred_fallthru
      _
    // Predicated region
    $region50: #{tpu_custom_call.1} parent=1 // pred_check
      _
    $region51: #{tpu_custom_call.1} parent=1 // pred_check_branch
      %108 = sbr.rel (0) target = $region53
    $region52: #{tpu_custom_call.1} parent=1 // pred_region
      %109 = dma.done [#allocation9], 65536
    $region53: #{tpu_custom_call.1} parent=1 // pred_fallthru
      _
    // Predicated region
    $region54: #{tpu_custom_call.1} parent=1 // pred_check
      _
    $region55: #{tpu_custom_call.1} parent=1 // pred_check_branch
      %111 = sbr.rel (0) target = $region57
    $region56: #{tpu_custom_call.1} parent=1 // pred_region
      %112 = dma.done [#allocation12], 128
    $region57: #{tpu_custom_call.1} parent=1 // pred_fallthru
      _
    // Predicated region
    $region58: #{tpu_custom_call.1} parent=1 // pred_check
      _
    $region59: #{tpu_custom_call.1} parent=1 // pred_check_branch
      %114 = sbr.rel (0) target = $region61
    $region60: #{tpu_custom_call.1} parent=1 // pred_region
      %115 = dma.done [#allocation12], 128
    $region61: #{tpu_custom_call.1} parent=1 // pred_fallthru
      _
    %v116 = vld [vmem:[#allocation3] sm:$0xff]
    %v117 = vld [vmem:[#allocation3 + $0x8] sm:$0xff]
    %v118 = vld [vmem:[#allocation7] sm:$0xff]
    %v119 = vld [vmem:[#allocation7 + $0x8] sm:$0xff]
    %v120 = vld [vmem:[#allocation7 + $0x10] sm:$0xff]
    %v121 = vld [vmem:[#allocation7 + $0x18] sm:$0xff]
    %v122 = vld [vmem:[#allocation7 + $0x20] sm:$0xff]
    %v123 = vld [vmem:[#allocation7 + $0x28] sm:$0xff]
    %v124 = vld [vmem:[#allocation7 + $0x30] sm:$0xff]
    %v125 = vld [vmem:[#allocation7 + $0x38] sm:$0xff]
    %v126 = vld [vmem:[#allocation7 + $0x40] sm:$0xff]
    %v127 = vld [vmem:[#allocation7 + $0x48] sm:$0xff]
    %v128 = vld [vmem:[#allocation7 + $0x50] sm:$0xff]
    %v129 = vld [vmem:[#allocation7 + $0x58] sm:$0xff]
    %v130 = vld [vmem:[#allocation7 + $0x60] sm:$0xff]
    %v131 = vld [vmem:[#allocation7 + $0x68] sm:$0xff]
    %v132 = vld [vmem:[#allocation7 + $0x70] sm:$0xff]
    %v133 = vld [vmem:[#allocation7 + $0x78] sm:$0xff]
    %v134 = vld [vmem:[#allocation7 + $0x80] sm:$0xff]
    %v135 = vld [vmem:[#allocation7 + $0x88] sm:$0xff]
    %v136 = vld [vmem:[#allocation7 + $0x90] sm:$0xff]
    %v137 = vld [vmem:[#allocation7 + $0x98] sm:$0xff]
    %v138 = vld [vmem:[#allocation7 + $0xa0] sm:$0xff]
    %v139 = vld [vmem:[#allocation7 + $0xa8] sm:$0xff]
    %v140 = vld [vmem:[#allocation7 + $0xb0] sm:$0xff]
    %v141 = vld [vmem:[#allocation7 + $0xb8] sm:$0xff]
    %v142 = vld [vmem:[#allocation7 + $0xc0] sm:$0xff]
    %v143 = vld [vmem:[#allocation7 + $0xc8] sm:$0xff]
    %v144 = vld [vmem:[#allocation7 + $0xd0] sm:$0xff]
    %v145 = vld [vmem:[#allocation7 + $0xd8] sm:$0xff]
    %v146 = vld [vmem:[#allocation7 + $0xe0] sm:$0xff]
    %v147 = vld [vmem:[#allocation7 + $0xe8] sm:$0xff]
    %v148 = vld [vmem:[#allocation7 + $0xf0] sm:$0xff]
    %v149 = vld [vmem:[#allocation7 + $0xf8] sm:$0xff]
    %v150 = vld [vmem:[#allocation7 + $0x100] sm:$0xff]
    %v151 = vld [vmem:[#allocation7 + $0x108] sm:$0xff]
    %v152 = vld [vmem:[#allocation7 + $0x110] sm:$0xff]
    %v153 = vld [vmem:[#allocation7 + $0x118] sm:$0xff]
    %v154 = vld [vmem:[#allocation7 + $0x120] sm:$0xff]
    %v155 = vld [vmem:[#allocation7 + $0x128] sm:$0xff]
    %v156 = vld [vmem:[#allocation7 + $0x130] sm:$0xff]
    %v157 = vld [vmem:[#allocation7 + $0x138] sm:$0xff]
    %v158 = vld [vmem:[#allocation7 + $0x140] sm:$0xff]
    %v159 = vld [vmem:[#allocation7 + $0x148] sm:$0xff]
    %v160 = vld [vmem:[#allocation7 + $0x150] sm:$0xff]
    %v161 = vld [vmem:[#allocation7 + $0x158] sm:$0xff]
    %v162 = vld [vmem:[#allocation7 + $0x160] sm:$0xff]
    %v163 = vld [vmem:[#allocation7 + $0x168] sm:$0xff]
    %v164 = vld [vmem:[#allocation7 + $0x170] sm:$0xff]
    %v165 = vld [vmem:[#allocation7 + $0x178] sm:$0xff]
    %v166 = vld [vmem:[#allocation7 + $0x180] sm:$0xff]
    %v167 = vld [vmem:[#allocation7 + $0x188] sm:$0xff]
    %v168 = vld [vmem:[#allocation7 + $0x190] sm:$0xff]
    %v169 = vld [vmem:[#allocation7 + $0x198] sm:$0xff]
    %v170 = vld [vmem:[#allocation7 + $0x1a0] sm:$0xff]
    %v171 = vld [vmem:[#allocation7 + $0x1a8] sm:$0xff]
    %v172 = vld [vmem:[#allocation7 + $0x1b0] sm:$0xff]
    %v173 = vld [vmem:[#allocation7 + $0x1b8] sm:$0xff]
    %v174 = vld [vmem:[#allocation7 + $0x1c0] sm:$0xff]
    %v175 = vld [vmem:[#allocation7 + $0x1c8] sm:$0xff]
    %v176 = vld [vmem:[#allocation7 + $0x1d0] sm:$0xff]
    %v177 = vld [vmem:[#allocation7 + $0x1d8] sm:$0xff]
    %v178 = vld [vmem:[#allocation7 + $0x1e0] sm:$0xff]
    %v179 = vld [vmem:[#allocation7 + $0x1e8] sm:$0xff]
    %v180 = vld [vmem:[#allocation7 + $0x1f0] sm:$0xff]
    %v181 = vld [vmem:[#allocation7 + $0x1f8] sm:$0xff]
    %v182 = vld [vmem:[#allocation7 + $0x200] sm:$0xff]
    %v183 = vld [vmem:[#allocation7 + $0x208] sm:$0xff]
    %v184 = vld [vmem:[#allocation7 + $0x210] sm:$0xff]
    %v185 = vld [vmem:[#allocation7 + $0x218] sm:$0xff]
    %v186 = vld [vmem:[#allocation7 + $0x220] sm:$0xff]
    %v187 = vld [vmem:[#allocation7 + $0x228] sm:$0xff]
    %v188 = vld [vmem:[#allocation7 + $0x230] sm:$0xff]
    %v189 = vld [vmem:[#allocation7 + $0x238] sm:$0xff]
    %v190 = vld [vmem:[#allocation7 + $0x240] sm:$0xff]
    %v191 = vld [vmem:[#allocation7 + $0x248] sm:$0xff]
    %v192 = vld [vmem:[#allocation7 + $0x250] sm:$0xff]
    %v193 = vld [vmem:[#allocation7 + $0x258] sm:$0xff]
    %v194 = vld [vmem:[#allocation7 + $0x260] sm:$0xff]
    %v195 = vld [vmem:[#allocation7 + $0x268] sm:$0xff]
    %v196 = vld [vmem:[#allocation7 + $0x270] sm:$0xff]
    %v197 = vld [vmem:[#allocation7 + $0x278] sm:$0xff]
    %v198 = vld [vmem:[#allocation7 + $0x280] sm:$0xff]
    %v199 = vld [vmem:[#allocation7 + $0x288] sm:$0xff]
    %v200 = vld [vmem:[#allocation7 + $0x290] sm:$0xff]
    %v201 = vld [vmem:[#allocation7 + $0x298] sm:$0xff]
    %v202 = vld [vmem:[#allocation7 + $0x2a0] sm:$0xff]
    %v203 = vld [vmem:[#allocation7 + $0x2a8] sm:$0xff]
    %v204 = vld [vmem:[#allocation7 + $0x2b0] sm:$0xff]
    %v205 = vld [vmem:[#allocation7 + $0x2b8] sm:$0xff]
    %v206 = vld [vmem:[#allocation7 + $0x2c0] sm:$0xff]
    %v207 = vld [vmem:[#allocation7 + $0x2c8] sm:$0xff]
    %v208 = vld [vmem:[#allocation7 + $0x2d0] sm:$0xff]
    %v209 = vld [vmem:[#allocation7 + $0x2d8] sm:$0xff]
    %v210 = vld [vmem:[#allocation7 + $0x2e0] sm:$0xff]
    %v211 = vld [vmem:[#allocation7 + $0x2e8] sm:$0xff]
    %v212 = vld [vmem:[#allocation7 + $0x2f0] sm:$0xff]
    %v213 = vld [vmem:[#allocation7 + $0x2f8] sm:$0xff]
    %v214 = vld [vmem:[#allocation7 + $0x300] sm:$0xff]
    %v215 = vld [vmem:[#allocation7 + $0x308] sm:$0xff]
    %v216 = vld [vmem:[#allocation7 + $0x310] sm:$0xff]
    %v217 = vld [vmem:[#allocation7 + $0x318] sm:$0xff]
    %v218 = vld [vmem:[#allocation7 + $0x320] sm:$0xff]
    %v219 = vld [vmem:[#allocation7 + $0x328] sm:$0xff]
    %v220 = vld [vmem:[#allocation7 + $0x330] sm:$0xff]
    %v221 = vld [vmem:[#allocation7 + $0x338] sm:$0xff]
    %v222 = vld [vmem:[#allocation7 + $0x340] sm:$0xff]
    %v223 = vld [vmem:[#allocation7 + $0x348] sm:$0xff]
    %v224 = vld [vmem:[#allocation7 + $0x350] sm:$0xff]
    %v225 = vld [vmem:[#allocation7 + $0x358] sm:$0xff]
    %v226 = vld [vmem:[#allocation7 + $0x360] sm:$0xff]
    %v227 = vld [vmem:[#allocation7 + $0x368] sm:$0xff]
    %v228 = vld [vmem:[#allocation7 + $0x370] sm:$0xff]
    %v229 = vld [vmem:[#allocation7 + $0x378] sm:$0xff]
    %v230 = vld [vmem:[#allocation7 + $0x380] sm:$0xff]
    %v231 = vld [vmem:[#allocation7 + $0x388] sm:$0xff]
    %v232 = vld [vmem:[#allocation7 + $0x390] sm:$0xff]
    %v233 = vld [vmem:[#allocation7 + $0x398] sm:$0xff]
    %v234 = vld [vmem:[#allocation7 + $0x3a0] sm:$0xff]
    %v235 = vld [vmem:[#allocation7 + $0x3a8] sm:$0xff]
    %v236 = vld [vmem:[#allocation7 + $0x3b0] sm:$0xff]
    %v237 = vld [vmem:[#allocation7 + $0x3b8] sm:$0xff]
    %v238 = vld [vmem:[#allocation7 + $0x3c0] sm:$0xff]
    %v239 = vld [vmem:[#allocation7 + $0x3c8] sm:$0xff]
    %v240 = vld [vmem:[#allocation7 + $0x3d0] sm:$0xff]
    %v241 = vld [vmem:[#allocation7 + $0x3d8] sm:$0xff]
    %v242 = vld [vmem:[#allocation7 + $0x3e0] sm:$0xff]
    %v243 = vld [vmem:[#allocation7 + $0x3e8] sm:$0xff]
    %v244 = vld [vmem:[#allocation7 + $0x3f0] sm:$0xff]
    %v245 = vld [vmem:[#allocation7 + $0x3f8] sm:$0xff]
    %v246 = vld [vmem:[#allocation7 + $0x400] sm:$0xff]
    %v247 = vld [vmem:[#allocation7 + $0x408] sm:$0xff]
    %v248 = vld [vmem:[#allocation7 + $0x410] sm:$0xff]
    %v249 = vld [vmem:[#allocation7 + $0x418] sm:$0xff]
    %v250 = vld [vmem:[#allocation7 + $0x420] sm:$0xff]
    %v251 = vld [vmem:[#allocation7 + $0x428] sm:$0xff]
    %v252 = vld [vmem:[#allocation7 + $0x430] sm:$0xff]
    %v253 = vld [vmem:[#allocation7 + $0x438] sm:$0xff]
    %v254 = vld [vmem:[#allocation7 + $0x440] sm:$0xff]
    %v255 = vld [vmem:[#allocation7 + $0x448] sm:$0xff]
    %v256 = vld [vmem:[#allocation7 + $0x450] sm:$0xff]
    %v257 = vld [vmem:[#allocation7 + $0x458] sm:$0xff]
    %v258 = vld [vmem:[#allocation7 + $0x460] sm:$0xff]
    %v259 = vld [vmem:[#allocation7 + $0x468] sm:$0xff]
    %v260 = vld [vmem:[#allocation7 + $0x470] sm:$0xff]
    %v261 = vld [vmem:[#allocation7 + $0x478] sm:$0xff]
    %v262 = vld [vmem:[#allocation7 + $0x480] sm:$0xff]
    %v263 = vld [vmem:[#allocation7 + $0x488] sm:$0xff]
    %v264 = vld [vmem:[#allocation7 + $0x490] sm:$0xff]
    %v265 = vld [vmem:[#allocation7 + $0x498] sm:$0xff]
    %v266 = vld [vmem:[#allocation7 + $0x4a0] sm:$0xff]
    %v267 = vld [vmem:[#allocation7 + $0x4a8] sm:$0xff]
    %v268 = vld [vmem:[#allocation7 + $0x4b0] sm:$0xff]
    %v269 = vld [vmem:[#allocation7 + $0x4b8] sm:$0xff]
    %v270 = vld [vmem:[#allocation7 + $0x4c0] sm:$0xff]
    %v271 = vld [vmem:[#allocation7 + $0x4c8] sm:$0xff]
    %v272 = vld [vmem:[#allocation7 + $0x4d0] sm:$0xff]
    %v273 = vld [vmem:[#allocation7 + $0x4d8] sm:$0xff]
    %v274 = vld [vmem:[#allocation7 + $0x4e0] sm:$0xff]
    %v275 = vld [vmem:[#allocation7 + $0x4e8] sm:$0xff]
    %v276 = vld [vmem:[#allocation7 + $0x4f0] sm:$0xff]
    %v277 = vld [vmem:[#allocation7 + $0x4f8] sm:$0xff]
    %v278 = vld [vmem:[#allocation7 + $0x500] sm:$0xff]
    %v279 = vld [vmem:[#allocation7 + $0x508] sm:$0xff]
    %v280 = vld [vmem:[#allocation7 + $0x510] sm:$0xff]
    %v281 = vld [vmem:[#allocation7 + $0x518] sm:$0xff]
    %v282 = vld [vmem:[#allocation7 + $0x520] sm:$0xff]
    %v283 = vld [vmem:[#allocation7 + $0x528] sm:$0xff]
    %v284 = vld [vmem:[#allocation7 + $0x530] sm:$0xff]
    %v285 = vld [vmem:[#allocation7 + $0x538] sm:$0xff]
    %v286 = vld [vmem:[#allocation7 + $0x540] sm:$0xff]
    %v287 = vld [vmem:[#allocation7 + $0x548] sm:$0xff]
    %v288 = vld [vmem:[#allocation7 + $0x550] sm:$0xff]
    %v289 = vld [vmem:[#allocation7 + $0x558] sm:$0xff]
    %v290 = vld [vmem:[#allocation7 + $0x560] sm:$0xff]
    %v291 = vld [vmem:[#allocation7 + $0x568] sm:$0xff]
    %v292 = vld [vmem:[#allocation7 + $0x570] sm:$0xff]
    %v293 = vld [vmem:[#allocation7 + $0x578] sm:$0xff]
    %v294 = vld [vmem:[#allocation7 + $0x580] sm:$0xff]
    %v295 = vld [vmem:[#allocation7 + $0x588] sm:$0xff]
    %v296 = vld [vmem:[#allocation7 + $0x590] sm:$0xff]
    %v297 = vld [vmem:[#allocation7 + $0x598] sm:$0xff]
    %v298 = vld [vmem:[#allocation7 + $0x5a0] sm:$0xff]
    %v299 = vld [vmem:[#allocation7 + $0x5a8] sm:$0xff]
    %v300 = vld [vmem:[#allocation7 + $0x5b0] sm:$0xff]
    %v301 = vld [vmem:[#allocation7 + $0x5b8] sm:$0xff]
    %v302 = vld [vmem:[#allocation7 + $0x5c0] sm:$0xff]
    %v303 = vld [vmem:[#allocation7 + $0x5c8] sm:$0xff]
    %v304 = vld [vmem:[#allocation7 + $0x5d0] sm:$0xff]
    %v305 = vld [vmem:[#allocation7 + $0x5d8] sm:$0xff]
    %v306 = vld [vmem:[#allocation7 + $0x5e0] sm:$0xff]
    %v307 = vld [vmem:[#allocation7 + $0x5e8] sm:$0xff]
    %v308 = vld [vmem:[#allocation7 + $0x5f0] sm:$0xff]
    %v309 = vld [vmem:[#allocation7 + $0x5f8] sm:$0xff]
    %v310 = vld [vmem:[#allocation7 + $0x600] sm:$0xff]
    %v311 = vld [vmem:[#allocation7 + $0x608] sm:$0xff]
    %v312 = vld [vmem:[#allocation7 + $0x610] sm:$0xff]
    %v313 = vld [vmem:[#allocation7 + $0x618] sm:$0xff]
    %v314 = vld [vmem:[#allocation7 + $0x620] sm:$0xff]
    %v315 = vld [vmem:[#allocation7 + $0x628] sm:$0xff]
    %v316 = vld [vmem:[#allocation7 + $0x630] sm:$0xff]
    %v317 = vld [vmem:[#allocation7 + $0x638] sm:$0xff]
    %v318 = vld [vmem:[#allocation7 + $0x640] sm:$0xff]
    %v319 = vld [vmem:[#allocation7 + $0x648] sm:$0xff]
    %v320 = vld [vmem:[#allocation7 + $0x650] sm:$0xff]
    %v321 = vld [vmem:[#allocation7 + $0x658] sm:$0xff]
    %v322 = vld [vmem:[#allocation7 + $0x660] sm:$0xff]
    %v323 = vld [vmem:[#allocation7 + $0x668] sm:$0xff]
    %v324 = vld [vmem:[#allocation7 + $0x670] sm:$0xff]
    %v325 = vld [vmem:[#allocation7 + $0x678] sm:$0xff]
    %v326 = vld [vmem:[#allocation7 + $0x680] sm:$0xff]
    %v327 = vld [vmem:[#allocation7 + $0x688] sm:$0xff]
    %v328 = vld [vmem:[#allocation7 + $0x690] sm:$0xff]
    %v329 = vld [vmem:[#allocation7 + $0x698] sm:$0xff]
    %v330 = vld [vmem:[#allocation7 + $0x6a0] sm:$0xff]
    %v331 = vld [vmem:[#allocation7 + $0x6a8] sm:$0xff]
    %v332 = vld [vmem:[#allocation7 + $0x6b0] sm:$0xff]
    %v333 = vld [vmem:[#allocation7 + $0x6b8] sm:$0xff]
    %v334 = vld [vmem:[#allocation7 + $0x6c0] sm:$0xff]
    %v335 = vld [vmem:[#allocation7 + $0x6c8] sm:$0xff]
    %v336 = vld [vmem:[#allocation7 + $0x6d0] sm:$0xff]
    %v337 = vld [vmem:[#allocation7 + $0x6d8] sm:$0xff]
    %v338 = vld [vmem:[#allocation7 + $0x6e0] sm:$0xff]
    %v339 = vld [vmem:[#allocation7 + $0x6e8] sm:$0xff]
    %v340 = vld [vmem:[#allocation7 + $0x6f0] sm:$0xff]
    %v341 = vld [vmem:[#allocation7 + $0x6f8] sm:$0xff]
    %v342 = vld [vmem:[#allocation7 + $0x700] sm:$0xff]
    %v343 = vld [vmem:[#allocation7 + $0x708] sm:$0xff]
    %v344 = vld [vmem:[#allocation7 + $0x710] sm:$0xff]
    %v345 = vld [vmem:[#allocation7 + $0x718] sm:$0xff]
    %v346 = vld [vmem:[#allocation7 + $0x720] sm:$0xff]
    %v347 = vld [vmem:[#allocation7 + $0x728] sm:$0xff]
    %v348 = vld [vmem:[#allocation7 + $0x730] sm:$0xff]
    %v349 = vld [vmem:[#allocation7 + $0x738] sm:$0xff]
    %v350 = vld [vmem:[#allocation7 + $0x740] sm:$0xff]
    %v351 = vld [vmem:[#allocation7 + $0x748] sm:$0xff]
    %v352 = vld [vmem:[#allocation7 + $0x750] sm:$0xff]
    %v353 = vld [vmem:[#allocation7 + $0x758] sm:$0xff]
    %v354 = vld [vmem:[#allocation7 + $0x760] sm:$0xff]
    %v355 = vld [vmem:[#allocation7 + $0x768] sm:$0xff]
    %v356 = vld [vmem:[#allocation7 + $0x770] sm:$0xff]
    %v357 = vld [vmem:[#allocation7 + $0x778] sm:$0xff]
    %v358 = vld [vmem:[#allocation7 + $0x780] sm:$0xff]
    %v359 = vld [vmem:[#allocation7 + $0x788] sm:$0xff]
    %v360 = vld [vmem:[#allocation7 + $0x790] sm:$0xff]
    %v361 = vld [vmem:[#allocation7 + $0x798] sm:$0xff]
    %v362 = vld [vmem:[#allocation7 + $0x7a0] sm:$0xff]
    %v363 = vld [vmem:[#allocation7 + $0x7a8] sm:$0xff]
    %v364 = vld [vmem:[#allocation7 + $0x7b0] sm:$0xff]
    %v365 = vld [vmem:[#allocation7 + $0x7b8] sm:$0xff]
    %v366 = vld [vmem:[#allocation7 + $0x7c0] sm:$0xff]
    %v367 = vld [vmem:[#allocation7 + $0x7c8] sm:$0xff]
    %v368 = vld [vmem:[#allocation7 + $0x7d0] sm:$0xff]
    %v369 = vld [vmem:[#allocation7 + $0x7d8] sm:$0xff]
    %v370 = vld [vmem:[#allocation7 + $0x7e0] sm:$0xff]
    %v371 = vld [vmem:[#allocation7 + $0x7e8] sm:$0xff]
    %v372 = vld [vmem:[#allocation7 + $0x7f0] sm:$0xff]
    %v373 = vld [vmem:[#allocation7 + $0x7f8] sm:$0xff]
    %v374 = vld [vmem:[#allocation5] sm:$0xff]
    %v375 = vld [vmem:[#allocation5 + $0x8] sm:$0xff]
    %v376 = vld [vmem:[#allocation7 + $0x800] sm:$0xff]
    %v377 = vld [vmem:[#allocation7 + $0x808] sm:$0xff]
    %v378 = vld [vmem:[#allocation7 + $0x810] sm:$0xff]
    %v379 = vld [vmem:[#allocation7 + $0x818] sm:$0xff]
    %v380 = vld [vmem:[#allocation7 + $0x820] sm:$0xff]
    %v381 = vld [vmem:[#allocation7 + $0x828] sm:$0xff]
    %v382 = vld [vmem:[#allocation7 + $0x830] sm:$0xff]
    %v383 = vld [vmem:[#allocation7 + $0x838] sm:$0xff]
    %v384 = vld [vmem:[#allocation7 + $0x840] sm:$0xff]
    %v385 = vld [vmem:[#allocation7 + $0x848] sm:$0xff]
    %v386 = vld [vmem:[#allocation7 + $0x850] sm:$0xff]
    %v387 = vld [vmem:[#allocation7 + $0x858] sm:$0xff]
    %v388 = vld [vmem:[#allocation7 + $0x860] sm:$0xff]
    %v389 = vld [vmem:[#allocation7 + $0x868] sm:$0xff]
    %v390 = vld [vmem:[#allocation7 + $0x870] sm:$0xff]
    %v391 = vld [vmem:[#allocation7 + $0x878] sm:$0xff]
    %v392 = vld [vmem:[#allocation7 + $0x880] sm:$0xff]
    %v393 = vld [vmem:[#allocation7 + $0x888] sm:$0xff]
    %v394 = vld [vmem:[#allocation7 + $0x890] sm:$0xff]
    %v395 = vld [vmem:[#allocation7 + $0x898] sm:$0xff]
    %v396 = vld [vmem:[#allocation7 + $0x8a0] sm:$0xff]
    %v397 = vld [vmem:[#allocation7 + $0x8a8] sm:$0xff]
    %v398 = vld [vmem:[#allocation7 + $0x8b0] sm:$0xff]
    %v399 = vld [vmem:[#allocation7 + $0x8b8] sm:$0xff]
    %v400 = vld [vmem:[#allocation7 + $0x8c0] sm:$0xff]
    %v401 = vld [vmem:[#allocation7 + $0x8c8] sm:$0xff]
    %v402 = vld [vmem:[#allocation7 + $0x8d0] sm:$0xff]
    %v403 = vld [vmem:[#allocation7 + $0x8d8] sm:$0xff]
    %v404 = vld [vmem:[#allocation7 + $0x8e0] sm:$0xff]
    %v405 = vld [vmem:[#allocation7 + $0x8e8] sm:$0xff]
    %v406 = vld [vmem:[#allocation7 + $0x8f0] sm:$0xff]
    %v407 = vld [vmem:[#allocation7 + $0x8f8] sm:$0xff]
    %v408 = vld [vmem:[#allocation7 + $0x900] sm:$0xff]
    %v409 = vld [vmem:[#allocation7 + $0x908] sm:$0xff]
    %v410 = vld [vmem:[#allocation7 + $0x910] sm:$0xff]
    %v411 = vld [vmem:[#allocation7 + $0x918] sm:$0xff]
    %v412 = vld [vmem:[#allocation7 + $0x920] sm:$0xff]
    %v413 = vld [vmem:[#allocation7 + $0x928] sm:$0xff]
    %v414 = vld [vmem:[#allocation7 + $0x930] sm:$0xff]
    %v415 = vld [vmem:[#allocation7 + $0x938] sm:$0xff]
    %v416 = vld [vmem:[#allocation7 + $0x940] sm:$0xff]
    %v417 = vld [vmem:[#allocation7 + $0x948] sm:$0xff]
    %v418 = vld [vmem:[#allocation7 + $0x950] sm:$0xff]
    %v419 = vld [vmem:[#allocation7 + $0x958] sm:$0xff]
    %v420 = vld [vmem:[#allocation7 + $0x960] sm:$0xff]
    %v421 = vld [vmem:[#allocation7 + $0x968] sm:$0xff]
    %v422 = vld [vmem:[#allocation7 + $0x970] sm:$0xff]
    %v423 = vld [vmem:[#allocation7 + $0x978] sm:$0xff]
    %v424 = vld [vmem:[#allocation7 + $0x980] sm:$0xff]
    %v425 = vld [vmem:[#allocation7 + $0x988] sm:$0xff]
    %v426 = vld [vmem:[#allocation7 + $0x990] sm:$0xff]
    %v427 = vld [vmem:[#allocation7 + $0x998] sm:$0xff]
    %v428 = vld [vmem:[#allocation7 + $0x9a0] sm:$0xff]
    %v429 = vld [vmem:[#allocation7 + $0x9a8] sm:$0xff]
    %v430 = vld [vmem:[#allocation7 + $0x9b0] sm:$0xff]
    %v431 = vld [vmem:[#allocation7 + $0x9b8] sm:$0xff]
    %v432 = vld [vmem:[#allocation7 + $0x9c0] sm:$0xff]
    %v433 = vld [vmem:[#allocation7 + $0x9c8] sm:$0xff]
    %v434 = vld [vmem:[#allocation7 + $0x9d0] sm:$0xff]
    %v435 = vld [vmem:[#allocation7 + $0x9d8] sm:$0xff]
    %v436 = vld [vmem:[#allocation7 + $0x9e0] sm:$0xff]
    %v437 = vld [vmem:[#allocation7 + $0x9e8] sm:$0xff]
    %v438 = vld [vmem:[#allocation7 + $0x9f0] sm:$0xff]
    %v439 = vld [vmem:[#allocation7 + $0x9f8] sm:$0xff]
    %v440 = vld [vmem:[#allocation7 + $0xa00] sm:$0xff]
    %v441 = vld [vmem:[#allocation7 + $0xa08] sm:$0xff]
    %v442 = vld [vmem:[#allocation7 + $0xa10] sm:$0xff]
    %v443 = vld [vmem:[#allocation7 + $0xa18] sm:$0xff]
    %v444 = vld [vmem:[#allocation7 + $0xa20] sm:$0xff]
    %v445 = vld [vmem:[#allocation7 + $0xa28] sm:$0xff]
    %v446 = vld [vmem:[#allocation7 + $0xa30] sm:$0xff]
    %v447 = vld [vmem:[#allocation7 + $0xa38] sm:$0xff]
    %v448 = vld [vmem:[#allocation7 + $0xa40] sm:$0xff]
    %v449 = vld [vmem:[#allocation7 + $0xa48] sm:$0xff]
    %v450 = vld [vmem:[#allocation7 + $0xa50] sm:$0xff]
    %v451 = vld [vmem:[#allocation7 + $0xa58] sm:$0xff]
    %v452 = vld [vmem:[#allocation7 + $0xa60] sm:$0xff]
    %v453 = vld [vmem:[#allocation7 + $0xa68] sm:$0xff]
    %v454 = vld [vmem:[#allocation7 + $0xa70] sm:$0xff]
    %v455 = vld [vmem:[#allocation7 + $0xa78] sm:$0xff]
    %v456 = vld [vmem:[#allocation7 + $0xa80] sm:$0xff]
    %v457 = vld [vmem:[#allocation7 + $0xa88] sm:$0xff]
    %v458 = vld [vmem:[#allocation7 + $0xa90] sm:$0xff]
    %v459 = vld [vmem:[#allocation7 + $0xa98] sm:$0xff]
    %v460 = vld [vmem:[#allocation7 + $0xaa0] sm:$0xff]
    %v461 = vld [vmem:[#allocation7 + $0xaa8] sm:$0xff]
    %v462 = vld [vmem:[#allocation7 + $0xab0] sm:$0xff]
    %v463 = vld [vmem:[#allocation7 + $0xab8] sm:$0xff]
    %v464 = vld [vmem:[#allocation7 + $0xac0] sm:$0xff]
    %v465 = vld [vmem:[#allocation7 + $0xac8] sm:$0xff]
    %v466 = vld [vmem:[#allocation7 + $0xad0] sm:$0xff]
    %v467 = vld [vmem:[#allocation7 + $0xad8] sm:$0xff]
    %v468 = vld [vmem:[#allocation7 + $0xae0] sm:$0xff]
    %v469 = vld [vmem:[#allocation7 + $0xae8] sm:$0xff]
    %v470 = vld [vmem:[#allocation7 + $0xaf0] sm:$0xff]
    %v471 = vld [vmem:[#allocation7 + $0xaf8] sm:$0xff]
    %v472 = vld [vmem:[#allocation7 + $0xb00] sm:$0xff]
    %v473 = vld [vmem:[#allocation7 + $0xb08] sm:$0xff]
    %v474 = vld [vmem:[#allocation7 + $0xb10] sm:$0xff]
    %v475 = vld [vmem:[#allocation7 + $0xb18] sm:$0xff]
    %v476 = vld [vmem:[#allocation7 + $0xb20] sm:$0xff]
    %v477 = vld [vmem:[#allocation7 + $0xb28] sm:$0xff]
    %v478 = vld [vmem:[#allocation7 + $0xb30] sm:$0xff]
    %v479 = vld [vmem:[#allocation7 + $0xb38] sm:$0xff]
    %v480 = vld [vmem:[#allocation7 + $0xb40] sm:$0xff]
    %v481 = vld [vmem:[#allocation7 + $0xb48] sm:$0xff]
    %v482 = vld [vmem:[#allocation7 + $0xb50] sm:$0xff]
    %v483 = vld [vmem:[#allocation7 + $0xb58] sm:$0xff]
    %v484 = vld [vmem:[#allocation7 + $0xb60] sm:$0xff]
    %v485 = vld [vmem:[#allocation7 + $0xb68] sm:$0xff]
    %v486 = vld [vmem:[#allocation7 + $0xb70] sm:$0xff]
    %v487 = vld [vmem:[#allocation7 + $0xb78] sm:$0xff]
    %v488 = vld [vmem:[#allocation7 + $0xb80] sm:$0xff]
    %v489 = vld [vmem:[#allocation7 + $0xb88] sm:$0xff]
    %v490 = vld [vmem:[#allocation7 + $0xb90] sm:$0xff]
    %v491 = vld [vmem:[#allocation7 + $0xb98] sm:$0xff]
    %v492 = vld [vmem:[#allocation7 + $0xba0] sm:$0xff]
    %v493 = vld [vmem:[#allocation7 + $0xba8] sm:$0xff]
    %v494 = vld [vmem:[#allocation7 + $0xbb0] sm:$0xff]
    %v495 = vld [vmem:[#allocation7 + $0xbb8] sm:$0xff]
    %v496 = vld [vmem:[#allocation7 + $0xbc0] sm:$0xff]
    %v497 = vld [vmem:[#allocation7 + $0xbc8] sm:$0xff]
    %v498 = vld [vmem:[#allocation7 + $0xbd0] sm:$0xff]
    %v499 = vld [vmem:[#allocation7 + $0xbd8] sm:$0xff]
    %v500 = vld [vmem:[#allocation7 + $0xbe0] sm:$0xff]
    %v501 = vld [vmem:[#allocation7 + $0xbe8] sm:$0xff]
    %v502 = vld [vmem:[#allocation7 + $0xbf0] sm:$0xff]
    %v503 = vld [vmem:[#allocation7 + $0xbf8] sm:$0xff]
    %v504 = vld [vmem:[#allocation7 + $0xc00] sm:$0xff]
    %v505 = vld [vmem:[#allocation7 + $0xc08] sm:$0xff]
    %v506 = vld [vmem:[#allocation7 + $0xc10] sm:$0xff]
    %v507 = vld [vmem:[#allocation7 + $0xc18] sm:$0xff]
    %v508 = vld [vmem:[#allocation7 + $0xc20] sm:$0xff]
    %v509 = vld [vmem:[#allocation7 + $0xc28] sm:$0xff]
    %v510 = vld [vmem:[#allocation7 + $0xc30] sm:$0xff]
    %v511 = vld [vmem:[#allocation7 + $0xc38] sm:$0xff]
    %v512 = vld [vmem:[#allocation7 + $0xc40] sm:$0xff]
    %v513 = vld [vmem:[#allocation7 + $0xc48] sm:$0xff]
    %v514 = vld [vmem:[#allocation7 + $0xc50] sm:$0xff]
    %v515 = vld [vmem:[#allocation7 + $0xc58] sm:$0xff]
    %v516 = vld [vmem:[#allocation7 + $0xc60] sm:$0xff]
    %v517 = vld [vmem:[#allocation7 + $0xc68] sm:$0xff]
    %v518 = vld [vmem:[#allocation7 + $0xc70] sm:$0xff]
    %v519 = vld [vmem:[#allocation7 + $0xc78] sm:$0xff]
    %v520 = vld [vmem:[#allocation7 + $0xc80] sm:$0xff]
    %v521 = vld [vmem:[#allocation7 + $0xc88] sm:$0xff]
    %v522 = vld [vmem:[#allocation7 + $0xc90] sm:$0xff]
    %v523 = vld [vmem:[#allocation7 + $0xc98] sm:$0xff]
    %v524 = vld [vmem:[#allocation7 + $0xca0] sm:$0xff]
    %v525 = vld [vmem:[#allocation7 + $0xca8] sm:$0xff]
    %v526 = vld [vmem:[#allocation7 + $0xcb0] sm:$0xff]
    %v527 = vld [vmem:[#allocation7 + $0xcb8] sm:$0xff]
    %v528 = vld [vmem:[#allocation7 + $0xcc0] sm:$0xff]
    %v529 = vld [vmem:[#allocation7 + $0xcc8] sm:$0xff]
    %v530 = vld [vmem:[#allocation7 + $0xcd0] sm:$0xff]
    %v531 = vld [vmem:[#allocation7 + $0xcd8] sm:$0xff]
    %v532 = vld [vmem:[#allocation7 + $0xce0] sm:$0xff]
    %v533 = vld [vmem:[#allocation7 + $0xce8] sm:$0xff]
    %v534 = vld [vmem:[#allocation7 + $0xcf0] sm:$0xff]
    %v535 = vld [vmem:[#allocation7 + $0xcf8] sm:$0xff]
    %v536 = vld [vmem:[#allocation7 + $0xd00] sm:$0xff]
    %v537 = vld [vmem:[#allocation7 + $0xd08] sm:$0xff]
    %v538 = vld [vmem:[#allocation7 + $0xd10] sm:$0xff]
    %v539 = vld [vmem:[#allocation7 + $0xd18] sm:$0xff]
    %v540 = vld [vmem:[#allocation7 + $0xd20] sm:$0xff]
    %v541 = vld [vmem:[#allocation7 + $0xd28] sm:$0xff]
    %v542 = vld [vmem:[#allocation7 + $0xd30] sm:$0xff]
    %v543 = vld [vmem:[#allocation7 + $0xd38] sm:$0xff]
    %v544 = vld [vmem:[#allocation7 + $0xd40] sm:$0xff]
    %v545 = vld [vmem:[#allocation7 + $0xd48] sm:$0xff]
    %v546 = vld [vmem:[#allocation7 + $0xd50] sm:$0xff]
    %v547 = vld [vmem:[#allocation7 + $0xd58] sm:$0xff]
    %v548 = vld [vmem:[#allocation7 + $0xd60] sm:$0xff]
    %v549 = vld [vmem:[#allocation7 + $0xd68] sm:$0xff]
    %v550 = vld [vmem:[#allocation7 + $0xd70] sm:$0xff]
    %v551 = vld [vmem:[#allocation7 + $0xd78] sm:$0xff]
    %v552 = vld [vmem:[#allocation7 + $0xd80] sm:$0xff]
    %v553 = vld [vmem:[#allocation7 + $0xd88] sm:$0xff]
    %v554 = vld [vmem:[#allocation7 + $0xd90] sm:$0xff]
    %v555 = vld [vmem:[#allocation7 + $0xd98] sm:$0xff]
    %v556 = vld [vmem:[#allocation7 + $0xda0] sm:$0xff]
    %v557 = vld [vmem:[#allocation7 + $0xda8] sm:$0xff]
    %v558 = vld [vmem:[#allocation7 + $0xdb0] sm:$0xff]
    %v559 = vld [vmem:[#allocation7 + $0xdb8] sm:$0xff]
    %v560 = vld [vmem:[#allocation7 + $0xdc0] sm:$0xff]
    %v561 = vld [vmem:[#allocation7 + $0xdc8] sm:$0xff]
    %v562 = vld [vmem:[#allocation7 + $0xdd0] sm:$0xff]
    %v563 = vld [vmem:[#allocation7 + $0xdd8] sm:$0xff]
    %v564 = vld [vmem:[#allocation7 + $0xde0] sm:$0xff]
    %v565 = vld [vmem:[#allocation7 + $0xde8] sm:$0xff]
    %v566 = vld [vmem:[#allocation7 + $0xdf0] sm:$0xff]
    %v567 = vld [vmem:[#allocation7 + $0xdf8] sm:$0xff]
    %v568 = vld [vmem:[#allocation7 + $0xe00] sm:$0xff]
    %v569 = vld [vmem:[#allocation7 + $0xe08] sm:$0xff]
    %v570 = vld [vmem:[#allocation7 + $0xe10] sm:$0xff]
    %v571 = vld [vmem:[#allocation7 + $0xe18] sm:$0xff]
    %v572 = vld [vmem:[#allocation7 + $0xe20] sm:$0xff]
    %v573 = vld [vmem:[#allocation7 + $0xe28] sm:$0xff]
    %v574 = vld [vmem:[#allocation7 + $0xe30] sm:$0xff]
    %v575 = vld [vmem:[#allocation7 + $0xe38] sm:$0xff]
    %v576 = vld [vmem:[#allocation7 + $0xe40] sm:$0xff]
    %v577 = vld [vmem:[#allocation7 + $0xe48] sm:$0xff]
    %v578 = vld [vmem:[#allocation7 + $0xe50] sm:$0xff]
    %v579 = vld [vmem:[#allocation7 + $0xe58] sm:$0xff]
    %v580 = vld [vmem:[#allocation7 + $0xe60] sm:$0xff]
    %v581 = vld [vmem:[#allocation7 + $0xe68] sm:$0xff]
    %v582 = vld [vmem:[#allocation7 + $0xe70] sm:$0xff]
    %v583 = vld [vmem:[#allocation7 + $0xe78] sm:$0xff]
    %v584 = vld [vmem:[#allocation7 + $0xe80] sm:$0xff]
    %v585 = vld [vmem:[#allocation7 + $0xe88] sm:$0xff]
    %v586 = vld [vmem:[#allocation7 + $0xe90] sm:$0xff]
    %v587 = vld [vmem:[#allocation7 + $0xe98] sm:$0xff]
    %v588 = vld [vmem:[#allocation7 + $0xea0] sm:$0xff]
    %v589 = vld [vmem:[#allocation7 + $0xea8] sm:$0xff]
    %v590 = vld [vmem:[#allocation7 + $0xeb0] sm:$0xff]
    %v591 = vld [vmem:[#allocation7 + $0xeb8] sm:$0xff]
    %v592 = vld [vmem:[#allocation7 + $0xec0] sm:$0xff]
    %v593 = vld [vmem:[#allocation7 + $0xec8] sm:$0xff]
    %v594 = vld [vmem:[#allocation7 + $0xed0] sm:$0xff]
    %v595 = vld [vmem:[#allocation7 + $0xed8] sm:$0xff]
    %v596 = vld [vmem:[#allocation7 + $0xee0] sm:$0xff]
    %v597 = vld [vmem:[#allocation7 + $0xee8] sm:$0xff]
    %v598 = vld [vmem:[#allocation7 + $0xef0] sm:$0xff]
    %v599 = vld [vmem:[#allocation7 + $0xef8] sm:$0xff]
    %v600 = vld [vmem:[#allocation7 + $0xf00] sm:$0xff]
    %v601 = vld [vmem:[#allocation7 + $0xf08] sm:$0xff]
    %v602 = vld [vmem:[#allocation7 + $0xf10] sm:$0xff]
    %v603 = vld [vmem:[#allocation7 + $0xf18] sm:$0xff]
    %v604 = vld [vmem:[#allocation7 + $0xf20] sm:$0xff]
    %v605 = vld [vmem:[#allocation7 + $0xf28] sm:$0xff]
    %v606 = vld [vmem:[#allocation7 + $0xf30] sm:$0xff]
    %v607 = vld [vmem:[#allocation7 + $0xf38] sm:$0xff]
    %v608 = vld [vmem:[#allocation7 + $0xf40] sm:$0xff]
    %v609 = vld [vmem:[#allocation7 + $0xf48] sm:$0xff]
    %v610 = vld [vmem:[#allocation7 + $0xf50] sm:$0xff]
    %v611 = vld [vmem:[#allocation7 + $0xf58] sm:$0xff]
    %v612 = vld [vmem:[#allocation7 + $0xf60] sm:$0xff]
    %v613 = vld [vmem:[#allocation7 + $0xf68] sm:$0xff]
    %v614 = vld [vmem:[#allocation7 + $0xf70] sm:$0xff]
    %v615 = vld [vmem:[#allocation7 + $0xf78] sm:$0xff]
    %v616 = vld [vmem:[#allocation7 + $0xf80] sm:$0xff]
    %v617 = vld [vmem:[#allocation7 + $0xf88] sm:$0xff]
    %v618 = vld [vmem:[#allocation7 + $0xf90] sm:$0xff]
    %v619 = vld [vmem:[#allocation7 + $0xf98] sm:$0xff]
    %v620 = vld [vmem:[#allocation7 + $0xfa0] sm:$0xff]
    %v621 = vld [vmem:[#allocation7 + $0xfa8] sm:$0xff]
    %v622 = vld [vmem:[#allocation7 + $0xfb0] sm:$0xff]
    %v623 = vld [vmem:[#allocation7 + $0xfb8] sm:$0xff]
    %v624 = vld [vmem:[#allocation7 + $0xfc0] sm:$0xff]
    %v625 = vld [vmem:[#allocation7 + $0xfc8] sm:$0xff]
    %v626 = vld [vmem:[#allocation7 + $0xfd0] sm:$0xff]
    %v627 = vld [vmem:[#allocation7 + $0xfd8] sm:$0xff]
    %v628 = vld [vmem:[#allocation7 + $0xfe0] sm:$0xff]
    %v629 = vld [vmem:[#allocation7 + $0xfe8] sm:$0xff]
    %v630 = vld [vmem:[#allocation7 + $0xff0] sm:$0xff]
    %v631 = vld [vmem:[#allocation7 + $0xff8] sm:$0xff]
    %v634 = vunpack.c.l.b16 %v374
    %v635 = vunpack.c.h.b16 %v374
    %v636 = vunpack.c.l.b16 %v375
    %v637 = vunpack.c.h.b16 %v375
    %v638 = vpack.c.b16 %v634, %v634
    %v639 = vpack.c.b16 %v635, %v635
    %v640 = vpack.c.b16 %v636, %v636
    %v641 = vpack.c.b16 %v637, %v637
    %v902 = vunpack.c.l.b16 %v376
    %v903 = vunpack.c.h.b16 %v376
    %v904 = vunpack.c.l.b16 %v377
    %v905 = vunpack.c.h.b16 %v377
    %v906 = vunpack.c.l.b16 %v378
    %v907 = vunpack.c.h.b16 %v378
    %v908 = vunpack.c.l.b16 %v379
    %v909 = vunpack.c.h.b16 %v379
    %v910 = vunpack.c.l.b16 %v380
    %v911 = vunpack.c.h.b16 %v380
    %v912 = vunpack.c.l.b16 %v381
    %v913 = vunpack.c.h.b16 %v381
    %v914 = vunpack.c.l.b16 %v382
    %v915 = vunpack.c.h.b16 %v382
    %v916 = vunpack.c.l.b16 %v383
    %v917 = vunpack.c.h.b16 %v383
    %v918 = vunpack.c.l.b16 %v384
    %v919 = vunpack.c.h.b16 %v384
    %v920 = vunpack.c.l.b16 %v385
    %v921 = vunpack.c.h.b16 %v385
    %v922 = vunpack.c.l.b16 %v386
    %v923 = vunpack.c.h.b16 %v386
    %v924 = vunpack.c.l.b16 %v387
    %v925 = vunpack.c.h.b16 %v387
    %v926 = vunpack.c.l.b16 %v388
    %v927 = vunpack.c.h.b16 %v388
    %v928 = vunpack.c.l.b16 %v389
    %v929 = vunpack.c.h.b16 %v389
    %v930 = vunpack.c.l.b16 %v390
    %v931 = vunpack.c.h.b16 %v390
    %v932 = vunpack.c.l.b16 %v391
    %v933 = vunpack.c.h.b16 %v391
    %v934 = vunpack.c.l.b16 %v392
    %v935 = vunpack.c.h.b16 %v392
    %v936 = vunpack.c.l.b16 %v393
    %v937 = vunpack.c.h.b16 %v393
    %v938 = vunpack.c.l.b16 %v394
    %v939 = vunpack.c.h.b16 %v394
    %v940 = vunpack.c.l.b16 %v395
    %v941 = vunpack.c.h.b16 %v395
    %v942 = vunpack.c.l.b16 %v396
    %v943 = vunpack.c.h.b16 %v396
    %v944 = vunpack.c.l.b16 %v397
    %v945 = vunpack.c.h.b16 %v397
    %v946 = vunpack.c.l.b16 %v398
    %v947 = vunpack.c.h.b16 %v398
    %v948 = vunpack.c.l.b16 %v399
    %v949 = vunpack.c.h.b16 %v399
    %v950 = vunpack.c.l.b16 %v400
    %v951 = vunpack.c.h.b16 %v400
    %v952 = vunpack.c.l.b16 %v401
    %v953 = vunpack.c.h.b16 %v401
    %v954 = vunpack.c.l.b16 %v402
    %v955 = vunpack.c.h.b16 %v402
    %v956 = vunpack.c.l.b16 %v403
    %v957 = vunpack.c.h.b16 %v403
    %v958 = vunpack.c.l.b16 %v404
    %v959 = vunpack.c.h.b16 %v404
    %v960 = vunpack.c.l.b16 %v405
    %v961 = vunpack.c.h.b16 %v405
    %v962 = vunpack.c.l.b16 %v406
    %v963 = vunpack.c.h.b16 %v406
    %v964 = vunpack.c.l.b16 %v407
    %v965 = vunpack.c.h.b16 %v407
    %v966 = vunpack.c.l.b16 %v408
    %v967 = vunpack.c.h.b16 %v408
    %v968 = vunpack.c.l.b16 %v409
    %v969 = vunpack.c.h.b16 %v409
    %v970 = vunpack.c.l.b16 %v410
    %v971 = vunpack.c.h.b16 %v410
    %v972 = vunpack.c.l.b16 %v411
    %v973 = vunpack.c.h.b16 %v411
    %v974 = vunpack.c.l.b16 %v412
    %v975 = vunpack.c.h.b16 %v412
    %v976 = vunpack.c.l.b16 %v413
    %v977 = vunpack.c.h.b16 %v413
    %v978 = vunpack.c.l.b16 %v414
    %v979 = vunpack.c.h.b16 %v414
    %v980 = vunpack.c.l.b16 %v415
    %v981 = vunpack.c.h.b16 %v415
    %v982 = vunpack.c.l.b16 %v416
    %v983 = vunpack.c.h.b16 %v416
    %v984 = vunpack.c.l.b16 %v417
    %v985 = vunpack.c.h.b16 %v417
    %v986 = vunpack.c.l.b16 %v418
    %v987 = vunpack.c.h.b16 %v418
    %v988 = vunpack.c.l.b16 %v419
    %v989 = vunpack.c.h.b16 %v419
    %v990 = vunpack.c.l.b16 %v420
    %v991 = vunpack.c.h.b16 %v420
    %v992 = vunpack.c.l.b16 %v421
    %v993 = vunpack.c.h.b16 %v421
    %v994 = vunpack.c.l.b16 %v422
    %v995 = vunpack.c.h.b16 %v422
    %v996 = vunpack.c.l.b16 %v423
    %v997 = vunpack.c.h.b16 %v423
    %v998 = vunpack.c.l.b16 %v424
    %v999 = vunpack.c.h.b16 %v424
    %v1000 = vunpack.c.l.b16 %v425
    %v1001 = vunpack.c.h.b16 %v425
    %v1002 = vunpack.c.l.b16 %v426
    %v1003 = vunpack.c.h.b16 %v426
    %v1004 = vunpack.c.l.b16 %v427
    %v1005 = vunpack.c.h.b16 %v427
    %v1006 = vunpack.c.l.b16 %v428
    %v1007 = vunpack.c.h.b16 %v428
    %v1008 = vunpack.c.l.b16 %v429
    %v1009 = vunpack.c.h.b16 %v429
    %v1010 = vunpack.c.l.b16 %v430
    %v1011 = vunpack.c.h.b16 %v430
    %v1012 = vunpack.c.l.b16 %v431
    %v1013 = vunpack.c.h.b16 %v431
    %v1014 = vunpack.c.l.b16 %v432
    %v1015 = vunpack.c.h.b16 %v432
    %v1016 = vunpack.c.l.b16 %v433
    %v1017 = vunpack.c.h.b16 %v433
    %v1018 = vunpack.c.l.b16 %v434
    %v1019 = vunpack.c.h.b16 %v434
    %v1020 = vunpack.c.l.b16 %v435
    %v1021 = vunpack.c.h.b16 %v435
    %v1022 = vunpack.c.l.b16 %v436
    %v1023 = vunpack.c.h.b16 %v436
    %v1024 = vunpack.c.l.b16 %v437
    %v1025 = vunpack.c.h.b16 %v437
    %v1026 = vunpack.c.l.b16 %v438
    %v1027 = vunpack.c.h.b16 %v438
    %v1028 = vunpack.c.l.b16 %v439
    %v1029 = vunpack.c.h.b16 %v439
    %v1030 = vunpack.c.l.b16 %v440
    %v1031 = vunpack.c.h.b16 %v440
    %v1032 = vunpack.c.l.b16 %v441
    %v1033 = vunpack.c.h.b16 %v441
    %v1034 = vunpack.c.l.b16 %v442
    %v1035 = vunpack.c.h.b16 %v442
    %v1036 = vunpack.c.l.b16 %v443
    %v1037 = vunpack.c.h.b16 %v443
    %v1038 = vunpack.c.l.b16 %v444
    %v1039 = vunpack.c.h.b16 %v444
    %v1040 = vunpack.c.l.b16 %v445
    %v1041 = vunpack.c.h.b16 %v445
    %v1042 = vunpack.c.l.b16 %v446
    %v1043 = vunpack.c.h.b16 %v446
    %v1044 = vunpack.c.l.b16 %v447
    %v1045 = vunpack.c.h.b16 %v447
    %v1046 = vunpack.c.l.b16 %v448
    %v1047 = vunpack.c.h.b16 %v448
    %v1048 = vunpack.c.l.b16 %v449
    %v1049 = vunpack.c.h.b16 %v449
    %v1050 = vunpack.c.l.b16 %v450
    %v1051 = vunpack.c.h.b16 %v450
    %v1052 = vunpack.c.l.b16 %v451
    %v1053 = vunpack.c.h.b16 %v451
    %v1054 = vunpack.c.l.b16 %v452
    %v1055 = vunpack.c.h.b16 %v452
    %v1056 = vunpack.c.l.b16 %v453
    %v1057 = vunpack.c.h.b16 %v453
    %v1058 = vunpack.c.l.b16 %v454
    %v1059 = vunpack.c.h.b16 %v454
    %v1060 = vunpack.c.l.b16 %v455
    %v1061 = vunpack.c.h.b16 %v455
    %v1062 = vunpack.c.l.b16 %v456
    %v1063 = vunpack.c.h.b16 %v456
    %v1064 = vunpack.c.l.b16 %v457
    %v1065 = vunpack.c.h.b16 %v457
    %v1066 = vunpack.c.l.b16 %v458
    %v1067 = vunpack.c.h.b16 %v458
    %v1068 = vunpack.c.l.b16 %v459
    %v1069 = vunpack.c.h.b16 %v459
    %v1070 = vunpack.c.l.b16 %v460
    %v1071 = vunpack.c.h.b16 %v460
    %v1072 = vunpack.c.l.b16 %v461
    %v1073 = vunpack.c.h.b16 %v461
    %v1074 = vunpack.c.l.b16 %v462
    %v1075 = vunpack.c.h.b16 %v462
    %v1076 = vunpack.c.l.b16 %v463
    %v1077 = vunpack.c.h.b16 %v463
    %v1078 = vunpack.c.l.b16 %v464
    %v1079 = vunpack.c.h.b16 %v464
    %v1080 = vunpack.c.l.b16 %v465
    %v1081 = vunpack.c.h.b16 %v465
    %v1082 = vunpack.c.l.b16 %v466
    %v1083 = vunpack.c.h.b16 %v466
    %v1084 = vunpack.c.l.b16 %v467
    %v1085 = vunpack.c.h.b16 %v467
    %v1086 = vunpack.c.l.b16 %v468
    %v1087 = vunpack.c.h.b16 %v468
    %v1088 = vunpack.c.l.b16 %v469
    %v1089 = vunpack.c.h.b16 %v469
    %v1090 = vunpack.c.l.b16 %v470
    %v1091 = vunpack.c.h.b16 %v470
    %v1092 = vunpack.c.l.b16 %v471
    %v1093 = vunpack.c.h.b16 %v471
    %v1094 = vunpack.c.l.b16 %v472
    %v1095 = vunpack.c.h.b16 %v472
    %v1096 = vunpack.c.l.b16 %v473
    %v1097 = vunpack.c.h.b16 %v473
    %v1098 = vunpack.c.l.b16 %v474
    %v1099 = vunpack.c.h.b16 %v474
    %v1100 = vunpack.c.l.b16 %v475
    %v1101 = vunpack.c.h.b16 %v475
    %v1102 = vunpack.c.l.b16 %v476
    %v1103 = vunpack.c.h.b16 %v476
    %v1104 = vunpack.c.l.b16 %v477
    %v1105 = vunpack.c.h.b16 %v477
    %v1106 = vunpack.c.l.b16 %v478
    %v1107 = vunpack.c.h.b16 %v478
    %v1108 = vunpack.c.l.b16 %v479
    %v1109 = vunpack.c.h.b16 %v479
    %v1110 = vunpack.c.l.b16 %v480
    %v1111 = vunpack.c.h.b16 %v480
    %v1112 = vunpack.c.l.b16 %v481
    %v1113 = vunpack.c.h.b16 %v481
    %v1114 = vunpack.c.l.b16 %v482
    %v1115 = vunpack.c.h.b16 %v482
    %v1116 = vunpack.c.l.b16 %v483
    %v1117 = vunpack.c.h.b16 %v483
    %v1118 = vunpack.c.l.b16 %v484
    %v1119 = vunpack.c.h.b16 %v484
    %v1120 = vunpack.c.l.b16 %v485
    %v1121 = vunpack.c.h.b16 %v485
    %v1122 = vunpack.c.l.b16 %v486
    %v1123 = vunpack.c.h.b16 %v486
    %v1124 = vunpack.c.l.b16 %v487
    %v1125 = vunpack.c.h.b16 %v487
    %v1126 = vunpack.c.l.b16 %v488
    %v1127 = vunpack.c.h.b16 %v488
    %v1128 = vunpack.c.l.b16 %v489
    %v1129 = vunpack.c.h.b16 %v489
    %v1130 = vunpack.c.l.b16 %v490
    %v1131 = vunpack.c.h.b16 %v490
    %v1132 = vunpack.c.l.b16 %v491
    %v1133 = vunpack.c.h.b16 %v491
    %v1134 = vunpack.c.l.b16 %v492
    %v1135 = vunpack.c.h.b16 %v492
    %v1136 = vunpack.c.l.b16 %v493
    %v1137 = vunpack.c.h.b16 %v493
    %v1138 = vunpack.c.l.b16 %v494
    %v1139 = vunpack.c.h.b16 %v494
    %v1140 = vunpack.c.l.b16 %v495
    %v1141 = vunpack.c.h.b16 %v495
    %v1142 = vunpack.c.l.b16 %v496
    %v1143 = vunpack.c.h.b16 %v496
    %v1144 = vunpack.c.l.b16 %v497
    %v1145 = vunpack.c.h.b16 %v497
    %v1146 = vunpack.c.l.b16 %v498
    %v1147 = vunpack.c.h.b16 %v498
    %v1148 = vunpack.c.l.b16 %v499
    %v1149 = vunpack.c.h.b16 %v499
    %v1150 = vunpack.c.l.b16 %v500
    %v1151 = vunpack.c.h.b16 %v500
    %v1152 = vunpack.c.l.b16 %v501
    %v1153 = vunpack.c.h.b16 %v501
    %v1154 = vunpack.c.l.b16 %v502
    %v1155 = vunpack.c.h.b16 %v502
    %v1156 = vunpack.c.l.b16 %v503
    %v1157 = vunpack.c.h.b16 %v503
    %v1158 = vunpack.c.l.b16 %v504
    %v1159 = vunpack.c.h.b16 %v504
    %v1160 = vunpack.c.l.b16 %v505
    %v1161 = vunpack.c.h.b16 %v505
    %v1162 = vunpack.c.l.b16 %v506
    %v1163 = vunpack.c.h.b16 %v506
    %v1164 = vunpack.c.l.b16 %v507
    %v1165 = vunpack.c.h.b16 %v507
    %v1166 = vunpack.c.l.b16 %v508
    %v1167 = vunpack.c.h.b16 %v508
    %v1168 = vunpack.c.l.b16 %v509
    %v1169 = vunpack.c.h.b16 %v509
    %v1170 = vunpack.c.l.b16 %v510
    %v1171 = vunpack.c.h.b16 %v510
    %v1172 = vunpack.c.l.b16 %v511
    %v1173 = vunpack.c.h.b16 %v511
    %v1174 = vunpack.c.l.b16 %v512
    %v1175 = vunpack.c.h.b16 %v512
    %v1176 = vunpack.c.l.b16 %v513
    %v1177 = vunpack.c.h.b16 %v513
    %v1178 = vunpack.c.l.b16 %v514
    %v1179 = vunpack.c.h.b16 %v514
    %v1180 = vunpack.c.l.b16 %v515
    %v1181 = vunpack.c.h.b16 %v515
    %v1182 = vunpack.c.l.b16 %v516
    %v1183 = vunpack.c.h.b16 %v516
    %v1184 = vunpack.c.l.b16 %v517
    %v1185 = vunpack.c.h.b16 %v517
    %v1186 = vunpack.c.l.b16 %v518
    %v1187 = vunpack.c.h.b16 %v518
    %v1188 = vunpack.c.l.b16 %v519
    %v1189 = vunpack.c.h.b16 %v519
    %v1190 = vunpack.c.l.b16 %v520
    %v1191 = vunpack.c.h.b16 %v520
    %v1192 = vunpack.c.l.b16 %v521
    %v1193 = vunpack.c.h.b16 %v521
    %v1194 = vunpack.c.l.b16 %v522
    %v1195 = vunpack.c.h.b16 %v522
    %v1196 = vunpack.c.l.b16 %v523
    %v1197 = vunpack.c.h.b16 %v523
    %v1198 = vunpack.c.l.b16 %v524
    %v1199 = vunpack.c.h.b16 %v524
    %v1200 = vunpack.c.l.b16 %v525
    %v1201 = vunpack.c.h.b16 %v525
    %v1202 = vunpack.c.l.b16 %v526
    %v1203 = vunpack.c.h.b16 %v526
    %v1204 = vunpack.c.l.b16 %v527
    %v1205 = vunpack.c.h.b16 %v527
    %v1206 = vunpack.c.l.b16 %v528
    %v1207 = vunpack.c.h.b16 %v528
    %v1208 = vunpack.c.l.b16 %v529
    %v1209 = vunpack.c.h.b16 %v529
    %v1210 = vunpack.c.l.b16 %v530
    %v1211 = vunpack.c.h.b16 %v530
    %v1212 = vunpack.c.l.b16 %v531
    %v1213 = vunpack.c.h.b16 %v531
    %v1214 = vunpack.c.l.b16 %v532
    %v1215 = vunpack.c.h.b16 %v532
    %v1216 = vunpack.c.l.b16 %v533
    %v1217 = vunpack.c.h.b16 %v533
    %v1218 = vunpack.c.l.b16 %v534
    %v1219 = vunpack.c.h.b16 %v534
    %v1220 = vunpack.c.l.b16 %v535
    %v1221 = vunpack.c.h.b16 %v535
    %v1222 = vunpack.c.l.b16 %v536
    %v1223 = vunpack.c.h.b16 %v536
    %v1224 = vunpack.c.l.b16 %v537
    %v1225 = vunpack.c.h.b16 %v537
    %v1226 = vunpack.c.l.b16 %v538
    %v1227 = vunpack.c.h.b16 %v538
    %v1228 = vunpack.c.l.b16 %v539
    %v1229 = vunpack.c.h.b16 %v539
    %v1230 = vunpack.c.l.b16 %v540
    %v1231 = vunpack.c.h.b16 %v540
    %v1232 = vunpack.c.l.b16 %v541
    %v1233 = vunpack.c.h.b16 %v541
    %v1234 = vunpack.c.l.b16 %v542
    %v1235 = vunpack.c.h.b16 %v542
    %v1236 = vunpack.c.l.b16 %v543
    %v1237 = vunpack.c.h.b16 %v543
    %v1238 = vunpack.c.l.b16 %v544
    %v1239 = vunpack.c.h.b16 %v544
    %v1240 = vunpack.c.l.b16 %v545
    %v1241 = vunpack.c.h.b16 %v545
    %v1242 = vunpack.c.l.b16 %v546
    %v1243 = vunpack.c.h.b16 %v546
    %v1244 = vunpack.c.l.b16 %v547
    %v1245 = vunpack.c.h.b16 %v547
    %v1246 = vunpack.c.l.b16 %v548
    %v1247 = vunpack.c.h.b16 %v548
    %v1248 = vunpack.c.l.b16 %v549
    %v1249 = vunpack.c.h.b16 %v549
    %v1250 = vunpack.c.l.b16 %v550
    %v1251 = vunpack.c.h.b16 %v550
    %v1252 = vunpack.c.l.b16 %v551
    %v1253 = vunpack.c.h.b16 %v551
    %v1254 = vunpack.c.l.b16 %v552
    %v1255 = vunpack.c.h.b16 %v552
    %v1256 = vunpack.c.l.b16 %v553
    %v1257 = vunpack.c.h.b16 %v553
    %v1258 = vunpack.c.l.b16 %v554
    %v1259 = vunpack.c.h.b16 %v554
    %v1260 = vunpack.c.l.b16 %v555
    %v1261 = vunpack.c.h.b16 %v555
    %v1262 = vunpack.c.l.b16 %v556
    %v1263 = vunpack.c.h.b16 %v556
    %v1264 = vunpack.c.l.b16 %v557
    %v1265 = vunpack.c.h.b16 %v557
    %v1266 = vunpack.c.l.b16 %v558
    %v1267 = vunpack.c.h.b16 %v558
    %v1268 = vunpack.c.l.b16 %v559
    %v1269 = vunpack.c.h.b16 %v559
    %v1270 = vunpack.c.l.b16 %v560
    %v1271 = vunpack.c.h.b16 %v560
    %v1272 = vunpack.c.l.b16 %v561
    %v1273 = vunpack.c.h.b16 %v561
    %v1274 = vunpack.c.l.b16 %v562
    %v1275 = vunpack.c.h.b16 %v562
    %v1276 = vunpack.c.l.b16 %v563
    %v1277 = vunpack.c.h.b16 %v563
    %v1278 = vunpack.c.l.b16 %v564
    %v1279 = vunpack.c.h.b16 %v564
    %v1280 = vunpack.c.l.b16 %v565
    %v1281 = vunpack.c.h.b16 %v565
    %v1282 = vunpack.c.l.b16 %v566
    %v1283 = vunpack.c.h.b16 %v566
    %v1284 = vunpack.c.l.b16 %v567
    %v1285 = vunpack.c.h.b16 %v567
    %v1286 = vunpack.c.l.b16 %v568
    %v1287 = vunpack.c.h.b16 %v568
    %v1288 = vunpack.c.l.b16 %v569
    %v1289 = vunpack.c.h.b16 %v569
    %v1290 = vunpack.c.l.b16 %v570
    %v1291 = vunpack.c.h.b16 %v570
    %v1292 = vunpack.c.l.b16 %v571
    %v1293 = vunpack.c.h.b16 %v571
    %v1294 = vunpack.c.l.b16 %v572
    %v1295 = vunpack.c.h.b16 %v572
    %v1296 = vunpack.c.l.b16 %v573
    %v1297 = vunpack.c.h.b16 %v573
    %v1298 = vunpack.c.l.b16 %v574
    %v1299 = vunpack.c.h.b16 %v574
    %v1300 = vunpack.c.l.b16 %v575
    %v1301 = vunpack.c.h.b16 %v575
    %v1302 = vunpack.c.l.b16 %v576
    %v1303 = vunpack.c.h.b16 %v576
    %v1304 = vunpack.c.l.b16 %v577
    %v1305 = vunpack.c.h.b16 %v577
    %v1306 = vunpack.c.l.b16 %v578
    %v1307 = vunpack.c.h.b16 %v578
    %v1308 = vunpack.c.l.b16 %v579
    %v1309 = vunpack.c.h.b16 %v579
    %v1310 = vunpack.c.l.b16 %v580
    %v1311 = vunpack.c.h.b16 %v580
    %v1312 = vunpack.c.l.b16 %v581
    %v1313 = vunpack.c.h.b16 %v581
    %v1314 = vunpack.c.l.b16 %v582
    %v1315 = vunpack.c.h.b16 %v582
    %v1316 = vunpack.c.l.b16 %v583
    %v1317 = vunpack.c.h.b16 %v583
    %v1318 = vunpack.c.l.b16 %v584
    %v1319 = vunpack.c.h.b16 %v584
    %v1320 = vunpack.c.l.b16 %v585
    %v1321 = vunpack.c.h.b16 %v585
    %v1322 = vunpack.c.l.b16 %v586
    %v1323 = vunpack.c.h.b16 %v586
    %v1324 = vunpack.c.l.b16 %v587
    %v1325 = vunpack.c.h.b16 %v587
    %v1326 = vunpack.c.l.b16 %v588
    %v1327 = vunpack.c.h.b16 %v588
    %v1328 = vunpack.c.l.b16 %v589
    %v1329 = vunpack.c.h.b16 %v589
    %v1330 = vunpack.c.l.b16 %v590
    %v1331 = vunpack.c.h.b16 %v590
    %v1332 = vunpack.c.l.b16 %v591
    %v1333 = vunpack.c.h.b16 %v591
    %v1334 = vunpack.c.l.b16 %v592
    %v1335 = vunpack.c.h.b16 %v592
    %v1336 = vunpack.c.l.b16 %v593
    %v1337 = vunpack.c.h.b16 %v593
    %v1338 = vunpack.c.l.b16 %v594
    %v1339 = vunpack.c.h.b16 %v594
    %v1340 = vunpack.c.l.b16 %v595
    %v1341 = vunpack.c.h.b16 %v595
    %v1342 = vunpack.c.l.b16 %v596
    %v1343 = vunpack.c.h.b16 %v596
    %v1344 = vunpack.c.l.b16 %v597
    %v1345 = vunpack.c.h.b16 %v597
    %v1346 = vunpack.c.l.b16 %v598
    %v1347 = vunpack.c.h.b16 %v598
    %v1348 = vunpack.c.l.b16 %v599
    %v1349 = vunpack.c.h.b16 %v599
    %v1350 = vunpack.c.l.b16 %v600
    %v1351 = vunpack.c.h.b16 %v600
    %v1352 = vunpack.c.l.b16 %v601
    %v1353 = vunpack.c.h.b16 %v601
    %v1354 = vunpack.c.l.b16 %v602
    %v1355 = vunpack.c.h.b16 %v602
    %v1356 = vunpack.c.l.b16 %v603
    %v1357 = vunpack.c.h.b16 %v603
    %v1358 = vunpack.c.l.b16 %v604
    %v1359 = vunpack.c.h.b16 %v604
    %v1360 = vunpack.c.l.b16 %v605
    %v1361 = vunpack.c.h.b16 %v605
    %v1362 = vunpack.c.l.b16 %v606
    %v1363 = vunpack.c.h.b16 %v606
    %v1364 = vunpack.c.l.b16 %v607
    %v1365 = vunpack.c.h.b16 %v607
    %v1366 = vunpack.c.l.b16 %v608
    %v1367 = vunpack.c.h.b16 %v608
    %v1368 = vunpack.c.l.b16 %v609
    %v1369 = vunpack.c.h.b16 %v609
    %v1370 = vunpack.c.l.b16 %v610
    %v1371 = vunpack.c.h.b16 %v610
    %v1372 = vunpack.c.l.b16 %v611
    %v1373 = vunpack.c.h.b16 %v611
    %v1374 = vunpack.c.l.b16 %v612
    %v1375 = vunpack.c.h.b16 %v612
    %v1376 = vunpack.c.l.b16 %v613
    %v1377 = vunpack.c.h.b16 %v613
    %v1378 = vunpack.c.l.b16 %v614
    %v1379 = vunpack.c.h.b16 %v614
    %v1380 = vunpack.c.l.b16 %v615
    %v1381 = vunpack.c.h.b16 %v615
    %v1382 = vunpack.c.l.b16 %v616
    %v1383 = vunpack.c.h.b16 %v616
    %v1384 = vunpack.c.l.b16 %v617
    %v1385 = vunpack.c.h.b16 %v617
    %v1386 = vunpack.c.l.b16 %v618
    %v1387 = vunpack.c.h.b16 %v618
    %v1388 = vunpack.c.l.b16 %v619
    %v1389 = vunpack.c.h.b16 %v619
    %v1390 = vunpack.c.l.b16 %v620
    %v1391 = vunpack.c.h.b16 %v620
    %v1392 = vunpack.c.l.b16 %v621
    %v1393 = vunpack.c.h.b16 %v621
    %v1394 = vunpack.c.l.b16 %v622
    %v1395 = vunpack.c.h.b16 %v622
    %v1396 = vunpack.c.l.b16 %v623
    %v1397 = vunpack.c.h.b16 %v623
    %v1398 = vunpack.c.l.b16 %v624
    %v1399 = vunpack.c.h.b16 %v624
    %v1400 = vunpack.c.l.b16 %v625
    %v1401 = vunpack.c.h.b16 %v625
    %v1402 = vunpack.c.l.b16 %v626
    %v1403 = vunpack.c.h.b16 %v626
    %v1404 = vunpack.c.l.b16 %v627
    %v1405 = vunpack.c.h.b16 %v627
    %v1406 = vunpack.c.l.b16 %v628
    %v1407 = vunpack.c.h.b16 %v628
    %v1408 = vunpack.c.l.b16 %v629
    %v1409 = vunpack.c.h.b16 %v629
    %v1410 = vunpack.c.l.b16 %v630
    %v1411 = vunpack.c.h.b16 %v630
    %v1412 = vunpack.c.l.b16 %v631
    %v1413 = vunpack.c.h.b16 %v631
    %v1414 = vpack.c.b16 %v910, %v902
    %v1415 = vpack.c.b16 %v911, %v903
    %v1416 = vpack.c.b16 %v912, %v904
    %v1417 = vpack.c.b16 %v913, %v905
    %v1418 = vpack.c.b16 %v914, %v906
    %v1419 = vpack.c.b16 %v915, %v907
    %v1420 = vpack.c.b16 %v916, %v908
    %v1421 = vpack.c.b16 %v917, %v909
    %v1422 = vpack.c.b16 %v926, %v918
    %v1423 = vpack.c.b16 %v927, %v919
    %v1424 = vpack.c.b16 %v928, %v920
    %v1425 = vpack.c.b16 %v929, %v921
    %v1426 = vpack.c.b16 %v930, %v922
    %v1427 = vpack.c.b16 %v931, %v923
    %v1428 = vpack.c.b16 %v932, %v924
    %v1429 = vpack.c.b16 %v933, %v925
    %v1430 = vpack.c.b16 %v942, %v934
    %v1431 = vpack.c.b16 %v943, %v935
    %v1432 = vpack.c.b16 %v944, %v936
    %v1433 = vpack.c.b16 %v945, %v937
    %v1434 = vpack.c.b16 %v946, %v938
    %v1435 = vpack.c.b16 %v947, %v939
    %v1436 = vpack.c.b16 %v948, %v940
    %v1437 = vpack.c.b16 %v949, %v941
    %v1438 = vpack.c.b16 %v958, %v950
    %v1439 = vpack.c.b16 %v959, %v951
    %v1440 = vpack.c.b16 %v960, %v952
    %v1441 = vpack.c.b16 %v961, %v953
    %v1442 = vpack.c.b16 %v962, %v954
    %v1443 = vpack.c.b16 %v963, %v955
    %v1444 = vpack.c.b16 %v964, %v956
    %v1445 = vpack.c.b16 %v965, %v957
    %v1446 = vpack.c.b16 %v974, %v966
    %v1447 = vpack.c.b16 %v975, %v967
    %v1448 = vpack.c.b16 %v976, %v968
    %v1449 = vpack.c.b16 %v977, %v969
    %v1450 = vpack.c.b16 %v978, %v970
    %v1451 = vpack.c.b16 %v979, %v971
    %v1452 = vpack.c.b16 %v980, %v972
    %v1453 = vpack.c.b16 %v981, %v973
    %v1454 = vpack.c.b16 %v990, %v982
    %v1455 = vpack.c.b16 %v991, %v983
    %v1456 = vpack.c.b16 %v992, %v984
    %v1457 = vpack.c.b16 %v993, %v985
    %v1458 = vpack.c.b16 %v994, %v986
    %v1459 = vpack.c.b16 %v995, %v987
    %v1460 = vpack.c.b16 %v996, %v988
    %v1461 = vpack.c.b16 %v997, %v989
    %v1462 = vpack.c.b16 %v1006, %v998
    %v1463 = vpack.c.b16 %v1007, %v999
    %v1464 = vpack.c.b16 %v1008, %v1000
    %v1465 = vpack.c.b16 %v1009, %v1001
    %v1466 = vpack.c.b16 %v1010, %v1002
    %v1467 = vpack.c.b16 %v1011, %v1003
    %v1468 = vpack.c.b16 %v1012, %v1004
    %v1469 = vpack.c.b16 %v1013, %v1005
    %v1470 = vpack.c.b16 %v1022, %v1014
    %v1471 = vpack.c.b16 %v1023, %v1015
    %v1472 = vpack.c.b16 %v1024, %v1016
    %v1473 = vpack.c.b16 %v1025, %v1017
    %v1474 = vpack.c.b16 %v1026, %v1018
    %v1475 = vpack.c.b16 %v1027, %v1019
    %v1476 = vpack.c.b16 %v1028, %v1020
    %v1477 = vpack.c.b16 %v1029, %v1021
    %v1478 = vpack.c.b16 %v1038, %v1030
    %v1479 = vpack.c.b16 %v1039, %v1031
    %v1480 = vpack.c.b16 %v1040, %v1032
    %v1481 = vpack.c.b16 %v1041, %v1033
    %v1482 = vpack.c.b16 %v1042, %v1034
    %v1483 = vpack.c.b16 %v1043, %v1035
    %v1484 = vpack.c.b16 %v1044, %v1036
    %v1485 = vpack.c.b16 %v1045, %v1037
    %v1486 = vpack.c.b16 %v1054, %v1046
    %v1487 = vpack.c.b16 %v1055, %v1047
    %v1488 = vpack.c.b16 %v1056, %v1048
    %v1489 = vpack.c.b16 %v1057, %v1049
    %v1490 = vpack.c.b16 %v1058, %v1050
    %v1491 = vpack.c.b16 %v1059, %v1051
    %v1492 = vpack.c.b16 %v1060, %v1052
    %v1493 = vpack.c.b16 %v1061, %v1053
    %v1494 = vpack.c.b16 %v1070, %v1062
    %v1495 = vpack.c.b16 %v1071, %v1063
    %v1496 = vpack.c.b16 %v1072, %v1064
    %v1497 = vpack.c.b16 %v1073, %v1065
    %v1498 = vpack.c.b16 %v1074, %v1066
    %v1499 = vpack.c.b16 %v1075, %v1067
    %v1500 = vpack.c.b16 %v1076, %v1068
    %v1501 = vpack.c.b16 %v1077, %v1069
    %v1502 = vpack.c.b16 %v1086, %v1078
    %v1503 = vpack.c.b16 %v1087, %v1079
    %v1504 = vpack.c.b16 %v1088, %v1080
    %v1505 = vpack.c.b16 %v1089, %v1081
    %v1506 = vpack.c.b16 %v1090, %v1082
    %v1507 = vpack.c.b16 %v1091, %v1083
    %v1508 = vpack.c.b16 %v1092, %v1084
    %v1509 = vpack.c.b16 %v1093, %v1085
    %v1510 = vpack.c.b16 %v1102, %v1094
    %v1511 = vpack.c.b16 %v1103, %v1095
    %v1512 = vpack.c.b16 %v1104, %v1096
    %v1513 = vpack.c.b16 %v1105, %v1097
    %v1514 = vpack.c.b16 %v1106, %v1098
    %v1515 = vpack.c.b16 %v1107, %v1099
    %v1516 = vpack.c.b16 %v1108, %v1100
    %v1517 = vpack.c.b16 %v1109, %v1101
    %v1518 = vpack.c.b16 %v1118, %v1110
    %v1519 = vpack.c.b16 %v1119, %v1111
    %v1520 = vpack.c.b16 %v1120, %v1112
    %v1521 = vpack.c.b16 %v1121, %v1113
    %v1522 = vpack.c.b16 %v1122, %v1114
    %v1523 = vpack.c.b16 %v1123, %v1115
    %v1524 = vpack.c.b16 %v1124, %v1116
    %v1525 = vpack.c.b16 %v1125, %v1117
    %v1526 = vpack.c.b16 %v1134, %v1126
    %v1527 = vpack.c.b16 %v1135, %v1127
    %v1528 = vpack.c.b16 %v1136, %v1128
    %v1529 = vpack.c.b16 %v1137, %v1129
    %v1530 = vpack.c.b16 %v1138, %v1130
    %v1531 = vpack.c.b16 %v1139, %v1131
    %v1532 = vpack.c.b16 %v1140, %v1132
    %v1533 = vpack.c.b16 %v1141, %v1133
    %v1534 = vpack.c.b16 %v1150, %v1142
    %v1535 = vpack.c.b16 %v1151, %v1143
    %v1536 = vpack.c.b16 %v1152, %v1144
    %v1537 = vpack.c.b16 %v1153, %v1145
    %v1538 = vpack.c.b16 %v1154, %v1146
    %v1539 = vpack.c.b16 %v1155, %v1147
    %v1540 = vpack.c.b16 %v1156, %v1148
    %v1541 = vpack.c.b16 %v1157, %v1149
    %v1542 = vpack.c.b16 %v1166, %v1158
    %v1543 = vpack.c.b16 %v1167, %v1159
    %v1544 = vpack.c.b16 %v1168, %v1160
    %v1545 = vpack.c.b16 %v1169, %v1161
    %v1546 = vpack.c.b16 %v1170, %v1162
    %v1547 = vpack.c.b16 %v1171, %v1163
    %v1548 = vpack.c.b16 %v1172, %v1164
    %v1549 = vpack.c.b16 %v1173, %v1165
    %v1550 = vpack.c.b16 %v1182, %v1174
    %v1551 = vpack.c.b16 %v1183, %v1175
    %v1552 = vpack.c.b16 %v1184, %v1176
    %v1553 = vpack.c.b16 %v1185, %v1177
    %v1554 = vpack.c.b16 %v1186, %v1178
    %v1555 = vpack.c.b16 %v1187, %v1179
    %v1556 = vpack.c.b16 %v1188, %v1180
    %v1557 = vpack.c.b16 %v1189, %v1181
    %v1558 = vpack.c.b16 %v1198, %v1190
    %v1559 = vpack.c.b16 %v1199, %v1191
    %v1560 = vpack.c.b16 %v1200, %v1192
    %v1561 = vpack.c.b16 %v1201, %v1193
    %v1562 = vpack.c.b16 %v1202, %v1194
    %v1563 = vpack.c.b16 %v1203, %v1195
    %v1564 = vpack.c.b16 %v1204, %v1196
    %v1565 = vpack.c.b16 %v1205, %v1197
    %v1566 = vpack.c.b16 %v1214, %v1206
    %v1567 = vpack.c.b16 %v1215, %v1207
    %v1568 = vpack.c.b16 %v1216, %v1208
    %v1569 = vpack.c.b16 %v1217, %v1209
    %v1570 = vpack.c.b16 %v1218, %v1210
    %v1571 = vpack.c.b16 %v1219, %v1211
    %v1572 = vpack.c.b16 %v1220, %v1212
    %v1573 = vpack.c.b16 %v1221, %v1213
    %v1574 = vpack.c.b16 %v1230, %v1222
    %v1575 = vpack.c.b16 %v1231, %v1223
    %v1576 = vpack.c.b16 %v1232, %v1224
    %v1577 = vpack.c.b16 %v1233, %v1225
    %v1578 = vpack.c.b16 %v1234, %v1226
    %v1579 = vpack.c.b16 %v1235, %v1227
    %v1580 = vpack.c.b16 %v1236, %v1228
    %v1581 = vpack.c.b16 %v1237, %v1229
    %v1582 = vpack.c.b16 %v1246, %v1238
    %v1583 = vpack.c.b16 %v1247, %v1239
    %v1584 = vpack.c.b16 %v1248, %v1240
    %v1585 = vpack.c.b16 %v1249, %v1241
    %v1586 = vpack.c.b16 %v1250, %v1242
    %v1587 = vpack.c.b16 %v1251, %v1243
    %v1588 = vpack.c.b16 %v1252, %v1244
    %v1589 = vpack.c.b16 %v1253, %v1245
    %v1590 = vpack.c.b16 %v1262, %v1254
    %v1591 = vpack.c.b16 %v1263, %v1255
    %v1592 = vpack.c.b16 %v1264, %v1256
    %v1593 = vpack.c.b16 %v1265, %v1257
    %v1594 = vpack.c.b16 %v1266, %v1258
    %v1595 = vpack.c.b16 %v1267, %v1259
    %v1596 = vpack.c.b16 %v1268, %v1260
    %v1597 = vpack.c.b16 %v1269, %v1261
    %v1598 = vpack.c.b16 %v1278, %v1270
    %v1599 = vpack.c.b16 %v1279, %v1271
    %v1600 = vpack.c.b16 %v1280, %v1272
    %v1601 = vpack.c.b16 %v1281, %v1273
    %v1602 = vpack.c.b16 %v1282, %v1274
    %v1603 = vpack.c.b16 %v1283, %v1275
    %v1604 = vpack.c.b16 %v1284, %v1276
    %v1605 = vpack.c.b16 %v1285, %v1277
    %v1606 = vpack.c.b16 %v1294, %v1286
    %v1607 = vpack.c.b16 %v1295, %v1287
    %v1608 = vpack.c.b16 %v1296, %v1288
    %v1609 = vpack.c.b16 %v1297, %v1289
    %v1610 = vpack.c.b16 %v1298, %v1290
    %v1611 = vpack.c.b16 %v1299, %v1291
    %v1612 = vpack.c.b16 %v1300, %v1292
    %v1613 = vpack.c.b16 %v1301, %v1293
    %v1614 = vpack.c.b16 %v1310, %v1302
    %v1615 = vpack.c.b16 %v1311, %v1303
    %v1616 = vpack.c.b16 %v1312, %v1304
    %v1617 = vpack.c.b16 %v1313, %v1305
    %v1618 = vpack.c.b16 %v1314, %v1306
    %v1619 = vpack.c.b16 %v1315, %v1307
    %v1620 = vpack.c.b16 %v1316, %v1308
    %v1621 = vpack.c.b16 %v1317, %v1309
    %v1622 = vpack.c.b16 %v1326, %v1318
    %v1623 = vpack.c.b16 %v1327, %v1319
    %v1624 = vpack.c.b16 %v1328, %v1320
    %v1625 = vpack.c.b16 %v1329, %v1321
    %v1626 = vpack.c.b16 %v1330, %v1322
    %v1627 = vpack.c.b16 %v1331, %v1323
    %v1628 = vpack.c.b16 %v1332, %v1324
    %v1629 = vpack.c.b16 %v1333, %v1325
    %v1630 = vpack.c.b16 %v1342, %v1334
    %v1631 = vpack.c.b16 %v1343, %v1335
    %v1632 = vpack.c.b16 %v1344, %v1336
    %v1633 = vpack.c.b16 %v1345, %v1337
    %v1634 = vpack.c.b16 %v1346, %v1338
    %v1635 = vpack.c.b16 %v1347, %v1339
    %v1636 = vpack.c.b16 %v1348, %v1340
    %v1637 = vpack.c.b16 %v1349, %v1341
    %v1638 = vpack.c.b16 %v1358, %v1350
    %v1639 = vpack.c.b16 %v1359, %v1351
    %v1640 = vpack.c.b16 %v1360, %v1352
    %v1641 = vpack.c.b16 %v1361, %v1353
    %v1642 = vpack.c.b16 %v1362, %v1354
    %v1643 = vpack.c.b16 %v1363, %v1355
    %v1644 = vpack.c.b16 %v1364, %v1356
    %v1645 = vpack.c.b16 %v1365, %v1357
    %v1646 = vpack.c.b16 %v1374, %v1366
    %v1647 = vpack.c.b16 %v1375, %v1367
    %v1648 = vpack.c.b16 %v1376, %v1368
    %v1649 = vpack.c.b16 %v1377, %v1369
    %v1650 = vpack.c.b16 %v1378, %v1370
    %v1651 = vpack.c.b16 %v1379, %v1371
    %v1652 = vpack.c.b16 %v1380, %v1372
    %v1653 = vpack.c.b16 %v1381, %v1373
    %v1654 = vpack.c.b16 %v1390, %v1382
    %v1655 = vpack.c.b16 %v1391, %v1383
    %v1656 = vpack.c.b16 %v1392, %v1384
    %v1657 = vpack.c.b16 %v1393, %v1385
    %v1658 = vpack.c.b16 %v1394, %v1386
    %v1659 = vpack.c.b16 %v1395, %v1387
    %v1660 = vpack.c.b16 %v1396, %v1388
    %v1661 = vpack.c.b16 %v1397, %v1389
    %v1662 = vpack.c.b16 %v1406, %v1398
    %v1663 = vpack.c.b16 %v1407, %v1399
    %v1664 = vpack.c.b16 %v1408, %v1400
    %v1665 = vpack.c.b16 %v1409, %v1401
    %v1666 = vpack.c.b16 %v1410, %v1402
    %v1667 = vpack.c.b16 %v1411, %v1403
    %v1668 = vpack.c.b16 %v1412, %v1404
    %v1669 = vpack.c.b16 %v1413, %v1405
    %1926 = vmatprep.subr.bf16.mxu0 %v1415
    %1927 = vmatpush1.bf16.msra.mxu0 %v1414
    %1928 = vmatprep.subr.bf16.mxu0 %v1423
    %1929 = vmatpush1.bf16.msra.mxu0 %v1422
    %1930 = vmatprep.subr.bf16.mxu0 %v1431
    %1931 = vmatpush1.bf16.msra.mxu0 %v1430
    %1932 = vmatprep.subr.bf16.mxu0 %v1439
    %1933 = vmatpush1.bf16.msra.mxu0 %v1438
    %1934 = vmatprep.subr.bf16.mxu0 %v1447
    %1935 = vmatpush1.bf16.msra.mxu0 %v1446
    %1936 = vmatprep.subr.bf16.mxu0 %v1455
    %1937 = vmatpush1.bf16.msra.mxu0 %v1454
    %1938 = vmatprep.subr.bf16.mxu0 %v1463
    %1939 = vmatpush1.bf16.msra.mxu0 %v1462
    %1940 = vmatprep.subr.bf16.mxu0 %v1471
    %1941 = vmatpush1.bf16.msra.mxu0 %v1470
    %1942 = vmatprep.subr.bf16.mxu0 %v1479
    %1943 = vmatpush1.bf16.msra.mxu0 %v1478
    %1944 = vmatprep.subr.bf16.mxu0 %v1487
    %1945 = vmatpush1.bf16.msra.mxu0 %v1486
    %1946 = vmatprep.subr.bf16.mxu0 %v1495
    %1947 = vmatpush1.bf16.msra.mxu0 %v1494
    %1948 = vmatprep.subr.bf16.mxu0 %v1503
    %1949 = vmatpush1.bf16.msra.mxu0 %v1502
    %1950 = vmatprep.subr.bf16.mxu0 %v1511
    %1951 = vmatpush1.bf16.msra.mxu0 %v1510
    %1952 = vmatprep.subr.bf16.mxu0 %v1519
    %1953 = vmatpush1.bf16.msra.mxu0 %v1518
    %1954 = vmatprep.subr.bf16.mxu0 %v1527
    %1955 = vmatpush1.bf16.msra.mxu0 %v1526
    %1956 = vmatprep.subr.bf16.mxu0 %v1535
    %1957 = vmatpush1.bf16.msra.mxu0 %v1534
    %1958 = vmatprep.mubr.bf16.mxu0 %v639
    %1959 = vmatmul.mubr.bf16.gmra.mrb[0].mxu0 %v638
    %v1960 = vpop.f32.mrb[0].mxu0
    %v1961 = vadd.f32 0.0, %v1960
    %v1962 = vpop.f32.mrb[0].mxu0
    %v1963 = vadd.f32 0.0, %v1962
    %v1964 = vpop.f32.mrb[0].mxu0
    %v1965 = vpop.f32.mrb[0].mxu0
    %1966 = vdwg.mxu0
    %1967 = vmatprep.subr.bf16.mxu0 %v1543
    %1968 = vmatpush1.bf16.msra.mxu0 %v1542
    %1969 = vmatprep.subr.bf16.mxu0 %v1551
    %1970 = vmatpush1.bf16.msra.mxu0 %v1550
    %1971 = vmatprep.subr.bf16.mxu0 %v1559
    %1972 = vmatpush1.bf16.msra.mxu0 %v1558
    %1973 = vmatprep.subr.bf16.mxu0 %v1567
    %1974 = vmatpush1.bf16.msra.mxu0 %v1566
    %1975 = vmatprep.subr.bf16.mxu0 %v1575
    %1976 = vmatpush1.bf16.msra.mxu0 %v1574
    %1977 = vmatprep.subr.bf16.mxu0 %v1583
    %1978 = vmatpush1.bf16.msra.mxu0 %v1582
    %1979 = vmatprep.subr.bf16.mxu0 %v1591
    %1980 = vmatpush1.bf16.msra.mxu0 %v1590
    %1981 = vmatprep.subr.bf16.mxu0 %v1599
    %1982 = vmatpush1.bf16.msra.mxu0 %v1598
    %1983 = vmatprep.subr.bf16.mxu0 %v1607
    %1984 = vmatpush1.bf16.msra.mxu0 %v1606
    %1985 = vmatprep.subr.bf16.mxu0 %v1615
    %1986 = vmatpush1.bf16.msra.mxu0 %v1614
    %1987 = vmatprep.subr.bf16.mxu0 %v1623
    %1988 = vmatpush1.bf16.msra.mxu0 %v1622
    %1989 = vmatprep.subr.bf16.mxu0 %v1631
    %1990 = vmatpush1.bf16.msra.mxu0 %v1630
    %1991 = vmatprep.subr.bf16.mxu0 %v1639
    %1992 = vmatpush1.bf16.msra.mxu0 %v1638
    %1993 = vmatprep.subr.bf16.mxu0 %v1647
    %1994 = vmatpush1.bf16.msra.mxu0 %v1646
    %1995 = vmatprep.subr.bf16.mxu0 %v1655
    %1996 = vmatpush1.bf16.msra.mxu0 %v1654
    %1997 = vmatprep.subr.bf16.mxu0 %v1663
    %1998 = vmatpush1.bf16.msra.mxu0 %v1662
    %1999 = vmatprep.mubr.bf16.mxu0 %v641
    %2000 = vmatmul.mubr.bf16.gmra.mrb[0].mxu0 %v640
    %v2001 = vpop.f32.mrb[0].mxu0
    %v2002 = vadd.f32 %v1961, %v2001
    %v2003 = vpop.f32.mrb[0].mxu0
    %v2004 = vadd.f32 %v1963, %v2003
    %v2005 = vpop.f32.mrb[0].mxu0
    %v2006 = vpop.f32.mrb[0].mxu0
    %2007 = vdwg.mxu0
    %2008 = vmatprep.subr.bf16.mxu0 %v1417
    %2009 = vmatpush1.bf16.msra.mxu0 %v1416
    %2010 = vmatprep.subr.bf16.mxu0 %v1425
    %2011 = vmatpush1.bf16.msra.mxu0 %v1424
    %2012 = vmatprep.subr.bf16.mxu0 %v1433
    %2013 = vmatpush1.bf16.msra.mxu0 %v1432
    %2014 = vmatprep.subr.bf16.mxu0 %v1441
    %2015 = vmatpush1.bf16.msra.mxu0 %v1440
    %2016 = vmatprep.subr.bf16.mxu0 %v1449
    %2017 = vmatpush1.bf16.msra.mxu0 %v1448
    %2018 = vmatprep.subr.bf16.mxu0 %v1457
    %2019 = vmatpush1.bf16.msra.mxu0 %v1456
    %2020 = vmatprep.subr.bf16.mxu0 %v1465
    %2021 = vmatpush1.bf16.msra.mxu0 %v1464
    %2022 = vmatprep.subr.bf16.mxu0 %v1473
    %2023 = vmatpush1.bf16.msra.mxu0 %v1472
    %2024 = vmatprep.subr.bf16.mxu0 %v1481
    %2025 = vmatpush1.bf16.msra.mxu0 %v1480
    %2026 = vmatprep.subr.bf16.mxu0 %v1489
    %2027 = vmatpush1.bf16.msra.mxu0 %v1488
    %2028 = vmatprep.subr.bf16.mxu0 %v1497
    %2029 = vmatpush1.bf16.msra.mxu0 %v1496
    %2030 = vmatprep.subr.bf16.mxu0 %v1505
    %2031 = vmatpush1.bf16.msra.mxu0 %v1504
    %2032 = vmatprep.subr.bf16.mxu0 %v1513
    %2033 = vmatpush1.bf16.msra.mxu0 %v1512
    %2034 = vmatprep.subr.bf16.mxu0 %v1521
    %2035 = vmatpush1.bf16.msra.mxu0 %v1520
    %2036 = vmatprep.subr.bf16.mxu0 %v1529
    %2037 = vmatpush1.bf16.msra.mxu0 %v1528
    %2038 = vmatprep.subr.bf16.mxu0 %v1537
    %2039 = vmatpush1.bf16.msra.mxu0 %v1536
    %2040 = vmatprep.mubr.bf16.mxu0 %v639
    %2041 = vmatmul.mubr.bf16.gmra.mrb[0].mxu0 %v638
    %v2042 = vpop.f32.mrb[0].mxu0
    %v2043 = vadd.f32 0.0, %v2042
    %v2044 = vpop.f32.mrb[0].mxu0
    %v2045 = vadd.f32 0.0, %v2044
    %v2046 = vpop.f32.mrb[0].mxu0
    %v2047 = vpop.f32.mrb[0].mxu0
    %2048 = vdwg.mxu0
    %2049 = vmatprep.subr.bf16.mxu0 %v1545
    %2050 = vmatpush1.bf16.msra.mxu0 %v1544
    %2051 = vmatprep.subr.bf16.mxu0 %v1553
    %2052 = vmatpush1.bf16.msra.mxu0 %v1552
    %2053 = vmatprep.subr.bf16.mxu0 %v1561
    %2054 = vmatpush1.bf16.msra.mxu0 %v1560
    %2055 = vmatprep.subr.bf16.mxu0 %v1569
    %2056 = vmatpush1.bf16.msra.mxu0 %v1568
    %2057 = vmatprep.subr.bf16.mxu0 %v1577
    %2058 = vmatpush1.bf16.msra.mxu0 %v1576
    %2059 = vmatprep.subr.bf16.mxu0 %v1585
    %2060 = vmatpush1.bf16.msra.mxu0 %v1584
    %2061 = vmatprep.subr.bf16.mxu0 %v1593
    %2062 = vmatpush1.bf16.msra.mxu0 %v1592
    %2063 = vmatprep.subr.bf16.mxu0 %v1601
    %2064 = vmatpush1.bf16.msra.mxu0 %v1600
    %2065 = vmatprep.subr.bf16.mxu0 %v1609
    %2066 = vmatpush1.bf16.msra.mxu0 %v1608
    %2067 = vmatprep.subr.bf16.mxu0 %v1617
    %2068 = vmatpush1.bf16.msra.mxu0 %v1616
    %2069 = vmatprep.subr.bf16.mxu0 %v1625
    %2070 = vmatpush1.bf16.msra.mxu0 %v1624
    %2071 = vmatprep.subr.bf16.mxu0 %v1633
    %2072 = vmatpush1.bf16.msra.mxu0 %v1632
    %2073 = vmatprep.subr.bf16.mxu0 %v1641
    %2074 = vmatpush1.bf16.msra.mxu0 %v1640
    %2075 = vmatprep.subr.bf16.mxu0 %v1649
    %2076 = vmatpush1.bf16.msra.mxu0 %v1648
    %2077 = vmatprep.subr.bf16.mxu0 %v1657
    %2078 = vmatpush1.bf16.msra.mxu0 %v1656
    %2079 = vmatprep.subr.bf16.mxu0 %v1665
    %2080 = vmatpush1.bf16.msra.mxu0 %v1664
    %2081 = vmatprep.mubr.bf16.mxu0 %v641
    %2082 = vmatmul.mubr.bf16.gmra.mrb[0].mxu0 %v640
    %v2083 = vpop.f32.mrb[0].mxu0
    %v2084 = vadd.f32 %v2043, %v2083
    %v2085 = vpop.f32.mrb[0].mxu0
    %v2086 = vadd.f32 %v2045, %v2085
    %v2087 = vpop.f32.mrb[0].mxu0
    %v2088 = vpop.f32.mrb[0].mxu0
    %2089 = vdwg.mxu0
    %2090 = vmatprep.subr.bf16.mxu0 %v1419
    %2091 = vmatpush1.bf16.msra.mxu0 %v1418
    %2092 = vmatprep.subr.bf16.mxu0 %v1427
    %2093 = vmatpush1.bf16.msra.mxu0 %v1426
    %2094 = vmatprep.subr.bf16.mxu0 %v1435
    %2095 = vmatpush1.bf16.msra.mxu0 %v1434
    %2096 = vmatprep.subr.bf16.mxu0 %v1443
    %2097 = vmatpush1.bf16.msra.mxu0 %v1442
    %2098 = vmatprep.subr.bf16.mxu0 %v1451
    %2099 = vmatpush1.bf16.msra.mxu0 %v1450
    %2100 = vmatprep.subr.bf16.mxu0 %v1459
    %2101 = vmatpush1.bf16.msra.mxu0 %v1458
    %2102 = vmatprep.subr.bf16.mxu0 %v1467
    %2103 = vmatpush1.bf16.msra.mxu0 %v1466
    %2104 = vmatprep.subr.bf16.mxu0 %v1475
    %2105 = vmatpush1.bf16.msra.mxu0 %v1474
    %2106 = vmatprep.subr.bf16.mxu0 %v1483
    %2107 = vmatpush1.bf16.msra.mxu0 %v1482
    %2108 = vmatprep.subr.bf16.mxu0 %v1491
    %2109 = vmatpush1.bf16.msra.mxu0 %v1490
    %2110 = vmatprep.subr.bf16.mxu0 %v1499
    %2111 = vmatpush1.bf16.msra.mxu0 %v1498
    %2112 = vmatprep.subr.bf16.mxu0 %v1507
    %2113 = vmatpush1.bf16.msra.mxu0 %v1506
    %2114 = vmatprep.subr.bf16.mxu0 %v1515
    %2115 = vmatpush1.bf16.msra.mxu0 %v1514
    %2116 = vmatprep.subr.bf16.mxu0 %v1523
    %2117 = vmatpush1.bf16.msra.mxu0 %v1522
    %2118 = vmatprep.subr.bf16.mxu0 %v1531
    %2119 = vmatpush1.bf16.msra.mxu0 %v1530
    %2120 = vmatprep.subr.bf16.mxu0 %v1539
    %2121 = vmatpush1.bf16.msra.mxu0 %v1538
    %2122 = vmatprep.mubr.bf16.mxu0 %v639
    %2123 = vmatmul.mubr.bf16.gmra.mrb[0].mxu0 %v638
    %v2124 = vpop.f32.mrb[0].mxu0
    %v2125 = vadd.f32 0.0, %v2124
    %v2126 = vpop.f32.mrb[0].mxu0
    %v2127 = vadd.f32 0.0, %v2126
    %v2128 = vpop.f32.mrb[0].mxu0
    %v2129 = vpop.f32.mrb[0].mxu0
    %2130 = vdwg.mxu0
    %2131 = vmatprep.subr.bf16.mxu0 %v1547
    %2132 = vmatpush1.bf16.msra.mxu0 %v1546
    %2133 = vmatprep.subr.bf16.mxu0 %v1555
    %2134 = vmatpush1.bf16.msra.mxu0 %v1554
    %2135 = vmatprep.subr.bf16.mxu0 %v1563
    %2136 = vmatpush1.bf16.msra.mxu0 %v1562
    %2137 = vmatprep.subr.bf16.mxu0 %v1571
    %2138 = vmatpush1.bf16.msra.mxu0 %v1570
    %2139 = vmatprep.subr.bf16.mxu0 %v1579
    %2140 = vmatpush1.bf16.msra.mxu0 %v1578
    %2141 = vmatprep.subr.bf16.mxu0 %v1587
    %2142 = vmatpush1.bf16.msra.mxu0 %v1586
    %2143 = vmatprep.subr.bf16.mxu0 %v1595
    %2144 = vmatpush1.bf16.msra.mxu0 %v1594
    %2145 = vmatprep.subr.bf16.mxu0 %v1603
    %2146 = vmatpush1.bf16.msra.mxu0 %v1602
    %2147 = vmatprep.subr.bf16.mxu0 %v1611
    %2148 = vmatpush1.bf16.msra.mxu0 %v1610
    %2149 = vmatprep.subr.bf16.mxu0 %v1619
    %2150 = vmatpush1.bf16.msra.mxu0 %v1618
    %2151 = vmatprep.subr.bf16.mxu0 %v1627
    %2152 = vmatpush1.bf16.msra.mxu0 %v1626
    %2153 = vmatprep.subr.bf16.mxu0 %v1635
    %2154 = vmatpush1.bf16.msra.mxu0 %v1634
    %2155 = vmatprep.subr.bf16.mxu0 %v1643
    %2156 = vmatpush1.bf16.msra.mxu0 %v1642
    %2157 = vmatprep.subr.bf16.mxu0 %v1651
    %2158 = vmatpush1.bf16.msra.mxu0 %v1650
    %2159 = vmatprep.subr.bf16.mxu0 %v1659
    %2160 = vmatpush1.bf16.msra.mxu0 %v1658
    %2161 = vmatprep.subr.bf16.mxu0 %v1667
    %2162 = vmatpush1.bf16.msra.mxu0 %v1666
    %2163 = vmatprep.mubr.bf16.mxu0 %v641
    %2164 = vmatmul.mubr.bf16.gmra.mrb[0].mxu0 %v640
    %v2165 = vpop.f32.mrb[0].mxu0
    %v2166 = vadd.f32 %v2125, %v2165
    %v2167 = vpop.f32.mrb[0].mxu0
    %v2168 = vadd.f32 %v2127, %v2167
    %v2169 = vpop.f32.mrb[0].mxu0
    %v2170 = vpop.f32.mrb[0].mxu0
    %2171 = vdwg.mxu0
    %2172 = vmatprep.subr.bf16.mxu0 %v1421
    %2173 = vmatpush1.bf16.msra.mxu0 %v1420
    %2174 = vmatprep.subr.bf16.mxu0 %v1429
    %2175 = vmatpush1.bf16.msra.mxu0 %v1428
    %2176 = vmatprep.subr.bf16.mxu0 %v1437
    %2177 = vmatpush1.bf16.msra.mxu0 %v1436
    %2178 = vmatprep.subr.bf16.mxu0 %v1445
    %2179 = vmatpush1.bf16.msra.mxu0 %v1444
    %2180 = vmatprep.subr.bf16.mxu0 %v1453
    %2181 = vmatpush1.bf16.msra.mxu0 %v1452
    %2182 = vmatprep.subr.bf16.mxu0 %v1461
    %2183 = vmatpush1.bf16.msra.mxu0 %v1460
    %2184 = vmatprep.subr.bf16.mxu0 %v1469
    %2185 = vmatpush1.bf16.msra.mxu0 %v1468
    %2186 = vmatprep.subr.bf16.mxu0 %v1477
    %2187 = vmatpush1.bf16.msra.mxu0 %v1476
    %2188 = vmatprep.subr.bf16.mxu0 %v1485
    %2189 = vmatpush1.bf16.msra.mxu0 %v1484
    %2190 = vmatprep.subr.bf16.mxu0 %v1493
    %2191 = vmatpush1.bf16.msra.mxu0 %v1492
    %2192 = vmatprep.subr.bf16.mxu0 %v1501
    %2193 = vmatpush1.bf16.msra.mxu0 %v1500
    %2194 = vmatprep.subr.bf16.mxu0 %v1509
    %2195 = vmatpush1.bf16.msra.mxu0 %v1508
    %2196 = vmatprep.subr.bf16.mxu0 %v1517
    %2197 = vmatpush1.bf16.msra.mxu0 %v1516
    %2198 = vmatprep.subr.bf16.mxu0 %v1525
    %2199 = vmatpush1.bf16.msra.mxu0 %v1524
    %2200 = vmatprep.subr.bf16.mxu0 %v1533
    %2201 = vmatpush1.bf16.msra.mxu0 %v1532
    %2202 = vmatprep.subr.bf16.mxu0 %v1541
    %2203 = vmatpush1.bf16.msra.mxu0 %v1540
    %2204 = vmatprep.mubr.bf16.mxu0 %v639
    %2205 = vmatmul.mubr.bf16.gmra.mrb[0].mxu0 %v638
    %v2206 = vpop.f32.mrb[0].mxu0
    %v2207 = vadd.f32 0.0, %v2206
    %v2208 = vpop.f32.mrb[0].mxu0
    %v2209 = vadd.f32 0.0, %v2208
    %v2210 = vpop.f32.mrb[0].mxu0
    %v2211 = vpop.f32.mrb[0].mxu0
    %2212 = vdwg.mxu0
    %2213 = vmatprep.subr.bf16.mxu0 %v1549
    %2214 = vmatpush1.bf16.msra.mxu0 %v1548
    %2215 = vmatprep.subr.bf16.mxu0 %v1557
    %2216 = vmatpush1.bf16.msra.mxu0 %v1556
    %2217 = vmatprep.subr.bf16.mxu0 %v1565
    %2218 = vmatpush1.bf16.msra.mxu0 %v1564
    %2219 = vmatprep.subr.bf16.mxu0 %v1573
    %2220 = vmatpush1.bf16.msra.mxu0 %v1572
    %2221 = vmatprep.subr.bf16.mxu0 %v1581
    %2222 = vmatpush1.bf16.msra.mxu0 %v1580
    %2223 = vmatprep.subr.bf16.mxu0 %v1589
    %2224 = vmatpush1.bf16.msra.mxu0 %v1588
    %2225 = vmatprep.subr.bf16.mxu0 %v1597
    %2226 = vmatpush1.bf16.msra.mxu0 %v1596
    %2227 = vmatprep.subr.bf16.mxu0 %v1605
    %2228 = vmatpush1.bf16.msra.mxu0 %v1604
    %2229 = vmatprep.subr.bf16.mxu0 %v1613
    %2230 = vmatpush1.bf16.msra.mxu0 %v1612
    %2231 = vmatprep.subr.bf16.mxu0 %v1621
    %2232 = vmatpush1.bf16.msra.mxu0 %v1620
    %2233 = vmatprep.subr.bf16.mxu0 %v1629
    %2234 = vmatpush1.bf16.msra.mxu0 %v1628
    %2235 = vmatprep.subr.bf16.mxu0 %v1637
    %2236 = vmatpush1.bf16.msra.mxu0 %v1636
    %2237 = vmatprep.subr.bf16.mxu0 %v1645
    %2238 = vmatpush1.bf16.msra.mxu0 %v1644
    %2239 = vmatprep.subr.bf16.mxu0 %v1653
    %2240 = vmatpush1.bf16.msra.mxu0 %v1652
    %2241 = vmatprep.subr.bf16.mxu0 %v1661
    %2242 = vmatpush1.bf16.msra.mxu0 %v1660
    %2243 = vmatprep.subr.bf16.mxu0 %v1669
    %2244 = vmatpush1.bf16.msra.mxu0 %v1668
    %2245 = vmatprep.mubr.bf16.mxu0 %v641
    %2246 = vmatmul.mubr.bf16.gmra.mrb[0].mxu0 %v640
    %v2247 = vpop.f32.mrb[0].mxu0
    %v2248 = vadd.f32 %v2207, %v2247
    %v2249 = vpop.f32.mrb[0].mxu0
    %v2250 = vadd.f32 %v2209, %v2249
    %v2251 = vpop.f32.mrb[0].mxu0
    %v2252 = vpop.f32.mrb[0].mxu0
    %2253 = vdwg.mxu0
    %v2256 = vunpack.c.l.b16 %v116
    %v2257 = vunpack.c.h.b16 %v116
    %v2258 = vunpack.c.l.b16 %v117
    %v2259 = vunpack.c.h.b16 %v117
    %v2260 = vpack.c.b16 %v2256, %v2256
    %v2261 = vpack.c.b16 %v2257, %v2257
    %v2262 = vpack.c.b16 %v2258, %v2258
    %v2263 = vpack.c.b16 %v2259, %v2259
    %v2524 = vunpack.c.l.b16 %v118
    %v2525 = vunpack.c.h.b16 %v118
    %v2526 = vunpack.c.l.b16 %v119
    %v2527 = vunpack.c.h.b16 %v119
    %v2528 = vunpack.c.l.b16 %v120
    %v2529 = vunpack.c.h.b16 %v120
    %v2530 = vunpack.c.l.b16 %v121
    %v2531 = vunpack.c.h.b16 %v121
    %v2532 = vunpack.c.l.b16 %v122
    %v2533 = vunpack.c.h.b16 %v122
    %v2534 = vunpack.c.l.b16 %v123
    %v2535 = vunpack.c.h.b16 %v123
    %v2536 = vunpack.c.l.b16 %v124
    %v2537 = vunpack.c.h.b16 %v124
    %v2538 = vunpack.c.l.b16 %v125
    %v2539 = vunpack.c.h.b16 %v125
    %v2540 = vunpack.c.l.b16 %v126
    %v2541 = vunpack.c.h.b16 %v126
    %v2542 = vunpack.c.l.b16 %v127
    %v2543 = vunpack.c.h.b16 %v127
    %v2544 = vunpack.c.l.b16 %v128
    %v2545 = vunpack.c.h.b16 %v128
    %v2546 = vunpack.c.l.b16 %v129
    %v2547 = vunpack.c.h.b16 %v129
    %v2548 = vunpack.c.l.b16 %v130
    %v2549 = vunpack.c.h.b16 %v130
    %v2550 = vunpack.c.l.b16 %v131
    %v2551 = vunpack.c.h.b16 %v131
    %v2552 = vunpack.c.l.b16 %v132
    %v2553 = vunpack.c.h.b16 %v132
    %v2554 = vunpack.c.l.b16 %v133
    %v2555 = vunpack.c.h.b16 %v133
    %v2556 = vunpack.c.l.b16 %v134
    %v2557 = vunpack.c.h.b16 %v134
    %v2558 = vunpack.c.l.b16 %v135
    %v2559 = vunpack.c.h.b16 %v135
    %v2560 = vunpack.c.l.b16 %v136
    %v2561 = vunpack.c.h.b16 %v136
    %v2562 = vunpack.c.l.b16 %v137
    %v2563 = vunpack.c.h.b16 %v137
    %v2564 = vunpack.c.l.b16 %v138
    %v2565 = vunpack.c.h.b16 %v138
    %v2566 = vunpack.c.l.b16 %v139
    %v2567 = vunpack.c.h.b16 %v139
    %v2568 = vunpack.c.l.b16 %v140
    %v2569 = vunpack.c.h.b16 %v140
    %v2570 = vunpack.c.l.b16 %v141
    %v2571 = vunpack.c.h.b16 %v141
    %v2572 = vunpack.c.l.b16 %v142
    %v2573 = vunpack.c.h.b16 %v142
    %v2574 = vunpack.c.l.b16 %v143
    %v2575 = vunpack.c.h.b16 %v143
    %v2576 = vunpack.c.l.b16 %v144
    %v2577 = vunpack.c.h.b16 %v144
    %v2578 = vunpack.c.l.b16 %v145
    %v2579 = vunpack.c.h.b16 %v145
    %v2580 = vunpack.c.l.b16 %v146
    %v2581 = vunpack.c.h.b16 %v146
    %v2582 = vunpack.c.l.b16 %v147
    %v2583 = vunpack.c.h.b16 %v147
    %v2584 = vunpack.c.l.b16 %v148
    %v2585 = vunpack.c.h.b16 %v148
    %v2586 = vunpack.c.l.b16 %v149
    %v2587 = vunpack.c.h.b16 %v149
    %v2588 = vunpack.c.l.b16 %v150
    %v2589 = vunpack.c.h.b16 %v150
    %v2590 = vunpack.c.l.b16 %v151
    %v2591 = vunpack.c.h.b16 %v151
    %v2592 = vunpack.c.l.b16 %v152
    %v2593 = vunpack.c.h.b16 %v152
    %v2594 = vunpack.c.l.b16 %v153
    %v2595 = vunpack.c.h.b16 %v153
    %v2596 = vunpack.c.l.b16 %v154
    %v2597 = vunpack.c.h.b16 %v154
    %v2598 = vunpack.c.l.b16 %v155
    %v2599 = vunpack.c.h.b16 %v155
    %v2600 = vunpack.c.l.b16 %v156
    %v2601 = vunpack.c.h.b16 %v156
    %v2602 = vunpack.c.l.b16 %v157
    %v2603 = vunpack.c.h.b16 %v157
    %v2604 = vunpack.c.l.b16 %v158
    %v2605 = vunpack.c.h.b16 %v158
    %v2606 = vunpack.c.l.b16 %v159
    %v2607 = vunpack.c.h.b16 %v159
    %v2608 = vunpack.c.l.b16 %v160
    %v2609 = vunpack.c.h.b16 %v160
    %v2610 = vunpack.c.l.b16 %v161
    %v2611 = vunpack.c.h.b16 %v161
    %v2612 = vunpack.c.l.b16 %v162
    %v2613 = vunpack.c.h.b16 %v162
    %v2614 = vunpack.c.l.b16 %v163
    %v2615 = vunpack.c.h.b16 %v163
    %v2616 = vunpack.c.l.b16 %v164
    %v2617 = vunpack.c.h.b16 %v164
    %v2618 = vunpack.c.l.b16 %v165
    %v2619 = vunpack.c.h.b16 %v165
    %v2620 = vunpack.c.l.b16 %v166
    %v2621 = vunpack.c.h.b16 %v166
    %v2622 = vunpack.c.l.b16 %v167
    %v2623 = vunpack.c.h.b16 %v167
    %v2624 = vunpack.c.l.b16 %v168
    %v2625 = vunpack.c.h.b16 %v168
    %v2626 = vunpack.c.l.b16 %v169
    %v2627 = vunpack.c.h.b16 %v169
    %v2628 = vunpack.c.l.b16 %v170
    %v2629 = vunpack.c.h.b16 %v170
    %v2630 = vunpack.c.l.b16 %v171
    %v2631 = vunpack.c.h.b16 %v171
    %v2632 = vunpack.c.l.b16 %v172
    %v2633 = vunpack.c.h.b16 %v172
    %v2634 = vunpack.c.l.b16 %v173
    %v2635 = vunpack.c.h.b16 %v173
    %v2636 = vunpack.c.l.b16 %v174
    %v2637 = vunpack.c.h.b16 %v174
    %v2638 = vunpack.c.l.b16 %v175
    %v2639 = vunpack.c.h.b16 %v175
    %v2640 = vunpack.c.l.b16 %v176
    %v2641 = vunpack.c.h.b16 %v176
    %v2642 = vunpack.c.l.b16 %v177
    %v2643 = vunpack.c.h.b16 %v177
    %v2644 = vunpack.c.l.b16 %v178
    %v2645 = vunpack.c.h.b16 %v178
    %v2646 = vunpack.c.l.b16 %v179
    %v2647 = vunpack.c.h.b16 %v179
    %v2648 = vunpack.c.l.b16 %v180
    %v2649 = vunpack.c.h.b16 %v180
    %v2650 = vunpack.c.l.b16 %v181
    %v2651 = vunpack.c.h.b16 %v181
    %v2652 = vunpack.c.l.b16 %v182
    %v2653 = vunpack.c.h.b16 %v182
    %v2654 = vunpack.c.l.b16 %v183
    %v2655 = vunpack.c.h.b16 %v183
    %v2656 = vunpack.c.l.b16 %v184
    %v2657 = vunpack.c.h.b16 %v184
    %v2658 = vunpack.c.l.b16 %v185
    %v2659 = vunpack.c.h.b16 %v185
    %v2660 = vunpack.c.l.b16 %v186
    %v2661 = vunpack.c.h.b16 %v186
    %v2662 = vunpack.c.l.b16 %v187
    %v2663 = vunpack.c.h.b16 %v187
    %v2664 = vunpack.c.l.b16 %v188
    %v2665 = vunpack.c.h.b16 %v188
    %v2666 = vunpack.c.l.b16 %v189
    %v2667 = vunpack.c.h.b16 %v189
    %v2668 = vunpack.c.l.b16 %v190
    %v2669 = vunpack.c.h.b16 %v190
    %v2670 = vunpack.c.l.b16 %v191
    %v2671 = vunpack.c.h.b16 %v191
    %v2672 = vunpack.c.l.b16 %v192
    %v2673 = vunpack.c.h.b16 %v192
    %v2674 = vunpack.c.l.b16 %v193
    %v2675 = vunpack.c.h.b16 %v193
    %v2676 = vunpack.c.l.b16 %v194
    %v2677 = vunpack.c.h.b16 %v194
    %v2678 = vunpack.c.l.b16 %v195
    %v2679 = vunpack.c.h.b16 %v195
    %v2680 = vunpack.c.l.b16 %v196
    %v2681 = vunpack.c.h.b16 %v196
    %v2682 = vunpack.c.l.b16 %v197
    %v2683 = vunpack.c.h.b16 %v197
    %v2684 = vunpack.c.l.b16 %v198
    %v2685 = vunpack.c.h.b16 %v198
    %v2686 = vunpack.c.l.b16 %v199
    %v2687 = vunpack.c.h.b16 %v199
    %v2688 = vunpack.c.l.b16 %v200
    %v2689 = vunpack.c.h.b16 %v200
    %v2690 = vunpack.c.l.b16 %v201
    %v2691 = vunpack.c.h.b16 %v201
    %v2692 = vunpack.c.l.b16 %v202
    %v2693 = vunpack.c.h.b16 %v202
    %v2694 = vunpack.c.l.b16 %v203
    %v2695 = vunpack.c.h.b16 %v203
    %v2696 = vunpack.c.l.b16 %v204
    %v2697 = vunpack.c.h.b16 %v204
    %v2698 = vunpack.c.l.b16 %v205
    %v2699 = vunpack.c.h.b16 %v205
    %v2700 = vunpack.c.l.b16 %v206
    %v2701 = vunpack.c.h.b16 %v206
    %v2702 = vunpack.c.l.b16 %v207
    %v2703 = vunpack.c.h.b16 %v207
    %v2704 = vunpack.c.l.b16 %v208
    %v2705 = vunpack.c.h.b16 %v208
    %v2706 = vunpack.c.l.b16 %v209
    %v2707 = vunpack.c.h.b16 %v209
    %v2708 = vunpack.c.l.b16 %v210
    %v2709 = vunpack.c.h.b16 %v210
    %v2710 = vunpack.c.l.b16 %v211
    %v2711 = vunpack.c.h.b16 %v211
    %v2712 = vunpack.c.l.b16 %v212
    %v2713 = vunpack.c.h.b16 %v212
    %v2714 = vunpack.c.l.b16 %v213
    %v2715 = vunpack.c.h.b16 %v213
    %v2716 = vunpack.c.l.b16 %v214
    %v2717 = vunpack.c.h.b16 %v214
    %v2718 = vunpack.c.l.b16 %v215
    %v2719 = vunpack.c.h.b16 %v215
    %v2720 = vunpack.c.l.b16 %v216
    %v2721 = vunpack.c.h.b16 %v216
    %v2722 = vunpack.c.l.b16 %v217
    %v2723 = vunpack.c.h.b16 %v217
    %v2724 = vunpack.c.l.b16 %v218
    %v2725 = vunpack.c.h.b16 %v218
    %v2726 = vunpack.c.l.b16 %v219
    %v2727 = vunpack.c.h.b16 %v219
    %v2728 = vunpack.c.l.b16 %v220
    %v2729 = vunpack.c.h.b16 %v220
    %v2730 = vunpack.c.l.b16 %v221
    %v2731 = vunpack.c.h.b16 %v221
    %v2732 = vunpack.c.l.b16 %v222
    %v2733 = vunpack.c.h.b16 %v222
    %v2734 = vunpack.c.l.b16 %v223
    %v2735 = vunpack.c.h.b16 %v223
    %v2736 = vunpack.c.l.b16 %v224
    %v2737 = vunpack.c.h.b16 %v224
    %v2738 = vunpack.c.l.b16 %v225
    %v2739 = vunpack.c.h.b16 %v225
    %v2740 = vunpack.c.l.b16 %v226
    %v2741 = vunpack.c.h.b16 %v226
    %v2742 = vunpack.c.l.b16 %v227
    %v2743 = vunpack.c.h.b16 %v227
    %v2744 = vunpack.c.l.b16 %v228
    %v2745 = vunpack.c.h.b16 %v228
    %v2746 = vunpack.c.l.b16 %v229
    %v2747 = vunpack.c.h.b16 %v229
    %v2748 = vunpack.c.l.b16 %v230
    %v2749 = vunpack.c.h.b16 %v230
    %v2750 = vunpack.c.l.b16 %v231
    %v2751 = vunpack.c.h.b16 %v231
    %v2752 = vunpack.c.l.b16 %v232
    %v2753 = vunpack.c.h.b16 %v232
    %v2754 = vunpack.c.l.b16 %v233
    %v2755 = vunpack.c.h.b16 %v233
    %v2756 = vunpack.c.l.b16 %v234
    %v2757 = vunpack.c.h.b16 %v234
    %v2758 = vunpack.c.l.b16 %v235
    %v2759 = vunpack.c.h.b16 %v235
    %v2760 = vunpack.c.l.b16 %v236
    %v2761 = vunpack.c.h.b16 %v236
    %v2762 = vunpack.c.l.b16 %v237
    %v2763 = vunpack.c.h.b16 %v237
    %v2764 = vunpack.c.l.b16 %v238
    %v2765 = vunpack.c.h.b16 %v238
    %v2766 = vunpack.c.l.b16 %v239
    %v2767 = vunpack.c.h.b16 %v239
    %v2768 = vunpack.c.l.b16 %v240
    %v2769 = vunpack.c.h.b16 %v240
    %v2770 = vunpack.c.l.b16 %v241
    %v2771 = vunpack.c.h.b16 %v241
    %v2772 = vunpack.c.l.b16 %v242
    %v2773 = vunpack.c.h.b16 %v242
    %v2774 = vunpack.c.l.b16 %v243
    %v2775 = vunpack.c.h.b16 %v243
    %v2776 = vunpack.c.l.b16 %v244
    %v2777 = vunpack.c.h.b16 %v244
    %v2778 = vunpack.c.l.b16 %v245
    %v2779 = vunpack.c.h.b16 %v245
    %v2780 = vunpack.c.l.b16 %v246
    %v2781 = vunpack.c.h.b16 %v246
    %v2782 = vunpack.c.l.b16 %v247
    %v2783 = vunpack.c.h.b16 %v247
    %v2784 = vunpack.c.l.b16 %v248
    %v2785 = vunpack.c.h.b16 %v248
    %v2786 = vunpack.c.l.b16 %v249
    %v2787 = vunpack.c.h.b16 %v249
    %v2788 = vunpack.c.l.b16 %v250
    %v2789 = vunpack.c.h.b16 %v250
    %v2790 = vunpack.c.l.b16 %v251
    %v2791 = vunpack.c.h.b16 %v251
    %v2792 = vunpack.c.l.b16 %v252
    %v2793 = vunpack.c.h.b16 %v252
    %v2794 = vunpack.c.l.b16 %v253
    %v2795 = vunpack.c.h.b16 %v253
    %v2796 = vunpack.c.l.b16 %v254
    %v2797 = vunpack.c.h.b16 %v254
    %v2798 = vunpack.c.l.b16 %v255
    %v2799 = vunpack.c.h.b16 %v255
    %v2800 = vunpack.c.l.b16 %v256
    %v2801 = vunpack.c.h.b16 %v256
    %v2802 = vunpack.c.l.b16 %v257
    %v2803 = vunpack.c.h.b16 %v257
    %v2804 = vunpack.c.l.b16 %v258
    %v2805 = vunpack.c.h.b16 %v258
    %v2806 = vunpack.c.l.b16 %v259
    %v2807 = vunpack.c.h.b16 %v259
    %v2808 = vunpack.c.l.b16 %v260
    %v2809 = vunpack.c.h.b16 %v260
    %v2810 = vunpack.c.l.b16 %v261
    %v2811 = vunpack.c.h.b16 %v261
    %v2812 = vunpack.c.l.b16 %v262
    %v2813 = vunpack.c.h.b16 %v262
    %v2814 = vunpack.c.l.b16 %v263
    %v2815 = vunpack.c.h.b16 %v263
    %v2816 = vunpack.c.l.b16 %v264
    %v2817 = vunpack.c.h.b16 %v264
    %v2818 = vunpack.c.l.b16 %v265
    %v2819 = vunpack.c.h.b16 %v265
    %v2820 = vunpack.c.l.b16 %v266
    %v2821 = vunpack.c.h.b16 %v266
    %v2822 = vunpack.c.l.b16 %v267
    %v2823 = vunpack.c.h.b16 %v267
    %v2824 = vunpack.c.l.b16 %v268
    %v2825 = vunpack.c.h.b16 %v268
    %v2826 = vunpack.c.l.b16 %v269
    %v2827 = vunpack.c.h.b16 %v269
    %v2828 = vunpack.c.l.b16 %v270
    %v2829 = vunpack.c.h.b16 %v270
    %v2830 = vunpack.c.l.b16 %v271
    %v2831 = vunpack.c.h.b16 %v271
    %v2832 = vunpack.c.l.b16 %v272
    %v2833 = vunpack.c.h.b16 %v272
    %v2834 = vunpack.c.l.b16 %v273
    %v2835 = vunpack.c.h.b16 %v273
    %v2836 = vunpack.c.l.b16 %v274
    %v2837 = vunpack.c.h.b16 %v274
    %v2838 = vunpack.c.l.b16 %v275
    %v2839 = vunpack.c.h.b16 %v275
    %v2840 = vunpack.c.l.b16 %v276
    %v2841 = vunpack.c.h.b16 %v276
    %v2842 = vunpack.c.l.b16 %v277
    %v2843 = vunpack.c.h.b16 %v277
    %v2844 = vunpack.c.l.b16 %v278
    %v2845 = vunpack.c.h.b16 %v278
    %v2846 = vunpack.c.l.b16 %v279
    %v2847 = vunpack.c.h.b16 %v279
    %v2848 = vunpack.c.l.b16 %v280
    %v2849 = vunpack.c.h.b16 %v280
    %v2850 = vunpack.c.l.b16 %v281
    %v2851 = vunpack.c.h.b16 %v281
    %v2852 = vunpack.c.l.b16 %v282
    %v2853 = vunpack.c.h.b16 %v282
    %v2854 = vunpack.c.l.b16 %v283
    %v2855 = vunpack.c.h.b16 %v283
    %v2856 = vunpack.c.l.b16 %v284
    %v2857 = vunpack.c.h.b16 %v284
    %v2858 = vunpack.c.l.b16 %v285
    %v2859 = vunpack.c.h.b16 %v285
    %v2860 = vunpack.c.l.b16 %v286
    %v2861 = vunpack.c.h.b16 %v286
    %v2862 = vunpack.c.l.b16 %v287
    %v2863 = vunpack.c.h.b16 %v287
    %v2864 = vunpack.c.l.b16 %v288
    %v2865 = vunpack.c.h.b16 %v288
    %v2866 = vunpack.c.l.b16 %v289
    %v2867 = vunpack.c.h.b16 %v289
    %v2868 = vunpack.c.l.b16 %v290
    %v2869 = vunpack.c.h.b16 %v290
    %v2870 = vunpack.c.l.b16 %v291
    %v2871 = vunpack.c.h.b16 %v291
    %v2872 = vunpack.c.l.b16 %v292
    %v2873 = vunpack.c.h.b16 %v292
    %v2874 = vunpack.c.l.b16 %v293
    %v2875 = vunpack.c.h.b16 %v293
    %v2876 = vunpack.c.l.b16 %v294
    %v2877 = vunpack.c.h.b16 %v294
    %v2878 = vunpack.c.l.b16 %v295
    %v2879 = vunpack.c.h.b16 %v295
    %v2880 = vunpack.c.l.b16 %v296
    %v2881 = vunpack.c.h.b16 %v296
    %v2882 = vunpack.c.l.b16 %v297
    %v2883 = vunpack.c.h.b16 %v297
    %v2884 = vunpack.c.l.b16 %v298
    %v2885 = vunpack.c.h.b16 %v298
    %v2886 = vunpack.c.l.b16 %v299
    %v2887 = vunpack.c.h.b16 %v299
    %v2888 = vunpack.c.l.b16 %v300
    %v2889 = vunpack.c.h.b16 %v300
    %v2890 = vunpack.c.l.b16 %v301
    %v2891 = vunpack.c.h.b16 %v301
    %v2892 = vunpack.c.l.b16 %v302
    %v2893 = vunpack.c.h.b16 %v302
    %v2894 = vunpack.c.l.b16 %v303
    %v2895 = vunpack.c.h.b16 %v303
    %v2896 = vunpack.c.l.b16 %v304
    %v2897 = vunpack.c.h.b16 %v304
    %v2898 = vunpack.c.l.b16 %v305
    %v2899 = vunpack.c.h.b16 %v305
    %v2900 = vunpack.c.l.b16 %v306
    %v2901 = vunpack.c.h.b16 %v306
    %v2902 = vunpack.c.l.b16 %v307
    %v2903 = vunpack.c.h.b16 %v307
    %v2904 = vunpack.c.l.b16 %v308
    %v2905 = vunpack.c.h.b16 %v308
    %v2906 = vunpack.c.l.b16 %v309
    %v2907 = vunpack.c.h.b16 %v309
    %v2908 = vunpack.c.l.b16 %v310
    %v2909 = vunpack.c.h.b16 %v310
    %v2910 = vunpack.c.l.b16 %v311
    %v2911 = vunpack.c.h.b16 %v311
    %v2912 = vunpack.c.l.b16 %v312
    %v2913 = vunpack.c.h.b16 %v312
    %v2914 = vunpack.c.l.b16 %v313
    %v2915 = vunpack.c.h.b16 %v313
    %v2916 = vunpack.c.l.b16 %v314
    %v2917 = vunpack.c.h.b16 %v314
    %v2918 = vunpack.c.l.b16 %v315
    %v2919 = vunpack.c.h.b16 %v315
    %v2920 = vunpack.c.l.b16 %v316
    %v2921 = vunpack.c.h.b16 %v316
    %v2922 = vunpack.c.l.b16 %v317
    %v2923 = vunpack.c.h.b16 %v317
    %v2924 = vunpack.c.l.b16 %v318
    %v2925 = vunpack.c.h.b16 %v318
    %v2926 = vunpack.c.l.b16 %v319
    %v2927 = vunpack.c.h.b16 %v319
    %v2928 = vunpack.c.l.b16 %v320
    %v2929 = vunpack.c.h.b16 %v320
    %v2930 = vunpack.c.l.b16 %v321
    %v2931 = vunpack.c.h.b16 %v321
    %v2932 = vunpack.c.l.b16 %v322
    %v2933 = vunpack.c.h.b16 %v322
    %v2934 = vunpack.c.l.b16 %v323
    %v2935 = vunpack.c.h.b16 %v323
    %v2936 = vunpack.c.l.b16 %v324
    %v2937 = vunpack.c.h.b16 %v324
    %v2938 = vunpack.c.l.b16 %v325
    %v2939 = vunpack.c.h.b16 %v325
    %v2940 = vunpack.c.l.b16 %v326
    %v2941 = vunpack.c.h.b16 %v326
    %v2942 = vunpack.c.l.b16 %v327
    %v2943 = vunpack.c.h.b16 %v327
    %v2944 = vunpack.c.l.b16 %v328
    %v2945 = vunpack.c.h.b16 %v328
    %v2946 = vunpack.c.l.b16 %v329
    %v2947 = vunpack.c.h.b16 %v329
    %v2948 = vunpack.c.l.b16 %v330
    %v2949 = vunpack.c.h.b16 %v330
    %v2950 = vunpack.c.l.b16 %v331
    %v2951 = vunpack.c.h.b16 %v331
    %v2952 = vunpack.c.l.b16 %v332
    %v2953 = vunpack.c.h.b16 %v332
    %v2954 = vunpack.c.l.b16 %v333
    %v2955 = vunpack.c.h.b16 %v333
    %v2956 = vunpack.c.l.b16 %v334
    %v2957 = vunpack.c.h.b16 %v334
    %v2958 = vunpack.c.l.b16 %v335
    %v2959 = vunpack.c.h.b16 %v335
    %v2960 = vunpack.c.l.b16 %v336
    %v2961 = vunpack.c.h.b16 %v336
    %v2962 = vunpack.c.l.b16 %v337
    %v2963 = vunpack.c.h.b16 %v337
    %v2964 = vunpack.c.l.b16 %v338
    %v2965 = vunpack.c.h.b16 %v338
    %v2966 = vunpack.c.l.b16 %v339
    %v2967 = vunpack.c.h.b16 %v339
    %v2968 = vunpack.c.l.b16 %v340
    %v2969 = vunpack.c.h.b16 %v340
    %v2970 = vunpack.c.l.b16 %v341
    %v2971 = vunpack.c.h.b16 %v341
    %v2972 = vunpack.c.l.b16 %v342
    %v2973 = vunpack.c.h.b16 %v342
    %v2974 = vunpack.c.l.b16 %v343
    %v2975 = vunpack.c.h.b16 %v343
    %v2976 = vunpack.c.l.b16 %v344
    %v2977 = vunpack.c.h.b16 %v344
    %v2978 = vunpack.c.l.b16 %v345
    %v2979 = vunpack.c.h.b16 %v345
    %v2980 = vunpack.c.l.b16 %v346
    %v2981 = vunpack.c.h.b16 %v346
    %v2982 = vunpack.c.l.b16 %v347
    %v2983 = vunpack.c.h.b16 %v347
    %v2984 = vunpack.c.l.b16 %v348
    %v2985 = vunpack.c.h.b16 %v348
    %v2986 = vunpack.c.l.b16 %v349
    %v2987 = vunpack.c.h.b16 %v349
    %v2988 = vunpack.c.l.b16 %v350
    %v2989 = vunpack.c.h.b16 %v350
    %v2990 = vunpack.c.l.b16 %v351
    %v2991 = vunpack.c.h.b16 %v351
    %v2992 = vunpack.c.l.b16 %v352
    %v2993 = vunpack.c.h.b16 %v352
    %v2994 = vunpack.c.l.b16 %v353
    %v2995 = vunpack.c.h.b16 %v353
    %v2996 = vunpack.c.l.b16 %v354
    %v2997 = vunpack.c.h.b16 %v354
    %v2998 = vunpack.c.l.b16 %v355
    %v2999 = vunpack.c.h.b16 %v355
    %v3000 = vunpack.c.l.b16 %v356
    %v3001 = vunpack.c.h.b16 %v356
    %v3002 = vunpack.c.l.b16 %v357
    %v3003 = vunpack.c.h.b16 %v357
    %v3004 = vunpack.c.l.b16 %v358
    %v3005 = vunpack.c.h.b16 %v358
    %v3006 = vunpack.c.l.b16 %v359
    %v3007 = vunpack.c.h.b16 %v359
    %v3008 = vunpack.c.l.b16 %v360
    %v3009 = vunpack.c.h.b16 %v360
    %v3010 = vunpack.c.l.b16 %v361
    %v3011 = vunpack.c.h.b16 %v361
    %v3012 = vunpack.c.l.b16 %v362
    %v3013 = vunpack.c.h.b16 %v362
    %v3014 = vunpack.c.l.b16 %v363
    %v3015 = vunpack.c.h.b16 %v363
    %v3016 = vunpack.c.l.b16 %v364
    %v3017 = vunpack.c.h.b16 %v364
    %v3018 = vunpack.c.l.b16 %v365
    %v3019 = vunpack.c.h.b16 %v365
    %v3020 = vunpack.c.l.b16 %v366
    %v3021 = vunpack.c.h.b16 %v366
    %v3022 = vunpack.c.l.b16 %v367
    %v3023 = vunpack.c.h.b16 %v367
    %v3024 = vunpack.c.l.b16 %v368
    %v3025 = vunpack.c.h.b16 %v368
    %v3026 = vunpack.c.l.b16 %v369
    %v3027 = vunpack.c.h.b16 %v369
    %v3028 = vunpack.c.l.b16 %v370
    %v3029 = vunpack.c.h.b16 %v370
    %v3030 = vunpack.c.l.b16 %v371
    %v3031 = vunpack.c.h.b16 %v371
    %v3032 = vunpack.c.l.b16 %v372
    %v3033 = vunpack.c.h.b16 %v372
    %v3034 = vunpack.c.l.b16 %v373
    %v3035 = vunpack.c.h.b16 %v373
    %v3036 = vpack.c.b16 %v2532, %v2524
    %v3037 = vpack.c.b16 %v2533, %v2525
    %v3038 = vpack.c.b16 %v2534, %v2526
    %v3039 = vpack.c.b16 %v2535, %v2527
    %v3040 = vpack.c.b16 %v2536, %v2528
    %v3041 = vpack.c.b16 %v2537, %v2529
    %v3042 = vpack.c.b16 %v2538, %v2530
    %v3043 = vpack.c.b16 %v2539, %v2531
    %v3044 = vpack.c.b16 %v2548, %v2540
    %v3045 = vpack.c.b16 %v2549, %v2541
    %v3046 = vpack.c.b16 %v2550, %v2542
    %v3047 = vpack.c.b16 %v2551, %v2543
    %v3048 = vpack.c.b16 %v2552, %v2544
    %v3049 = vpack.c.b16 %v2553, %v2545
    %v3050 = vpack.c.b16 %v2554, %v2546
    %v3051 = vpack.c.b16 %v2555, %v2547
    %v3052 = vpack.c.b16 %v2564, %v2556
    %v3053 = vpack.c.b16 %v2565, %v2557
    %v3054 = vpack.c.b16 %v2566, %v2558
    %v3055 = vpack.c.b16 %v2567, %v2559
    %v3056 = vpack.c.b16 %v2568, %v2560
    %v3057 = vpack.c.b16 %v2569, %v2561
    %v3058 = vpack.c.b16 %v2570, %v2562
    %v3059 = vpack.c.b16 %v2571, %v2563
    %v3060 = vpack.c.b16 %v2580, %v2572
    %v3061 = vpack.c.b16 %v2581, %v2573
    %v3062 = vpack.c.b16 %v2582, %v2574
    %v3063 = vpack.c.b16 %v2583, %v2575
    %v3064 = vpack.c.b16 %v2584, %v2576
    %v3065 = vpack.c.b16 %v2585, %v2577
    %v3066 = vpack.c.b16 %v2586, %v2578
    %v3067 = vpack.c.b16 %v2587, %v2579
    %v3068 = vpack.c.b16 %v2596, %v2588
    %v3069 = vpack.c.b16 %v2597, %v2589
    %v3070 = vpack.c.b16 %v2598, %v2590
    %v3071 = vpack.c.b16 %v2599, %v2591
    %v3072 = vpack.c.b16 %v2600, %v2592
    %v3073 = vpack.c.b16 %v2601, %v2593
    %v3074 = vpack.c.b16 %v2602, %v2594
    %v3075 = vpack.c.b16 %v2603, %v2595
    %v3076 = vpack.c.b16 %v2612, %v2604
    %v3077 = vpack.c.b16 %v2613, %v2605
    %v3078 = vpack.c.b16 %v2614, %v2606
    %v3079 = vpack.c.b16 %v2615, %v2607
    %v3080 = vpack.c.b16 %v2616, %v2608
    %v3081 = vpack.c.b16 %v2617, %v2609
    %v3082 = vpack.c.b16 %v2618, %v2610
    %v3083 = vpack.c.b16 %v2619, %v2611
    %v3084 = vpack.c.b16 %v2628, %v2620
    %v3085 = vpack.c.b16 %v2629, %v2621
    %v3086 = vpack.c.b16 %v2630, %v2622
    %v3087 = vpack.c.b16 %v2631, %v2623
    %v3088 = vpack.c.b16 %v2632, %v2624
    %v3089 = vpack.c.b16 %v2633, %v2625
    %v3090 = vpack.c.b16 %v2634, %v2626
    %v3091 = vpack.c.b16 %v2635, %v2627
    %v3092 = vpack.c.b16 %v2644, %v2636
    %v3093 = vpack.c.b16 %v2645, %v2637
    %v3094 = vpack.c.b16 %v2646, %v2638
    %v3095 = vpack.c.b16 %v2647, %v2639
    %v3096 = vpack.c.b16 %v2648, %v2640
    %v3097 = vpack.c.b16 %v2649, %v2641
    %v3098 = vpack.c.b16 %v2650, %v2642
    %v3099 = vpack.c.b16 %v2651, %v2643
    %v3100 = vpack.c.b16 %v2660, %v2652
    %v3101 = vpack.c.b16 %v2661, %v2653
    %v3102 = vpack.c.b16 %v2662, %v2654
    %v3103 = vpack.c.b16 %v2663, %v2655
    %v3104 = vpack.c.b16 %v2664, %v2656
    %v3105 = vpack.c.b16 %v2665, %v2657
    %v3106 = vpack.c.b16 %v2666, %v2658
    %v3107 = vpack.c.b16 %v2667, %v2659
    %v3108 = vpack.c.b16 %v2676, %v2668
    %v3109 = vpack.c.b16 %v2677, %v2669
    %v3110 = vpack.c.b16 %v2678, %v2670
    %v3111 = vpack.c.b16 %v2679, %v2671
    %v3112 = vpack.c.b16 %v2680, %v2672
    %v3113 = vpack.c.b16 %v2681, %v2673
    %v3114 = vpack.c.b16 %v2682, %v2674
    %v3115 = vpack.c.b16 %v2683, %v2675
    %v3116 = vpack.c.b16 %v2692, %v2684
    %v3117 = vpack.c.b16 %v2693, %v2685
    %v3118 = vpack.c.b16 %v2694, %v2686
    %v3119 = vpack.c.b16 %v2695, %v2687
    %v3120 = vpack.c.b16 %v2696, %v2688
    %v3121 = vpack.c.b16 %v2697, %v2689
    %v3122 = vpack.c.b16 %v2698, %v2690
    %v3123 = vpack.c.b16 %v2699, %v2691
    %v3124 = vpack.c.b16 %v2708, %v2700
    %v3125 = vpack.c.b16 %v2709, %v2701
    %v3126 = vpack.c.b16 %v2710, %v2702
    %v3127 = vpack.c.b16 %v2711, %v2703
    %v3128 = vpack.c.b16 %v2712, %v2704
    %v3129 = vpack.c.b16 %v2713, %v2705
    %v3130 = vpack.c.b16 %v2714, %v2706
    %v3131 = vpack.c.b16 %v2715, %v2707
    %v3132 = vpack.c.b16 %v2724, %v2716
    %v3133 = vpack.c.b16 %v2725, %v2717
    %v3134 = vpack.c.b16 %v2726, %v2718
    %v3135 = vpack.c.b16 %v2727, %v2719
    %v3136 = vpack.c.b16 %v2728, %v2720
    %v3137 = vpack.c.b16 %v2729, %v2721
    %v3138 = vpack.c.b16 %v2730, %v2722
    %v3139 = vpack.c.b16 %v2731, %v2723
    %v3140 = vpack.c.b16 %v2740, %v2732
    %v3141 = vpack.c.b16 %v2741, %v2733
    %v3142 = vpack.c.b16 %v2742, %v2734
    %v3143 = vpack.c.b16 %v2743, %v2735
    %v3144 = vpack.c.b16 %v2744, %v2736
    %v3145 = vpack.c.b16 %v2745, %v2737
    %v3146 = vpack.c.b16 %v2746, %v2738
    %v3147 = vpack.c.b16 %v2747, %v2739
    %v3148 = vpack.c.b16 %v2756, %v2748
    %v3149 = vpack.c.b16 %v2757, %v2749
    %v3150 = vpack.c.b16 %v2758, %v2750
    %v3151 = vpack.c.b16 %v2759, %v2751
    %v3152 = vpack.c.b16 %v2760, %v2752
    %v3153 = vpack.c.b16 %v2761, %v2753
    %v3154 = vpack.c.b16 %v2762, %v2754
    %v3155 = vpack.c.b16 %v2763, %v2755
    %v3156 = vpack.c.b16 %v2772, %v2764
    %v3157 = vpack.c.b16 %v2773, %v2765
    %v3158 = vpack.c.b16 %v2774, %v2766
    %v3159 = vpack.c.b16 %v2775, %v2767
    %v3160 = vpack.c.b16 %v2776, %v2768
    %v3161 = vpack.c.b16 %v2777, %v2769
    %v3162 = vpack.c.b16 %v2778, %v2770
    %v3163 = vpack.c.b16 %v2779, %v2771
    %v3164 = vpack.c.b16 %v2788, %v2780
    %v3165 = vpack.c.b16 %v2789, %v2781
    %v3166 = vpack.c.b16 %v2790, %v2782
    %v3167 = vpack.c.b16 %v2791, %v2783
    %v3168 = vpack.c.b16 %v2792, %v2784
    %v3169 = vpack.c.b16 %v2793, %v2785
    %v3170 = vpack.c.b16 %v2794, %v2786
    %v3171 = vpack.c.b16 %v2795, %v2787
    %v3172 = vpack.c.b16 %v2804, %v2796
    %v3173 = vpack.c.b16 %v2805, %v2797
    %v3174 = vpack.c.b16 %v2806, %v2798
    %v3175 = vpack.c.b16 %v2807, %v2799
    %v3176 = vpack.c.b16 %v2808, %v2800
    %v3177 = vpack.c.b16 %v2809, %v2801
    %v3178 = vpack.c.b16 %v2810, %v2802
    %v3179 = vpack.c.b16 %v2811, %v2803
    %v3180 = vpack.c.b16 %v2820, %v2812
    %v3181 = vpack.c.b16 %v2821, %v2813
    %v3182 = vpack.c.b16 %v2822, %v2814
    %v3183 = vpack.c.b16 %v2823, %v2815
    %v3184 = vpack.c.b16 %v2824, %v2816
    %v3185 = vpack.c.b16 %v2825, %v2817
    %v3186 = vpack.c.b16 %v2826, %v2818
    %v3187 = vpack.c.b16 %v2827, %v2819
    %v3188 = vpack.c.b16 %v2836, %v2828
    %v3189 = vpack.c.b16 %v2837, %v2829
    %v3190 = vpack.c.b16 %v2838, %v2830
    %v3191 = vpack.c.b16 %v2839, %v2831
    %v3192 = vpack.c.b16 %v2840, %v2832
    %v3193 = vpack.c.b16 %v2841, %v2833
    %v3194 = vpack.c.b16 %v2842, %v2834
    %v3195 = vpack.c.b16 %v2843, %v2835
    %v3196 = vpack.c.b16 %v2852, %v2844
    %v3197 = vpack.c.b16 %v2853, %v2845
    %v3198 = vpack.c.b16 %v2854, %v2846
    %v3199 = vpack.c.b16 %v2855, %v2847
    %v3200 = vpack.c.b16 %v2856, %v2848
    %v3201 = vpack.c.b16 %v2857, %v2849
    %v3202 = vpack.c.b16 %v2858, %v2850
    %v3203 = vpack.c.b16 %v2859, %v2851
    %v3204 = vpack.c.b16 %v2868, %v2860
    %v3205 = vpack.c.b16 %v2869, %v2861
    %v3206 = vpack.c.b16 %v2870, %v2862
    %v3207 = vpack.c.b16 %v2871, %v2863
    %v3208 = vpack.c.b16 %v2872, %v2864
    %v3209 = vpack.c.b16 %v2873, %v2865
    %v3210 = vpack.c.b16 %v2874, %v2866
    %v3211 = vpack.c.b16 %v2875, %v2867
    %v3212 = vpack.c.b16 %v2884, %v2876
    %v3213 = vpack.c.b16 %v2885, %v2877
    %v3214 = vpack.c.b16 %v2886, %v2878
    %v3215 = vpack.c.b16 %v2887, %v2879
    %v3216 = vpack.c.b16 %v2888, %v2880
    %v3217 = vpack.c.b16 %v2889, %v2881
    %v3218 = vpack.c.b16 %v2890, %v2882
    %v3219 = vpack.c.b16 %v2891, %v2883
    %v3220 = vpack.c.b16 %v2900, %v2892
    %v3221 = vpack.c.b16 %v2901, %v2893
    %v3222 = vpack.c.b16 %v2902, %v2894
    %v3223 = vpack.c.b16 %v2903, %v2895
    %v3224 = vpack.c.b16 %v2904, %v2896
    %v3225 = vpack.c.b16 %v2905, %v2897
    %v3226 = vpack.c.b16 %v2906, %v2898
    %v3227 = vpack.c.b16 %v2907, %v2899
    %v3228 = vpack.c.b16 %v2916, %v2908
    %v3229 = vpack.c.b16 %v2917, %v2909
    %v3230 = vpack.c.b16 %v2918, %v2910
    %v3231 = vpack.c.b16 %v2919, %v2911
    %v3232 = vpack.c.b16 %v2920, %v2912
    %v3233 = vpack.c.b16 %v2921, %v2913
    %v3234 = vpack.c.b16 %v2922, %v2914
    %v3235 = vpack.c.b16 %v2923, %v2915
    %v3236 = vpack.c.b16 %v2932, %v2924
    %v3237 = vpack.c.b16 %v2933, %v2925
    %v3238 = vpack.c.b16 %v2934, %v2926
    %v3239 = vpack.c.b16 %v2935, %v2927
    %v3240 = vpack.c.b16 %v2936, %v2928
    %v3241 = vpack.c.b16 %v2937, %v2929
    %v3242 = vpack.c.b16 %v2938, %v2930
    %v3243 = vpack.c.b16 %v2939, %v2931
    %v3244 = vpack.c.b16 %v2948, %v2940
    %v3245 = vpack.c.b16 %v2949, %v2941
    %v3246 = vpack.c.b16 %v2950, %v2942
    %v3247 = vpack.c.b16 %v2951, %v2943
    %v3248 = vpack.c.b16 %v2952, %v2944
    %v3249 = vpack.c.b16 %v2953, %v2945
    %v3250 = vpack.c.b16 %v2954, %v2946
    %v3251 = vpack.c.b16 %v2955, %v2947
    %v3252 = vpack.c.b16 %v2964, %v2956
    %v3253 = vpack.c.b16 %v2965, %v2957
    %v3254 = vpack.c.b16 %v2966, %v2958
    %v3255 = vpack.c.b16 %v2967, %v2959
    %v3256 = vpack.c.b16 %v2968, %v2960
    %v3257 = vpack.c.b16 %v2969, %v2961
    %v3258 = vpack.c.b16 %v2970, %v2962
    %v3259 = vpack.c.b16 %v2971, %v2963
    %v3260 = vpack.c.b16 %v2980, %v2972
    %v3261 = vpack.c.b16 %v2981, %v2973
    %v3262 = vpack.c.b16 %v2982, %v2974
    %v3263 = vpack.c.b16 %v2983, %v2975
    %v3264 = vpack.c.b16 %v2984, %v2976
    %v3265 = vpack.c.b16 %v2985, %v2977
    %v3266 = vpack.c.b16 %v2986, %v2978
    %v3267 = vpack.c.b16 %v2987, %v2979
    %v3268 = vpack.c.b16 %v2996, %v2988
    %v3269 = vpack.c.b16 %v2997, %v2989
    %v3270 = vpack.c.b16 %v2998, %v2990
    %v3271 = vpack.c.b16 %v2999, %v2991
    %v3272 = vpack.c.b16 %v3000, %v2992
    %v3273 = vpack.c.b16 %v3001, %v2993
    %v3274 = vpack.c.b16 %v3002, %v2994
    %v3275 = vpack.c.b16 %v3003, %v2995
    %v3276 = vpack.c.b16 %v3012, %v3004
    %v3277 = vpack.c.b16 %v3013, %v3005
    %v3278 = vpack.c.b16 %v3014, %v3006
    %v3279 = vpack.c.b16 %v3015, %v3007
    %v3280 = vpack.c.b16 %v3016, %v3008
    %v3281 = vpack.c.b16 %v3017, %v3009
    %v3282 = vpack.c.b16 %v3018, %v3010
    %v3283 = vpack.c.b16 %v3019, %v3011
    %v3284 = vpack.c.b16 %v3028, %v3020
    %v3285 = vpack.c.b16 %v3029, %v3021
    %v3286 = vpack.c.b16 %v3030, %v3022
    %v3287 = vpack.c.b16 %v3031, %v3023
    %v3288 = vpack.c.b16 %v3032, %v3024
    %v3289 = vpack.c.b16 %v3033, %v3025
    %v3290 = vpack.c.b16 %v3034, %v3026
    %v3291 = vpack.c.b16 %v3035, %v3027
    %3548 = vmatprep.subr.bf16.mxu0 %v3037
    %3549 = vmatpush1.bf16.msra.mxu0 %v3036
    %3550 = vmatprep.subr.bf16.mxu0 %v3045
    %3551 = vmatpush1.bf16.msra.mxu0 %v3044
    %3552 = vmatprep.subr.bf16.mxu0 %v3053
    %3553 = vmatpush1.bf16.msra.mxu0 %v3052
    %3554 = vmatprep.subr.bf16.mxu0 %v3061
    %3555 = vmatpush1.bf16.msra.mxu0 %v3060
    %3556 = vmatprep.subr.bf16.mxu0 %v3069
    %3557 = vmatpush1.bf16.msra.mxu0 %v3068
    %3558 = vmatprep.subr.bf16.mxu0 %v3077
    %3559 = vmatpush1.bf16.msra.mxu0 %v3076
    %3560 = vmatprep.subr.bf16.mxu0 %v3085
    %3561 = vmatpush1.bf16.msra.mxu0 %v3084
    %3562 = vmatprep.subr.bf16.mxu0 %v3093
    %3563 = vmatpush1.bf16.msra.mxu0 %v3092
    %3564 = vmatprep.subr.bf16.mxu0 %v3101
    %3565 = vmatpush1.bf16.msra.mxu0 %v3100
    %3566 = vmatprep.subr.bf16.mxu0 %v3109
    %3567 = vmatpush1.bf16.msra.mxu0 %v3108
    %3568 = vmatprep.subr.bf16.mxu0 %v3117
    %3569 = vmatpush1.bf16.msra.mxu0 %v3116
    %3570 = vmatprep.subr.bf16.mxu0 %v3125
    %3571 = vmatpush1.bf16.msra.mxu0 %v3124
    %3572 = vmatprep.subr.bf16.mxu0 %v3133
    %3573 = vmatpush1.bf16.msra.mxu0 %v3132
    %3574 = vmatprep.subr.bf16.mxu0 %v3141
    %3575 = vmatpush1.bf16.msra.mxu0 %v3140
    %3576 = vmatprep.subr.bf16.mxu0 %v3149
    %3577 = vmatpush1.bf16.msra.mxu0 %v3148
    %3578 = vmatprep.subr.bf16.mxu0 %v3157
    %3579 = vmatpush1.bf16.msra.mxu0 %v3156
    %3580 = vmatprep.mubr.bf16.mxu0 %v2261
    %3581 = vmatmul.mubr.bf16.gmra.mrb[0].mxu0 %v2260
    %v3582 = vpop.f32.mrb[0].mxu0
    %v3583 = vadd.f32 %v2002, %v3582
    %v3584 = vpop.f32.mrb[0].mxu0
    %v3585 = vadd.f32 %v2004, %v3584
    %v3586 = vpop.f32.mrb[0].mxu0
    %v3587 = vpop.f32.mrb[0].mxu0
    %3588 = vdwg.mxu0
    %3589 = vmatprep.subr.bf16.mxu0 %v3165
    %3590 = vmatpush1.bf16.msra.mxu0 %v3164
    %3591 = vmatprep.subr.bf16.mxu0 %v3173
    %3592 = vmatpush1.bf16.msra.mxu0 %v3172
    %3593 = vmatprep.subr.bf16.mxu0 %v3181
    %3594 = vmatpush1.bf16.msra.mxu0 %v3180
    %3595 = vmatprep.subr.bf16.mxu0 %v3189
    %3596 = vmatpush1.bf16.msra.mxu0 %v3188
    %3597 = vmatprep.subr.bf16.mxu0 %v3197
    %3598 = vmatpush1.bf16.msra.mxu0 %v3196
    %3599 = vmatprep.subr.bf16.mxu0 %v3205
    %3600 = vmatpush1.bf16.msra.mxu0 %v3204
    %3601 = vmatprep.subr.bf16.mxu0 %v3213
    %3602 = vmatpush1.bf16.msra.mxu0 %v3212
    %3603 = vmatprep.subr.bf16.mxu0 %v3221
    %3604 = vmatpush1.bf16.msra.mxu0 %v3220
    %3605 = vmatprep.subr.bf16.mxu0 %v3229
    %3606 = vmatpush1.bf16.msra.mxu0 %v3228
    %3607 = vmatprep.subr.bf16.mxu0 %v3237
    %3608 = vmatpush1.bf16.msra.mxu0 %v3236
    %3609 = vmatprep.subr.bf16.mxu0 %v3245
    %3610 = vmatpush1.bf16.msra.mxu0 %v3244
    %3611 = vmatprep.subr.bf16.mxu0 %v3253
    %3612 = vmatpush1.bf16.msra.mxu0 %v3252
    %3613 = vmatprep.subr.bf16.mxu0 %v3261
    %3614 = vmatpush1.bf16.msra.mxu0 %v3260
    %3615 = vmatprep.subr.bf16.mxu0 %v3269
    %3616 = vmatpush1.bf16.msra.mxu0 %v3268
    %3617 = vmatprep.subr.bf16.mxu0 %v3277
    %3618 = vmatpush1.bf16.msra.mxu0 %v3276
    %3619 = vmatprep.subr.bf16.mxu0 %v3285
    %3620 = vmatpush1.bf16.msra.mxu0 %v3284
    %3621 = vmatprep.mubr.bf16.mxu0 %v2263
    %3622 = vmatmul.mubr.bf16.gmra.mrb[0].mxu0 %v2262
    %v3623 = vpop.f32.mrb[0].mxu0
    %v3624 = vadd.f32 %v3583, %v3623
    %v3625 = vpop.f32.mrb[0].mxu0
    %v3626 = vadd.f32 %v3585, %v3625
    %v3627 = vpop.f32.mrb[0].mxu0
    %v3628 = vpop.f32.mrb[0].mxu0
    %3629 = vdwg.mxu0
    %3630 = vmatprep.subr.bf16.mxu0 %v3039
    %3631 = vmatpush1.bf16.msra.mxu0 %v3038
    %3632 = vmatprep.subr.bf16.mxu0 %v3047
    %3633 = vmatpush1.bf16.msra.mxu0 %v3046
    %3634 = vmatprep.subr.bf16.mxu0 %v3055
    %3635 = vmatpush1.bf16.msra.mxu0 %v3054
    %3636 = vmatprep.subr.bf16.mxu0 %v3063
    %3637 = vmatpush1.bf16.msra.mxu0 %v3062
    %3638 = vmatprep.subr.bf16.mxu0 %v3071
    %3639 = vmatpush1.bf16.msra.mxu0 %v3070
    %3640 = vmatprep.subr.bf16.mxu0 %v3079
    %3641 = vmatpush1.bf16.msra.mxu0 %v3078
    %3642 = vmatprep.subr.bf16.mxu0 %v3087
    %3643 = vmatpush1.bf16.msra.mxu0 %v3086
    %3644 = vmatprep.subr.bf16.mxu0 %v3095
    %3645 = vmatpush1.bf16.msra.mxu0 %v3094
    %3646 = vmatprep.subr.bf16.mxu0 %v3103
    %3647 = vmatpush1.bf16.msra.mxu0 %v3102
    %3648 = vmatprep.subr.bf16.mxu0 %v3111
    %3649 = vmatpush1.bf16.msra.mxu0 %v3110
    %3650 = vmatprep.subr.bf16.mxu0 %v3119
    %3651 = vmatpush1.bf16.msra.mxu0 %v3118
    %3652 = vmatprep.subr.bf16.mxu0 %v3127
    %3653 = vmatpush1.bf16.msra.mxu0 %v3126
    %3654 = vmatprep.subr.bf16.mxu0 %v3135
    %3655 = vmatpush1.bf16.msra.mxu0 %v3134
    %3656 = vmatprep.subr.bf16.mxu0 %v3143
    %3657 = vmatpush1.bf16.msra.mxu0 %v3142
    %3658 = vmatprep.subr.bf16.mxu0 %v3151
    %3659 = vmatpush1.bf16.msra.mxu0 %v3150
    %3660 = vmatprep.subr.bf16.mxu0 %v3159
    %3661 = vmatpush1.bf16.msra.mxu0 %v3158
    %3662 = vmatprep.mubr.bf16.mxu0 %v2261
    %3663 = vmatmul.mubr.bf16.gmra.mrb[0].mxu0 %v2260
    %v3664 = vpop.f32.mrb[0].mxu0
    %v3665 = vadd.f32 %v2084, %v3664
    %v3666 = vpop.f32.mrb[0].mxu0
    %v3667 = vadd.f32 %v2086, %v3666
    %v3668 = vpop.f32.mrb[0].mxu0
    %v3669 = vpop.f32.mrb[0].mxu0
    %3670 = vdwg.mxu0
    %3671 = vmatprep.subr.bf16.mxu0 %v3167
    %3672 = vmatpush1.bf16.msra.mxu0 %v3166
    %3673 = vmatprep.subr.bf16.mxu0 %v3175
    %3674 = vmatpush1.bf16.msra.mxu0 %v3174
    %3675 = vmatprep.subr.bf16.mxu0 %v3183
    %3676 = vmatpush1.bf16.msra.mxu0 %v3182
    %3677 = vmatprep.subr.bf16.mxu0 %v3191
    %3678 = vmatpush1.bf16.msra.mxu0 %v3190
    %3679 = vmatprep.subr.bf16.mxu0 %v3199
    %3680 = vmatpush1.bf16.msra.mxu0 %v3198
    %3681 = vmatprep.subr.bf16.mxu0 %v3207
    %3682 = vmatpush1.bf16.msra.mxu0 %v3206
    %3683 = vmatprep.subr.bf16.mxu0 %v3215
    %3684 = vmatpush1.bf16.msra.mxu0 %v3214
    %3685 = vmatprep.subr.bf16.mxu0 %v3223
    %3686 = vmatpush1.bf16.msra.mxu0 %v3222
    %3687 = vmatprep.subr.bf16.mxu0 %v3231
    %3688 = vmatpush1.bf16.msra.mxu0 %v3230
    %3689 = vmatprep.subr.bf16.mxu0 %v3239
    %3690 = vmatpush1.bf16.msra.mxu0 %v3238
    %3691 = vmatprep.subr.bf16.mxu0 %v3247
    %3692 = vmatpush1.bf16.msra.mxu0 %v3246
    %3693 = vmatprep.subr.bf16.mxu0 %v3255
    %3694 = vmatpush1.bf16.msra.mxu0 %v3254
    %3695 = vmatprep.subr.bf16.mxu0 %v3263
    %3696 = vmatpush1.bf16.msra.mxu0 %v3262
    %3697 = vmatprep.subr.bf16.mxu0 %v3271
    %3698 = vmatpush1.bf16.msra.mxu0 %v3270
    %3699 = vmatprep.subr.bf16.mxu0 %v3279
    %3700 = vmatpush1.bf16.msra.mxu0 %v3278
    %3701 = vmatprep.subr.bf16.mxu0 %v3287
    %3702 = vmatpush1.bf16.msra.mxu0 %v3286
    %3703 = vmatprep.mubr.bf16.mxu0 %v2263
    %3704 = vmatmul.mubr.bf16.gmra.mrb[0].mxu0 %v2262
    %v3705 = vpop.f32.mrb[0].mxu0
    %v3706 = vadd.f32 %v3665, %v3705
    %v3707 = vpop.f32.mrb[0].mxu0
    %v3708 = vadd.f32 %v3667, %v3707
    %v3709 = vpop.f32.mrb[0].mxu0
    %v3710 = vpop.f32.mrb[0].mxu0
    %3711 = vdwg.mxu0
    %3712 = vmatprep.subr.bf16.mxu0 %v3041
    %3713 = vmatpush1.bf16.msra.mxu0 %v3040
    %3714 = vmatprep.subr.bf16.mxu0 %v3049
    %3715 = vmatpush1.bf16.msra.mxu0 %v3048
    %3716 = vmatprep.subr.bf16.mxu0 %v3057
    %3717 = vmatpush1.bf16.msra.mxu0 %v3056
    %3718 = vmatprep.subr.bf16.mxu0 %v3065
    %3719 = vmatpush1.bf16.msra.mxu0 %v3064
    %3720 = vmatprep.subr.bf16.mxu0 %v3073
    %3721 = vmatpush1.bf16.msra.mxu0 %v3072
    %3722 = vmatprep.subr.bf16.mxu0 %v3081
    %3723 = vmatpush1.bf16.msra.mxu0 %v3080
    %3724 = vmatprep.subr.bf16.mxu0 %v3089
    %3725 = vmatpush1.bf16.msra.mxu0 %v3088
    %3726 = vmatprep.subr.bf16.mxu0 %v3097
    %3727 = vmatpush1.bf16.msra.mxu0 %v3096
    %3728 = vmatprep.subr.bf16.mxu0 %v3105
    %3729 = vmatpush1.bf16.msra.mxu0 %v3104
    %3730 = vmatprep.subr.bf16.mxu0 %v3113
    %3731 = vmatpush1.bf16.msra.mxu0 %v3112
    %3732 = vmatprep.subr.bf16.mxu0 %v3121
    %3733 = vmatpush1.bf16.msra.mxu0 %v3120
    %3734 = vmatprep.subr.bf16.mxu0 %v3129
    %3735 = vmatpush1.bf16.msra.mxu0 %v3128
    %3736 = vmatprep.subr.bf16.mxu0 %v3137
    %3737 = vmatpush1.bf16.msra.mxu0 %v3136
    %3738 = vmatprep.subr.bf16.mxu0 %v3145
    %3739 = vmatpush1.bf16.msra.mxu0 %v3144
    %3740 = vmatprep.subr.bf16.mxu0 %v3153
    %3741 = vmatpush1.bf16.msra.mxu0 %v3152
    %3742 = vmatprep.subr.bf16.mxu0 %v3161
    %3743 = vmatpush1.bf16.msra.mxu0 %v3160
    %3744 = vmatprep.mubr.bf16.mxu0 %v2261
    %3745 = vmatmul.mubr.bf16.gmra.mrb[0].mxu0 %v2260
    %v3746 = vpop.f32.mrb[0].mxu0
    %v3747 = vadd.f32 %v2166, %v3746
    %v3748 = vpop.f32.mrb[0].mxu0
    %v3749 = vadd.f32 %v2168, %v3748
    %v3750 = vpop.f32.mrb[0].mxu0
    %v3751 = vpop.f32.mrb[0].mxu0
    %3752 = vdwg.mxu0
    %3753 = vmatprep.subr.bf16.mxu0 %v3169
    %3754 = vmatpush1.bf16.msra.mxu0 %v3168
    %3755 = vmatprep.subr.bf16.mxu0 %v3177
    %3756 = vmatpush1.bf16.msra.mxu0 %v3176
    %3757 = vmatprep.subr.bf16.mxu0 %v3185
    %3758 = vmatpush1.bf16.msra.mxu0 %v3184
    %3759 = vmatprep.subr.bf16.mxu0 %v3193
    %3760 = vmatpush1.bf16.msra.mxu0 %v3192
    %3761 = vmatprep.subr.bf16.mxu0 %v3201
    %3762 = vmatpush1.bf16.msra.mxu0 %v3200
    %3763 = vmatprep.subr.bf16.mxu0 %v3209
    %3764 = vmatpush1.bf16.msra.mxu0 %v3208
    %3765 = vmatprep.subr.bf16.mxu0 %v3217
    %3766 = vmatpush1.bf16.msra.mxu0 %v3216
    %3767 = vmatprep.subr.bf16.mxu0 %v3225
    %3768 = vmatpush1.bf16.msra.mxu0 %v3224
    %3769 = vmatprep.subr.bf16.mxu0 %v3233
    %3770 = vmatpush1.bf16.msra.mxu0 %v3232
    %3771 = vmatprep.subr.bf16.mxu0 %v3241
    %3772 = vmatpush1.bf16.msra.mxu0 %v3240
    %3773 = vmatprep.subr.bf16.mxu0 %v3249
    %3774 = vmatpush1.bf16.msra.mxu0 %v3248
    %3775 = vmatprep.subr.bf16.mxu0 %v3257
    %3776 = vmatpush1.bf16.msra.mxu0 %v3256
    %3777 = vmatprep.subr.bf16.mxu0 %v3265
    %3778 = vmatpush1.bf16.msra.mxu0 %v3264
    %3779 = vmatprep.subr.bf16.mxu0 %v3273
    %3780 = vmatpush1.bf16.msra.mxu0 %v3272
    %3781 = vmatprep.subr.bf16.mxu0 %v3281
    %3782 = vmatpush1.bf16.msra.mxu0 %v3280
    %3783 = vmatprep.subr.bf16.mxu0 %v3289
    %3784 = vmatpush1.bf16.msra.mxu0 %v3288
    %3785 = vmatprep.mubr.bf16.mxu0 %v2263
    %3786 = vmatmul.mubr.bf16.gmra.mrb[0].mxu0 %v2262
    %v3787 = vpop.f32.mrb[0].mxu0
    %v3788 = vadd.f32 %v3747, %v3787
    %v3789 = vpop.f32.mrb[0].mxu0
    %v3790 = vadd.f32 %v3749, %v3789
    %v3791 = vpop.f32.mrb[0].mxu0
    %v3792 = vpop.f32.mrb[0].mxu0
    %3793 = vdwg.mxu0
    %3794 = vmatprep.subr.bf16.mxu0 %v3043
    %3795 = vmatpush1.bf16.msra.mxu0 %v3042
    %3796 = vmatprep.subr.bf16.mxu0 %v3051
    %3797 = vmatpush1.bf16.msra.mxu0 %v3050
    %3798 = vmatprep.subr.bf16.mxu0 %v3059
    %3799 = vmatpush1.bf16.msra.mxu0 %v3058
    %3800 = vmatprep.subr.bf16.mxu0 %v3067
    %3801 = vmatpush1.bf16.msra.mxu0 %v3066
    %3802 = vmatprep.subr.bf16.mxu0 %v3075
    %3803 = vmatpush1.bf16.msra.mxu0 %v3074
    %3804 = vmatprep.subr.bf16.mxu0 %v3083
    %3805 = vmatpush1.bf16.msra.mxu0 %v3082
    %3806 = vmatprep.subr.bf16.mxu0 %v3091
    %3807 = vmatpush1.bf16.msra.mxu0 %v3090
    %3808 = vmatprep.subr.bf16.mxu0 %v3099
    %3809 = vmatpush1.bf16.msra.mxu0 %v3098
    %3810 = vmatprep.subr.bf16.mxu0 %v3107
    %3811 = vmatpush1.bf16.msra.mxu0 %v3106
    %3812 = vmatprep.subr.bf16.mxu0 %v3115
    %3813 = vmatpush1.bf16.msra.mxu0 %v3114
    %3814 = vmatprep.subr.bf16.mxu0 %v3123
    %3815 = vmatpush1.bf16.msra.mxu0 %v3122
    %3816 = vmatprep.subr.bf16.mxu0 %v3131
    %3817 = vmatpush1.bf16.msra.mxu0 %v3130
    %3818 = vmatprep.subr.bf16.mxu0 %v3139
    %3819 = vmatpush1.bf16.msra.mxu0 %v3138
    %3820 = vmatprep.subr.bf16.mxu0 %v3147
    %3821 = vmatpush1.bf16.msra.mxu0 %v3146
    %3822 = vmatprep.subr.bf16.mxu0 %v3155
    %3823 = vmatpush1.bf16.msra.mxu0 %v3154
    %3824 = vmatprep.subr.bf16.mxu0 %v3163
    %3825 = vmatpush1.bf16.msra.mxu0 %v3162
    %3826 = vmatprep.mubr.bf16.mxu0 %v2261
    %3827 = vmatmul.mubr.bf16.gmra.mrb[0].mxu0 %v2260
    %v3828 = vpop.f32.mrb[0].mxu0
    %v3829 = vadd.f32 %v2248, %v3828
    %v3830 = vpop.f32.mrb[0].mxu0
    %v3831 = vadd.f32 %v2250, %v3830
    %v3832 = vpop.f32.mrb[0].mxu0
    %v3833 = vpop.f32.mrb[0].mxu0
    %3834 = vdwg.mxu0
    %3835 = vmatprep.subr.bf16.mxu0 %v3171
    %3836 = vmatpush1.bf16.msra.mxu0 %v3170
    %3837 = vmatprep.subr.bf16.mxu0 %v3179
    %3838 = vmatpush1.bf16.msra.mxu0 %v3178
    %3839 = vmatprep.subr.bf16.mxu0 %v3187
    %3840 = vmatpush1.bf16.msra.mxu0 %v3186
    %3841 = vmatprep.subr.bf16.mxu0 %v3195
    %3842 = vmatpush1.bf16.msra.mxu0 %v3194
    %3843 = vmatprep.subr.bf16.mxu0 %v3203
    %3844 = vmatpush1.bf16.msra.mxu0 %v3202
    %3845 = vmatprep.subr.bf16.mxu0 %v3211
    %3846 = vmatpush1.bf16.msra.mxu0 %v3210
    %3847 = vmatprep.subr.bf16.mxu0 %v3219
    %3848 = vmatpush1.bf16.msra.mxu0 %v3218
    %3849 = vmatprep.subr.bf16.mxu0 %v3227
    %3850 = vmatpush1.bf16.msra.mxu0 %v3226
    %3851 = vmatprep.subr.bf16.mxu0 %v3235
    %3852 = vmatpush1.bf16.msra.mxu0 %v3234
    %3853 = vmatprep.subr.bf16.mxu0 %v3243
    %3854 = vmatpush1.bf16.msra.mxu0 %v3242
    %3855 = vmatprep.subr.bf16.mxu0 %v3251
    %3856 = vmatpush1.bf16.msra.mxu0 %v3250
    %3857 = vmatprep.subr.bf16.mxu0 %v3259
    %3858 = vmatpush1.bf16.msra.mxu0 %v3258
    %3859 = vmatprep.subr.bf16.mxu0 %v3267
    %3860 = vmatpush1.bf16.msra.mxu0 %v3266
    %3861 = vmatprep.subr.bf16.mxu0 %v3275
    %3862 = vmatpush1.bf16.msra.mxu0 %v3274
    %3863 = vmatprep.subr.bf16.mxu0 %v3283
    %3864 = vmatpush1.bf16.msra.mxu0 %v3282
    %3865 = vmatprep.subr.bf16.mxu0 %v3291
    %3866 = vmatpush1.bf16.msra.mxu0 %v3290
    %3867 = vmatprep.mubr.bf16.mxu0 %v2263
    %3868 = vmatmul.mubr.bf16.gmra.mrb[0].mxu0 %v2262
    %v3869 = vpop.f32.mrb[0].mxu0
    %v3870 = vadd.f32 %v3829, %v3869
    %v3871 = vpop.f32.mrb[0].mxu0
    %v3872 = vadd.f32 %v3831, %v3871
    %v3873 = vpop.f32.mrb[0].mxu0
    %v3874 = vpop.f32.mrb[0].mxu0
    %3875 = vdwg.mxu0
    %v3876 = vld [vmem:[#allocation8] sm:$0xff]
    %v3878 = vlaneseq
    %v3879 = vshrl.u32 %v3878, 7
    %v3880 = vsub.s32 0, %v3879
    %v3881 = vrot.slane %v3876, %v3880
    %v3882 = vlaneseq
    %v3883 = vshrl.u32 %v3882, 7
    %v3884 = vsub.s32 1, %v3883
    %v3885 = vrot.slane %v3876, %v3884
    %v3886 = vlaneseq
    %v3887 = vshrl.u32 %v3886, 7
    %v3888 = vsub.s32 2, %v3887
    %v3889 = vrot.slane %v3876, %v3888
    %v3890 = vlaneseq
    %v3891 = vshrl.u32 %v3890, 7
    %v3892 = vsub.s32 3, %v3891
    %v3893 = vrot.slane %v3876, %v3892
    %v3894 = vlaneseq
    %v3895 = vshrl.u32 %v3894, 7
    %v3896 = vsub.s32 4, %v3895
    %v3897 = vrot.slane %v3876, %v3896
    %v3898 = vlaneseq
    %v3899 = vshrl.u32 %v3898, 7
    %v3900 = vsub.s32 5, %v3899
    %v3901 = vrot.slane %v3876, %v3900
    %v3902 = vlaneseq
    %v3903 = vshrl.u32 %v3902, 7
    %v3904 = vsub.s32 6, %v3903
    %v3905 = vrot.slane %v3876, %v3904
    %v3906 = vlaneseq
    %v3907 = vshrl.u32 %v3906, 7
    %v3908 = vsub.s32 7, %v3907
    %v3909 = vrot.slane %v3876, %v3908
    %v3918 = vadd.f32 %v3624, %v3881
    %v3919 = vadd.f32 %v3626, %v3885
    %v3920 = vadd.f32 %v3706, %v3889
    %v3921 = vadd.f32 %v3708, %v3893
    %v3922 = vadd.f32 %v3788, %v3897
    %v3923 = vadd.f32 %v3790, %v3901
    %v3924 = vadd.f32 %v3870, %v3905
    %v3925 = vadd.f32 %v3872, %v3909
    %v3926 = vmax.f32 %v3918, 0.0
    %v3927 = vmax.f32 %v3919, 0.0
    %v3928 = vmax.f32 %v3920, 0.0
    %v3929 = vmax.f32 %v3921, 0.0
    %v3930 = vmax.f32 %v3922, 0.0
    %v3931 = vmax.f32 %v3923, 0.0
    %v3932 = vmax.f32 %v3924, 0.0
    %v3933 = vmax.f32 %v3925, 0.0
    %v3934 = vpack.c.bf16 %v3926, %v3926
    %v3935 = vpack.c.bf16 %v3927, %v3927
    %v3936 = vpack.c.bf16 %v3928, %v3928
    %v3937 = vpack.c.bf16 %v3929, %v3929
    %v3938 = vpack.c.bf16 %v3930, %v3930
    %v3939 = vpack.c.bf16 %v3931, %v3931
    %v3940 = vpack.c.bf16 %v3932, %v3932
    %v3941 = vpack.c.bf16 %v3933, %v3933
    %v3942 = vld [vmem:[#allocation10] sm:$0xff]
    %v3943 = vld [vmem:[#allocation10 + $0x8] sm:$0xff]
    %v3944 = vld [vmem:[#allocation10 + $0x10] sm:$0xff]
    %v3945 = vld [vmem:[#allocation10 + $0x18] sm:$0xff]
    %v3946 = vld [vmem:[#allocation10 + $0x20] sm:$0xff]
    %v3947 = vld [vmem:[#allocation10 + $0x28] sm:$0xff]
    %v3948 = vld [vmem:[#allocation10 + $0x30] sm:$0xff]
    %v3949 = vld [vmem:[#allocation10 + $0x38] sm:$0xff]
    %v3950 = vld [vmem:[#allocation10 + $0x40] sm:$0xff]
    %v3951 = vld [vmem:[#allocation10 + $0x48] sm:$0xff]
    %v3952 = vld [vmem:[#allocation10 + $0x50] sm:$0xff]
    %v3953 = vld [vmem:[#allocation10 + $0x58] sm:$0xff]
    %v3954 = vld [vmem:[#allocation10 + $0x60] sm:$0xff]
    %v3955 = vld [vmem:[#allocation10 + $0x68] sm:$0xff]
    %v3956 = vld [vmem:[#allocation10 + $0x70] sm:$0xff]
    %v3957 = vld [vmem:[#allocation10 + $0x78] sm:$0xff]
    %v3958 = vld [vmem:[#allocation10 + $0x80] sm:$0xff]
    %v3959 = vld [vmem:[#allocation10 + $0x88] sm:$0xff]
    %v3960 = vld [vmem:[#allocation10 + $0x90] sm:$0xff]
    %v3961 = vld [vmem:[#allocation10 + $0x98] sm:$0xff]
    %v3962 = vld [vmem:[#allocation10 + $0xa0] sm:$0xff]
    %v3963 = vld [vmem:[#allocation10 + $0xa8] sm:$0xff]
    %v3964 = vld [vmem:[#allocation10 + $0xb0] sm:$0xff]
    %v3965 = vld [vmem:[#allocation10 + $0xb8] sm:$0xff]
    %v3966 = vld [vmem:[#allocation10 + $0xc0] sm:$0xff]
    %v3967 = vld [vmem:[#allocation10 + $0xc8] sm:$0xff]
    %v3968 = vld [vmem:[#allocation10 + $0xd0] sm:$0xff]
    %v3969 = vld [vmem:[#allocation10 + $0xd8] sm:$0xff]
    %v3970 = vld [vmem:[#allocation10 + $0xe0] sm:$0xff]
    %v3971 = vld [vmem:[#allocation10 + $0xe8] sm:$0xff]
    %v3972 = vld [vmem:[#allocation10 + $0xf0] sm:$0xff]
    %v3973 = vld [vmem:[#allocation10 + $0xf8] sm:$0xff]
    %v3974 = vld [vmem:[#allocation10 + $0x100] sm:$0xff]
    %v3975 = vld [vmem:[#allocation10 + $0x108] sm:$0xff]
    %v3976 = vld [vmem:[#allocation10 + $0x110] sm:$0xff]
    %v3977 = vld [vmem:[#allocation10 + $0x118] sm:$0xff]
    %v3978 = vld [vmem:[#allocation10 + $0x120] sm:$0xff]
    %v3979 = vld [vmem:[#allocation10 + $0x128] sm:$0xff]
    %v3980 = vld [vmem:[#allocation10 + $0x130] sm:$0xff]
    %v3981 = vld [vmem:[#allocation10 + $0x138] sm:$0xff]
    %v3982 = vld [vmem:[#allocation10 + $0x140] sm:$0xff]
    %v3983 = vld [vmem:[#allocation10 + $0x148] sm:$0xff]
    %v3984 = vld [vmem:[#allocation10 + $0x150] sm:$0xff]
    %v3985 = vld [vmem:[#allocation10 + $0x158] sm:$0xff]
    %v3986 = vld [vmem:[#allocation10 + $0x160] sm:$0xff]
    %v3987 = vld [vmem:[#allocation10 + $0x168] sm:$0xff]
    %v3988 = vld [vmem:[#allocation10 + $0x170] sm:$0xff]
    %v3989 = vld [vmem:[#allocation10 + $0x178] sm:$0xff]
    %v3990 = vld [vmem:[#allocation10 + $0x180] sm:$0xff]
    %v3991 = vld [vmem:[#allocation10 + $0x188] sm:$0xff]
    %v3992 = vld [vmem:[#allocation10 + $0x190] sm:$0xff]
    %v3993 = vld [vmem:[#allocation10 + $0x198] sm:$0xff]
    %v3994 = vld [vmem:[#allocation10 + $0x1a0] sm:$0xff]
    %v3995 = vld [vmem:[#allocation10 + $0x1a8] sm:$0xff]
    %v3996 = vld [vmem:[#allocation10 + $0x1b0] sm:$0xff]
    %v3997 = vld [vmem:[#allocation10 + $0x1b8] sm:$0xff]
    %v3998 = vld [vmem:[#allocation10 + $0x1c0] sm:$0xff]
    %v3999 = vld [vmem:[#allocation10 + $0x1c8] sm:$0xff]
    %v4000 = vld [vmem:[#allocation10 + $0x1d0] sm:$0xff]
    %v4001 = vld [vmem:[#allocation10 + $0x1d8] sm:$0xff]
    %v4002 = vld [vmem:[#allocation10 + $0x1e0] sm:$0xff]
    %v4003 = vld [vmem:[#allocation10 + $0x1e8] sm:$0xff]
    %v4004 = vld [vmem:[#allocation10 + $0x1f0] sm:$0xff]
    %v4005 = vld [vmem:[#allocation10 + $0x1f8] sm:$0xff]
    %v4006 = vld [vmem:[#allocation10 + $0x200] sm:$0xff]
    %v4007 = vld [vmem:[#allocation10 + $0x208] sm:$0xff]
    %v4008 = vld [vmem:[#allocation10 + $0x210] sm:$0xff]
    %v4009 = vld [vmem:[#allocation10 + $0x218] sm:$0xff]
    %v4010 = vld [vmem:[#allocation10 + $0x220] sm:$0xff]
    %v4011 = vld [vmem:[#allocation10 + $0x228] sm:$0xff]
    %v4012 = vld [vmem:[#allocation10 + $0x230] sm:$0xff]
    %v4013 = vld [vmem:[#allocation10 + $0x238] sm:$0xff]
    %v4014 = vld [vmem:[#allocation10 + $0x240] sm:$0xff]
    %v4015 = vld [vmem:[#allocation10 + $0x248] sm:$0xff]
    %v4016 = vld [vmem:[#allocation10 + $0x250] sm:$0xff]
    %v4017 = vld [vmem:[#allocation10 + $0x258] sm:$0xff]
    %v4018 = vld [vmem:[#allocation10 + $0x260] sm:$0xff]
    %v4019 = vld [vmem:[#allocation10 + $0x268] sm:$0xff]
    %v4020 = vld [vmem:[#allocation10 + $0x270] sm:$0xff]
    %v4021 = vld [vmem:[#allocation10 + $0x278] sm:$0xff]
    %v4022 = vld [vmem:[#allocation10 + $0x280] sm:$0xff]
    %v4023 = vld [vmem:[#allocation10 + $0x288] sm:$0xff]
    %v4024 = vld [vmem:[#allocation10 + $0x290] sm:$0xff]
    %v4025 = vld [vmem:[#allocation10 + $0x298] sm:$0xff]
    %v4026 = vld [vmem:[#allocation10 + $0x2a0] sm:$0xff]
    %v4027 = vld [vmem:[#allocation10 + $0x2a8] sm:$0xff]
    %v4028 = vld [vmem:[#allocation10 + $0x2b0] sm:$0xff]
    %v4029 = vld [vmem:[#allocation10 + $0x2b8] sm:$0xff]
    %v4030 = vld [vmem:[#allocation10 + $0x2c0] sm:$0xff]
    %v4031 = vld [vmem:[#allocation10 + $0x2c8] sm:$0xff]
    %v4032 = vld [vmem:[#allocation10 + $0x2d0] sm:$0xff]
    %v4033 = vld [vmem:[#allocation10 + $0x2d8] sm:$0xff]
    %v4034 = vld [vmem:[#allocation10 + $0x2e0] sm:$0xff]
    %v4035 = vld [vmem:[#allocation10 + $0x2e8] sm:$0xff]
    %v4036 = vld [vmem:[#allocation10 + $0x2f0] sm:$0xff]
    %v4037 = vld [vmem:[#allocation10 + $0x2f8] sm:$0xff]
    %v4038 = vld [vmem:[#allocation10 + $0x300] sm:$0xff]
    %v4039 = vld [vmem:[#allocation10 + $0x308] sm:$0xff]
    %v4040 = vld [vmem:[#allocation10 + $0x310] sm:$0xff]
    %v4041 = vld [vmem:[#allocation10 + $0x318] sm:$0xff]
    %v4042 = vld [vmem:[#allocation10 + $0x320] sm:$0xff]
    %v4043 = vld [vmem:[#allocation10 + $0x328] sm:$0xff]
    %v4044 = vld [vmem:[#allocation10 + $0x330] sm:$0xff]
    %v4045 = vld [vmem:[#allocation10 + $0x338] sm:$0xff]
    %v4046 = vld [vmem:[#allocation10 + $0x340] sm:$0xff]
    %v4047 = vld [vmem:[#allocation10 + $0x348] sm:$0xff]
    %v4048 = vld [vmem:[#allocation10 + $0x350] sm:$0xff]
    %v4049 = vld [vmem:[#allocation10 + $0x358] sm:$0xff]
    %v4050 = vld [vmem:[#allocation10 + $0x360] sm:$0xff]
    %v4051 = vld [vmem:[#allocation10 + $0x368] sm:$0xff]
    %v4052 = vld [vmem:[#allocation10 + $0x370] sm:$0xff]
    %v4053 = vld [vmem:[#allocation10 + $0x378] sm:$0xff]
    %v4054 = vld [vmem:[#allocation10 + $0x380] sm:$0xff]
    %v4055 = vld [vmem:[#allocation10 + $0x388] sm:$0xff]
    %v4056 = vld [vmem:[#allocation10 + $0x390] sm:$0xff]
    %v4057 = vld [vmem:[#allocation10 + $0x398] sm:$0xff]
    %v4058 = vld [vmem:[#allocation10 + $0x3a0] sm:$0xff]
    %v4059 = vld [vmem:[#allocation10 + $0x3a8] sm:$0xff]
    %v4060 = vld [vmem:[#allocation10 + $0x3b0] sm:$0xff]
    %v4061 = vld [vmem:[#allocation10 + $0x3b8] sm:$0xff]
    %v4062 = vld [vmem:[#allocation10 + $0x3c0] sm:$0xff]
    %v4063 = vld [vmem:[#allocation10 + $0x3c8] sm:$0xff]
    %v4064 = vld [vmem:[#allocation10 + $0x3d0] sm:$0xff]
    %v4065 = vld [vmem:[#allocation10 + $0x3d8] sm:$0xff]
    %v4066 = vld [vmem:[#allocation10 + $0x3e0] sm:$0xff]
    %v4067 = vld [vmem:[#allocation10 + $0x3e8] sm:$0xff]
    %v4068 = vld [vmem:[#allocation10 + $0x3f0] sm:$0xff]
    %v4069 = vld [vmem:[#allocation10 + $0x3f8] sm:$0xff]
    %v4070 = vld [vmem:[#allocation10 + $0x400] sm:$0xff]
    %v4071 = vld [vmem:[#allocation10 + $0x408] sm:$0xff]
    %v4072 = vld [vmem:[#allocation10 + $0x410] sm:$0xff]
    %v4073 = vld [vmem:[#allocation10 + $0x418] sm:$0xff]
    %v4074 = vld [vmem:[#allocation10 + $0x420] sm:$0xff]
    %v4075 = vld [vmem:[#allocation10 + $0x428] sm:$0xff]
    %v4076 = vld [vmem:[#allocation10 + $0x430] sm:$0xff]
    %v4077 = vld [vmem:[#allocation10 + $0x438] sm:$0xff]
    %v4078 = vld [vmem:[#allocation10 + $0x440] sm:$0xff]
    %v4079 = vld [vmem:[#allocation10 + $0x448] sm:$0xff]
    %v4080 = vld [vmem:[#allocation10 + $0x450] sm:$0xff]
    %v4081 = vld [vmem:[#allocation10 + $0x458] sm:$0xff]
    %v4082 = vld [vmem:[#allocation10 + $0x460] sm:$0xff]
    %v4083 = vld [vmem:[#allocation10 + $0x468] sm:$0xff]
    %v4084 = vld [vmem:[#allocation10 + $0x470] sm:$0xff]
    %v4085 = vld [vmem:[#allocation10 + $0x478] sm:$0xff]
    %v4086 = vld [vmem:[#allocation10 + $0x480] sm:$0xff]
    %v4087 = vld [vmem:[#allocation10 + $0x488] sm:$0xff]
    %v4088 = vld [vmem:[#allocation10 + $0x490] sm:$0xff]
    %v4089 = vld [vmem:[#allocation10 + $0x498] sm:$0xff]
    %v4090 = vld [vmem:[#allocation10 + $0x4a0] sm:$0xff]
    %v4091 = vld [vmem:[#allocation10 + $0x4a8] sm:$0xff]
    %v4092 = vld [vmem:[#allocation10 + $0x4b0] sm:$0xff]
    %v4093 = vld [vmem:[#allocation10 + $0x4b8] sm:$0xff]
    %v4094 = vld [vmem:[#allocation10 + $0x4c0] sm:$0xff]
    %v4095 = vld [vmem:[#allocation10 + $0x4c8] sm:$0xff]
    %v4096 = vld [vmem:[#allocation10 + $0x4d0] sm:$0xff]
    %v4097 = vld [vmem:[#allocation10 + $0x4d8] sm:$0xff]
    %v4098 = vld [vmem:[#allocation10 + $0x4e0] sm:$0xff]
    %v4099 = vld [vmem:[#allocation10 + $0x4e8] sm:$0xff]
    %v4100 = vld [vmem:[#allocation10 + $0x4f0] sm:$0xff]
    %v4101 = vld [vmem:[#allocation10 + $0x4f8] sm:$0xff]
    %v4102 = vld [vmem:[#allocation10 + $0x500] sm:$0xff]
    %v4103 = vld [vmem:[#allocation10 + $0x508] sm:$0xff]
    %v4104 = vld [vmem:[#allocation10 + $0x510] sm:$0xff]
    %v4105 = vld [vmem:[#allocation10 + $0x518] sm:$0xff]
    %v4106 = vld [vmem:[#allocation10 + $0x520] sm:$0xff]
    %v4107 = vld [vmem:[#allocation10 + $0x528] sm:$0xff]
    %v4108 = vld [vmem:[#allocation10 + $0x530] sm:$0xff]
    %v4109 = vld [vmem:[#allocation10 + $0x538] sm:$0xff]
    %v4110 = vld [vmem:[#allocation10 + $0x540] sm:$0xff]
    %v4111 = vld [vmem:[#allocation10 + $0x548] sm:$0xff]
    %v4112 = vld [vmem:[#allocation10 + $0x550] sm:$0xff]
    %v4113 = vld [vmem:[#allocation10 + $0x558] sm:$0xff]
    %v4114 = vld [vmem:[#allocation10 + $0x560] sm:$0xff]
    %v4115 = vld [vmem:[#allocation10 + $0x568] sm:$0xff]
    %v4116 = vld [vmem:[#allocation10 + $0x570] sm:$0xff]
    %v4117 = vld [vmem:[#allocation10 + $0x578] sm:$0xff]
    %v4118 = vld [vmem:[#allocation10 + $0x580] sm:$0xff]
    %v4119 = vld [vmem:[#allocation10 + $0x588] sm:$0xff]
    %v4120 = vld [vmem:[#allocation10 + $0x590] sm:$0xff]
    %v4121 = vld [vmem:[#allocation10 + $0x598] sm:$0xff]
    %v4122 = vld [vmem:[#allocation10 + $0x5a0] sm:$0xff]
    %v4123 = vld [vmem:[#allocation10 + $0x5a8] sm:$0xff]
    %v4124 = vld [vmem:[#allocation10 + $0x5b0] sm:$0xff]
    %v4125 = vld [vmem:[#allocation10 + $0x5b8] sm:$0xff]
    %v4126 = vld [vmem:[#allocation10 + $0x5c0] sm:$0xff]
    %v4127 = vld [vmem:[#allocation10 + $0x5c8] sm:$0xff]
    %v4128 = vld [vmem:[#allocation10 + $0x5d0] sm:$0xff]
    %v4129 = vld [vmem:[#allocation10 + $0x5d8] sm:$0xff]
    %v4130 = vld [vmem:[#allocation10 + $0x5e0] sm:$0xff]
    %v4131 = vld [vmem:[#allocation10 + $0x5e8] sm:$0xff]
    %v4132 = vld [vmem:[#allocation10 + $0x5f0] sm:$0xff]
    %v4133 = vld [vmem:[#allocation10 + $0x5f8] sm:$0xff]
    %v4134 = vld [vmem:[#allocation10 + $0x600] sm:$0xff]
    %v4135 = vld [vmem:[#allocation10 + $0x608] sm:$0xff]
    %v4136 = vld [vmem:[#allocation10 + $0x610] sm:$0xff]
    %v4137 = vld [vmem:[#allocation10 + $0x618] sm:$0xff]
    %v4138 = vld [vmem:[#allocation10 + $0x620] sm:$0xff]
    %v4139 = vld [vmem:[#allocation10 + $0x628] sm:$0xff]
    %v4140 = vld [vmem:[#allocation10 + $0x630] sm:$0xff]
    %v4141 = vld [vmem:[#allocation10 + $0x638] sm:$0xff]
    %v4142 = vld [vmem:[#allocation10 + $0x640] sm:$0xff]
    %v4143 = vld [vmem:[#allocation10 + $0x648] sm:$0xff]
    %v4144 = vld [vmem:[#allocation10 + $0x650] sm:$0xff]
    %v4145 = vld [vmem:[#allocation10 + $0x658] sm:$0xff]
    %v4146 = vld [vmem:[#allocation10 + $0x660] sm:$0xff]
    %v4147 = vld [vmem:[#allocation10 + $0x668] sm:$0xff]
    %v4148 = vld [vmem:[#allocation10 + $0x670] sm:$0xff]
    %v4149 = vld [vmem:[#allocation10 + $0x678] sm:$0xff]
    %v4150 = vld [vmem:[#allocation10 + $0x680] sm:$0xff]
    %v4151 = vld [vmem:[#allocation10 + $0x688] sm:$0xff]
    %v4152 = vld [vmem:[#allocation10 + $0x690] sm:$0xff]
    %v4153 = vld [vmem:[#allocation10 + $0x698] sm:$0xff]
    %v4154 = vld [vmem:[#allocation10 + $0x6a0] sm:$0xff]
    %v4155 = vld [vmem:[#allocation10 + $0x6a8] sm:$0xff]
    %v4156 = vld [vmem:[#allocation10 + $0x6b0] sm:$0xff]
    %v4157 = vld [vmem:[#allocation10 + $0x6b8] sm:$0xff]
    %v4158 = vld [vmem:[#allocation10 + $0x6c0] sm:$0xff]
    %v4159 = vld [vmem:[#allocation10 + $0x6c8] sm:$0xff]
    %v4160 = vld [vmem:[#allocation10 + $0x6d0] sm:$0xff]
    %v4161 = vld [vmem:[#allocation10 + $0x6d8] sm:$0xff]
    %v4162 = vld [vmem:[#allocation10 + $0x6e0] sm:$0xff]
    %v4163 = vld [vmem:[#allocation10 + $0x6e8] sm:$0xff]
    %v4164 = vld [vmem:[#allocation10 + $0x6f0] sm:$0xff]
    %v4165 = vld [vmem:[#allocation10 + $0x6f8] sm:$0xff]
    %v4166 = vld [vmem:[#allocation10 + $0x700] sm:$0xff]
    %v4167 = vld [vmem:[#allocation10 + $0x708] sm:$0xff]
    %v4168 = vld [vmem:[#allocation10 + $0x710] sm:$0xff]
    %v4169 = vld [vmem:[#allocation10 + $0x718] sm:$0xff]
    %v4170 = vld [vmem:[#allocation10 + $0x720] sm:$0xff]
    %v4171 = vld [vmem:[#allocation10 + $0x728] sm:$0xff]
    %v4172 = vld [vmem:[#allocation10 + $0x730] sm:$0xff]
    %v4173 = vld [vmem:[#allocation10 + $0x738] sm:$0xff]
    %v4174 = vld [vmem:[#allocation10 + $0x740] sm:$0xff]
    %v4175 = vld [vmem:[#allocation10 + $0x748] sm:$0xff]
    %v4176 = vld [vmem:[#allocation10 + $0x750] sm:$0xff]
    %v4177 = vld [vmem:[#allocation10 + $0x758] sm:$0xff]
    %v4178 = vld [vmem:[#allocation10 + $0x760] sm:$0xff]
    %v4179 = vld [vmem:[#allocation10 + $0x768] sm:$0xff]
    %v4180 = vld [vmem:[#allocation10 + $0x770] sm:$0xff]
    %v4181 = vld [vmem:[#allocation10 + $0x778] sm:$0xff]
    %v4182 = vld [vmem:[#allocation10 + $0x780] sm:$0xff]
    %v4183 = vld [vmem:[#allocation10 + $0x788] sm:$0xff]
    %v4184 = vld [vmem:[#allocation10 + $0x790] sm:$0xff]
    %v4185 = vld [vmem:[#allocation10 + $0x798] sm:$0xff]
    %v4186 = vld [vmem:[#allocation10 + $0x7a0] sm:$0xff]
    %v4187 = vld [vmem:[#allocation10 + $0x7a8] sm:$0xff]
    %v4188 = vld [vmem:[#allocation10 + $0x7b0] sm:$0xff]
    %v4189 = vld [vmem:[#allocation10 + $0x7b8] sm:$0xff]
    %v4190 = vld [vmem:[#allocation10 + $0x7c0] sm:$0xff]
    %v4191 = vld [vmem:[#allocation10 + $0x7c8] sm:$0xff]
    %v4192 = vld [vmem:[#allocation10 + $0x7d0] sm:$0xff]
    %v4193 = vld [vmem:[#allocation10 + $0x7d8] sm:$0xff]
    %v4194 = vld [vmem:[#allocation10 + $0x7e0] sm:$0xff]
    %v4195 = vld [vmem:[#allocation10 + $0x7e8] sm:$0xff]
    %v4196 = vld [vmem:[#allocation10 + $0x7f0] sm:$0xff]
    %v4197 = vld [vmem:[#allocation10 + $0x7f8] sm:$0xff]
    %v4198 = vld [vmem:[#allocation10 + $0x800] sm:$0xff]
    %v4199 = vld [vmem:[#allocation10 + $0x808] sm:$0xff]
    %v4200 = vld [vmem:[#allocation10 + $0x810] sm:$0xff]
    %v4201 = vld [vmem:[#allocation10 + $0x818] sm:$0xff]
    %v4202 = vld [vmem:[#allocation10 + $0x820] sm:$0xff]
    %v4203 = vld [vmem:[#allocation10 + $0x828] sm:$0xff]
    %v4204 = vld [vmem:[#allocation10 + $0x830] sm:$0xff]
    %v4205 = vld [vmem:[#allocation10 + $0x838] sm:$0xff]
    %v4206 = vld [vmem:[#allocation10 + $0x840] sm:$0xff]
    %v4207 = vld [vmem:[#allocation10 + $0x848] sm:$0xff]
    %v4208 = vld [vmem:[#allocation10 + $0x850] sm:$0xff]
    %v4209 = vld [vmem:[#allocation10 + $0x858] sm:$0xff]
    %v4210 = vld [vmem:[#allocation10 + $0x860] sm:$0xff]
    %v4211 = vld [vmem:[#allocation10 + $0x868] sm:$0xff]
    %v4212 = vld [vmem:[#allocation10 + $0x870] sm:$0xff]
    %v4213 = vld [vmem:[#allocation10 + $0x878] sm:$0xff]
    %v4214 = vld [vmem:[#allocation10 + $0x880] sm:$0xff]
    %v4215 = vld [vmem:[#allocation10 + $0x888] sm:$0xff]
    %v4216 = vld [vmem:[#allocation10 + $0x890] sm:$0xff]
    %v4217 = vld [vmem:[#allocation10 + $0x898] sm:$0xff]
    %v4218 = vld [vmem:[#allocation10 + $0x8a0] sm:$0xff]
    %v4219 = vld [vmem:[#allocation10 + $0x8a8] sm:$0xff]
    %v4220 = vld [vmem:[#allocation10 + $0x8b0] sm:$0xff]
    %v4221 = vld [vmem:[#allocation10 + $0x8b8] sm:$0xff]
    %v4222 = vld [vmem:[#allocation10 + $0x8c0] sm:$0xff]
    %v4223 = vld [vmem:[#allocation10 + $0x8c8] sm:$0xff]
    %v4224 = vld [vmem:[#allocation10 + $0x8d0] sm:$0xff]
    %v4225 = vld [vmem:[#allocation10 + $0x8d8] sm:$0xff]
    %v4226 = vld [vmem:[#allocation10 + $0x8e0] sm:$0xff]
    %v4227 = vld [vmem:[#allocation10 + $0x8e8] sm:$0xff]
    %v4228 = vld [vmem:[#allocation10 + $0x8f0] sm:$0xff]
    %v4229 = vld [vmem:[#allocation10 + $0x8f8] sm:$0xff]
    %v4230 = vld [vmem:[#allocation10 + $0x900] sm:$0xff]
    %v4231 = vld [vmem:[#allocation10 + $0x908] sm:$0xff]
    %v4232 = vld [vmem:[#allocation10 + $0x910] sm:$0xff]
    %v4233 = vld [vmem:[#allocation10 + $0x918] sm:$0xff]
    %v4234 = vld [vmem:[#allocation10 + $0x920] sm:$0xff]
    %v4235 = vld [vmem:[#allocation10 + $0x928] sm:$0xff]
    %v4236 = vld [vmem:[#allocation10 + $0x930] sm:$0xff]
    %v4237 = vld [vmem:[#allocation10 + $0x938] sm:$0xff]
    %v4238 = vld [vmem:[#allocation10 + $0x940] sm:$0xff]
    %v4239 = vld [vmem:[#allocation10 + $0x948] sm:$0xff]
    %v4240 = vld [vmem:[#allocation10 + $0x950] sm:$0xff]
    %v4241 = vld [vmem:[#allocation10 + $0x958] sm:$0xff]
    %v4242 = vld [vmem:[#allocation10 + $0x960] sm:$0xff]
    %v4243 = vld [vmem:[#allocation10 + $0x968] sm:$0xff]
    %v4244 = vld [vmem:[#allocation10 + $0x970] sm:$0xff]
    %v4245 = vld [vmem:[#allocation10 + $0x978] sm:$0xff]
    %v4246 = vld [vmem:[#allocation10 + $0x980] sm:$0xff]
    %v4247 = vld [vmem:[#allocation10 + $0x988] sm:$0xff]
    %v4248 = vld [vmem:[#allocation10 + $0x990] sm:$0xff]
    %v4249 = vld [vmem:[#allocation10 + $0x998] sm:$0xff]
    %v4250 = vld [vmem:[#allocation10 + $0x9a0] sm:$0xff]
    %v4251 = vld [vmem:[#allocation10 + $0x9a8] sm:$0xff]
    %v4252 = vld [vmem:[#allocation10 + $0x9b0] sm:$0xff]
    %v4253 = vld [vmem:[#allocation10 + $0x9b8] sm:$0xff]
    %v4254 = vld [vmem:[#allocation10 + $0x9c0] sm:$0xff]
    %v4255 = vld [vmem:[#allocation10 + $0x9c8] sm:$0xff]
    %v4256 = vld [vmem:[#allocation10 + $0x9d0] sm:$0xff]
    %v4257 = vld [vmem:[#allocation10 + $0x9d8] sm:$0xff]
    %v4258 = vld [vmem:[#allocation10 + $0x9e0] sm:$0xff]
    %v4259 = vld [vmem:[#allocation10 + $0x9e8] sm:$0xff]
    %v4260 = vld [vmem:[#allocation10 + $0x9f0] sm:$0xff]
    %v4261 = vld [vmem:[#allocation10 + $0x9f8] sm:$0xff]
    %v4262 = vld [vmem:[#allocation10 + $0xa00] sm:$0xff]
    %v4263 = vld [vmem:[#allocation10 + $0xa08] sm:$0xff]
    %v4264 = vld [vmem:[#allocation10 + $0xa10] sm:$0xff]
    %v4265 = vld [vmem:[#allocation10 + $0xa18] sm:$0xff]
    %v4266 = vld [vmem:[#allocation10 + $0xa20] sm:$0xff]
    %v4267 = vld [vmem:[#allocation10 + $0xa28] sm:$0xff]
    %v4268 = vld [vmem:[#allocation10 + $0xa30] sm:$0xff]
    %v4269 = vld [vmem:[#allocation10 + $0xa38] sm:$0xff]
    %v4270 = vld [vmem:[#allocation10 + $0xa40] sm:$0xff]
    %v4271 = vld [vmem:[#allocation10 + $0xa48] sm:$0xff]
    %v4272 = vld [vmem:[#allocation10 + $0xa50] sm:$0xff]
    %v4273 = vld [vmem:[#allocation10 + $0xa58] sm:$0xff]
    %v4274 = vld [vmem:[#allocation10 + $0xa60] sm:$0xff]
    %v4275 = vld [vmem:[#allocation10 + $0xa68] sm:$0xff]
    %v4276 = vld [vmem:[#allocation10 + $0xa70] sm:$0xff]
    %v4277 = vld [vmem:[#allocation10 + $0xa78] sm:$0xff]
    %v4278 = vld [vmem:[#allocation10 + $0xa80] sm:$0xff]
    %v4279 = vld [vmem:[#allocation10 + $0xa88] sm:$0xff]
    %v4280 = vld [vmem:[#allocation10 + $0xa90] sm:$0xff]
    %v4281 = vld [vmem:[#allocation10 + $0xa98] sm:$0xff]
    %v4282 = vld [vmem:[#allocation10 + $0xaa0] sm:$0xff]
    %v4283 = vld [vmem:[#allocation10 + $0xaa8] sm:$0xff]
    %v4284 = vld [vmem:[#allocation10 + $0xab0] sm:$0xff]
    %v4285 = vld [vmem:[#allocation10 + $0xab8] sm:$0xff]
    %v4286 = vld [vmem:[#allocation10 + $0xac0] sm:$0xff]
    %v4287 = vld [vmem:[#allocation10 + $0xac8] sm:$0xff]
    %v4288 = vld [vmem:[#allocation10 + $0xad0] sm:$0xff]
    %v4289 = vld [vmem:[#allocation10 + $0xad8] sm:$0xff]
    %v4290 = vld [vmem:[#allocation10 + $0xae0] sm:$0xff]
    %v4291 = vld [vmem:[#allocation10 + $0xae8] sm:$0xff]
    %v4292 = vld [vmem:[#allocation10 + $0xaf0] sm:$0xff]
    %v4293 = vld [vmem:[#allocation10 + $0xaf8] sm:$0xff]
    %v4294 = vld [vmem:[#allocation10 + $0xb00] sm:$0xff]
    %v4295 = vld [vmem:[#allocation10 + $0xb08] sm:$0xff]
    %v4296 = vld [vmem:[#allocation10 + $0xb10] sm:$0xff]
    %v4297 = vld [vmem:[#allocation10 + $0xb18] sm:$0xff]
    %v4298 = vld [vmem:[#allocation10 + $0xb20] sm:$0xff]
    %v4299 = vld [vmem:[#allocation10 + $0xb28] sm:$0xff]
    %v4300 = vld [vmem:[#allocation10 + $0xb30] sm:$0xff]
    %v4301 = vld [vmem:[#allocation10 + $0xb38] sm:$0xff]
    %v4302 = vld [vmem:[#allocation10 + $0xb40] sm:$0xff]
    %v4303 = vld [vmem:[#allocation10 + $0xb48] sm:$0xff]
    %v4304 = vld [vmem:[#allocation10 + $0xb50] sm:$0xff]
    %v4305 = vld [vmem:[#allocation10 + $0xb58] sm:$0xff]
    %v4306 = vld [vmem:[#allocation10 + $0xb60] sm:$0xff]
    %v4307 = vld [vmem:[#allocation10 + $0xb68] sm:$0xff]
    %v4308 = vld [vmem:[#allocation10 + $0xb70] sm:$0xff]
    %v4309 = vld [vmem:[#allocation10 + $0xb78] sm:$0xff]
    %v4310 = vld [vmem:[#allocation10 + $0xb80] sm:$0xff]
    %v4311 = vld [vmem:[#allocation10 + $0xb88] sm:$0xff]
    %v4312 = vld [vmem:[#allocation10 + $0xb90] sm:$0xff]
    %v4313 = vld [vmem:[#allocation10 + $0xb98] sm:$0xff]
    %v4314 = vld [vmem:[#allocation10 + $0xba0] sm:$0xff]
    %v4315 = vld [vmem:[#allocation10 + $0xba8] sm:$0xff]
    %v4316 = vld [vmem:[#allocation10 + $0xbb0] sm:$0xff]
    %v4317 = vld [vmem:[#allocation10 + $0xbb8] sm:$0xff]
    %v4318 = vld [vmem:[#allocation10 + $0xbc0] sm:$0xff]
    %v4319 = vld [vmem:[#allocation10 + $0xbc8] sm:$0xff]
    %v4320 = vld [vmem:[#allocation10 + $0xbd0] sm:$0xff]
    %v4321 = vld [vmem:[#allocation10 + $0xbd8] sm:$0xff]
    %v4322 = vld [vmem:[#allocation10 + $0xbe0] sm:$0xff]
    %v4323 = vld [vmem:[#allocation10 + $0xbe8] sm:$0xff]
    %v4324 = vld [vmem:[#allocation10 + $0xbf0] sm:$0xff]
    %v4325 = vld [vmem:[#allocation10 + $0xbf8] sm:$0xff]
    %v4326 = vld [vmem:[#allocation10 + $0xc00] sm:$0xff]
    %v4327 = vld [vmem:[#allocation10 + $0xc08] sm:$0xff]
    %v4328 = vld [vmem:[#allocation10 + $0xc10] sm:$0xff]
    %v4329 = vld [vmem:[#allocation10 + $0xc18] sm:$0xff]
    %v4330 = vld [vmem:[#allocation10 + $0xc20] sm:$0xff]
    %v4331 = vld [vmem:[#allocation10 + $0xc28] sm:$0xff]
    %v4332 = vld [vmem:[#allocation10 + $0xc30] sm:$0xff]
    %v4333 = vld [vmem:[#allocation10 + $0xc38] sm:$0xff]
    %v4334 = vld [vmem:[#allocation10 + $0xc40] sm:$0xff]
    %v4335 = vld [vmem:[#allocation10 + $0xc48] sm:$0xff]
    %v4336 = vld [vmem:[#allocation10 + $0xc50] sm:$0xff]
    %v4337 = vld [vmem:[#allocation10 + $0xc58] sm:$0xff]
    %v4338 = vld [vmem:[#allocation10 + $0xc60] sm:$0xff]
    %v4339 = vld [vmem:[#allocation10 + $0xc68] sm:$0xff]
    %v4340 = vld [vmem:[#allocation10 + $0xc70] sm:$0xff]
    %v4341 = vld [vmem:[#allocation10 + $0xc78] sm:$0xff]
    %v4342 = vld [vmem:[#allocation10 + $0xc80] sm:$0xff]
    %v4343 = vld [vmem:[#allocation10 + $0xc88] sm:$0xff]
    %v4344 = vld [vmem:[#allocation10 + $0xc90] sm:$0xff]
    %v4345 = vld [vmem:[#allocation10 + $0xc98] sm:$0xff]
    %v4346 = vld [vmem:[#allocation10 + $0xca0] sm:$0xff]
    %v4347 = vld [vmem:[#allocation10 + $0xca8] sm:$0xff]
    %v4348 = vld [vmem:[#allocation10 + $0xcb0] sm:$0xff]
    %v4349 = vld [vmem:[#allocation10 + $0xcb8] sm:$0xff]
    %v4350 = vld [vmem:[#allocation10 + $0xcc0] sm:$0xff]
    %v4351 = vld [vmem:[#allocation10 + $0xcc8] sm:$0xff]
    %v4352 = vld [vmem:[#allocation10 + $0xcd0] sm:$0xff]
    %v4353 = vld [vmem:[#allocation10 + $0xcd8] sm:$0xff]
    %v4354 = vld [vmem:[#allocation10 + $0xce0] sm:$0xff]
    %v4355 = vld [vmem:[#allocation10 + $0xce8] sm:$0xff]
    %v4356 = vld [vmem:[#allocation10 + $0xcf0] sm:$0xff]
    %v4357 = vld [vmem:[#allocation10 + $0xcf8] sm:$0xff]
    %v4358 = vld [vmem:[#allocation10 + $0xd00] sm:$0xff]
    %v4359 = vld [vmem:[#allocation10 + $0xd08] sm:$0xff]
    %v4360 = vld [vmem:[#allocation10 + $0xd10] sm:$0xff]
    %v4361 = vld [vmem:[#allocation10 + $0xd18] sm:$0xff]
    %v4362 = vld [vmem:[#allocation10 + $0xd20] sm:$0xff]
    %v4363 = vld [vmem:[#allocation10 + $0xd28] sm:$0xff]
    %v4364 = vld [vmem:[#allocation10 + $0xd30] sm:$0xff]
    %v4365 = vld [vmem:[#allocation10 + $0xd38] sm:$0xff]
    %v4366 = vld [vmem:[#allocation10 + $0xd40] sm:$0xff]
    %v4367 = vld [vmem:[#allocation10 + $0xd48] sm:$0xff]
    %v4368 = vld [vmem:[#allocation10 + $0xd50] sm:$0xff]
    %v4369 = vld [vmem:[#allocation10 + $0xd58] sm:$0xff]
    %v4370 = vld [vmem:[#allocation10 + $0xd60] sm:$0xff]
    %v4371 = vld [vmem:[#allocation10 + $0xd68] sm:$0xff]
    %v4372 = vld [vmem:[#allocation10 + $0xd70] sm:$0xff]
    %v4373 = vld [vmem:[#allocation10 + $0xd78] sm:$0xff]
    %v4374 = vld [vmem:[#allocation10 + $0xd80] sm:$0xff]
    %v4375 = vld [vmem:[#allocation10 + $0xd88] sm:$0xff]
    %v4376 = vld [vmem:[#allocation10 + $0xd90] sm:$0xff]
    %v4377 = vld [vmem:[#allocation10 + $0xd98] sm:$0xff]
    %v4378 = vld [vmem:[#allocation10 + $0xda0] sm:$0xff]
    %v4379 = vld [vmem:[#allocation10 + $0xda8] sm:$0xff]
    %v4380 = vld [vmem:[#allocation10 + $0xdb0] sm:$0xff]
    %v4381 = vld [vmem:[#allocation10 + $0xdb8] sm:$0xff]
    %v4382 = vld [vmem:[#allocation10 + $0xdc0] sm:$0xff]
    %v4383 = vld [vmem:[#allocation10 + $0xdc8] sm:$0xff]
    %v4384 = vld [vmem:[#allocation10 + $0xdd0] sm:$0xff]
    %v4385 = vld [vmem:[#allocation10 + $0xdd8] sm:$0xff]
    %v4386 = vld [vmem:[#allocation10 + $0xde0] sm:$0xff]
    %v4387 = vld [vmem:[#allocation10 + $0xde8] sm:$0xff]
    %v4388 = vld [vmem:[#allocation10 + $0xdf0] sm:$0xff]
    %v4389 = vld [vmem:[#allocation10 + $0xdf8] sm:$0xff]
    %v4390 = vld [vmem:[#allocation10 + $0xe00] sm:$0xff]
    %v4391 = vld [vmem:[#allocation10 + $0xe08] sm:$0xff]
    %v4392 = vld [vmem:[#allocation10 + $0xe10] sm:$0xff]
    %v4393 = vld [vmem:[#allocation10 + $0xe18] sm:$0xff]
    %v4394 = vld [vmem:[#allocation10 + $0xe20] sm:$0xff]
    %v4395 = vld [vmem:[#allocation10 + $0xe28] sm:$0xff]
    %v4396 = vld [vmem:[#allocation10 + $0xe30] sm:$0xff]
    %v4397 = vld [vmem:[#allocation10 + $0xe38] sm:$0xff]
    %v4398 = vld [vmem:[#allocation10 + $0xe40] sm:$0xff]
    %v4399 = vld [vmem:[#allocation10 + $0xe48] sm:$0xff]
    %v4400 = vld [vmem:[#allocation10 + $0xe50] sm:$0xff]
    %v4401 = vld [vmem:[#allocation10 + $0xe58] sm:$0xff]
    %v4402 = vld [vmem:[#allocation10 + $0xe60] sm:$0xff]
    %v4403 = vld [vmem:[#allocation10 + $0xe68] sm:$0xff]
    %v4404 = vld [vmem:[#allocation10 + $0xe70] sm:$0xff]
    %v4405 = vld [vmem:[#allocation10 + $0xe78] sm:$0xff]
    %v4406 = vld [vmem:[#allocation10 + $0xe80] sm:$0xff]
    %v4407 = vld [vmem:[#allocation10 + $0xe88] sm:$0xff]
    %v4408 = vld [vmem:[#allocation10 + $0xe90] sm:$0xff]
    %v4409 = vld [vmem:[#allocation10 + $0xe98] sm:$0xff]
    %v4410 = vld [vmem:[#allocation10 + $0xea0] sm:$0xff]
    %v4411 = vld [vmem:[#allocation10 + $0xea8] sm:$0xff]
    %v4412 = vld [vmem:[#allocation10 + $0xeb0] sm:$0xff]
    %v4413 = vld [vmem:[#allocation10 + $0xeb8] sm:$0xff]
    %v4414 = vld [vmem:[#allocation10 + $0xec0] sm:$0xff]
    %v4415 = vld [vmem:[#allocation10 + $0xec8] sm:$0xff]
    %v4416 = vld [vmem:[#allocation10 + $0xed0] sm:$0xff]
    %v4417 = vld [vmem:[#allocation10 + $0xed8] sm:$0xff]
    %v4418 = vld [vmem:[#allocation10 + $0xee0] sm:$0xff]
    %v4419 = vld [vmem:[#allocation10 + $0xee8] sm:$0xff]
    %v4420 = vld [vmem:[#allocation10 + $0xef0] sm:$0xff]
    %v4421 = vld [vmem:[#allocation10 + $0xef8] sm:$0xff]
    %v4422 = vld [vmem:[#allocation10 + $0xf00] sm:$0xff]
    %v4423 = vld [vmem:[#allocation10 + $0xf08] sm:$0xff]
    %v4424 = vld [vmem:[#allocation10 + $0xf10] sm:$0xff]
    %v4425 = vld [vmem:[#allocation10 + $0xf18] sm:$0xff]
    %v4426 = vld [vmem:[#allocation10 + $0xf20] sm:$0xff]
    %v4427 = vld [vmem:[#allocation10 + $0xf28] sm:$0xff]
    %v4428 = vld [vmem:[#allocation10 + $0xf30] sm:$0xff]
    %v4429 = vld [vmem:[#allocation10 + $0xf38] sm:$0xff]
    %v4430 = vld [vmem:[#allocation10 + $0xf40] sm:$0xff]
    %v4431 = vld [vmem:[#allocation10 + $0xf48] sm:$0xff]
    %v4432 = vld [vmem:[#allocation10 + $0xf50] sm:$0xff]
    %v4433 = vld [vmem:[#allocation10 + $0xf58] sm:$0xff]
    %v4434 = vld [vmem:[#allocation10 + $0xf60] sm:$0xff]
    %v4435 = vld [vmem:[#allocation10 + $0xf68] sm:$0xff]
    %v4436 = vld [vmem:[#allocation10 + $0xf70] sm:$0xff]
    %v4437 = vld [vmem:[#allocation10 + $0xf78] sm:$0xff]
    %v4438 = vld [vmem:[#allocation10 + $0xf80] sm:$0xff]
    %v4439 = vld [vmem:[#allocation10 + $0xf88] sm:$0xff]
    %v4440 = vld [vmem:[#allocation10 + $0xf90] sm:$0xff]
    %v4441 = vld [vmem:[#allocation10 + $0xf98] sm:$0xff]
    %v4442 = vld [vmem:[#allocation10 + $0xfa0] sm:$0xff]
    %v4443 = vld [vmem:[#allocation10 + $0xfa8] sm:$0xff]
    %v4444 = vld [vmem:[#allocation10 + $0xfb0] sm:$0xff]
    %v4445 = vld [vmem:[#allocation10 + $0xfb8] sm:$0xff]
    %v4446 = vld [vmem:[#allocation10 + $0xfc0] sm:$0xff]
    %v4447 = vld [vmem:[#allocation10 + $0xfc8] sm:$0xff]
    %v4448 = vld [vmem:[#allocation10 + $0xfd0] sm:$0xff]
    %v4449 = vld [vmem:[#allocation10 + $0xfd8] sm:$0xff]
    %v4450 = vld [vmem:[#allocation10 + $0xfe0] sm:$0xff]
    %v4451 = vld [vmem:[#allocation10 + $0xfe8] sm:$0xff]
    %v4452 = vld [vmem:[#allocation10 + $0xff0] sm:$0xff]
    %v4453 = vld [vmem:[#allocation10 + $0xff8] sm:$0xff]
    %v4454 = vld [vmem:[#allocation11] sm:$0xff]
    %v4456 = vlaneseq
    %v4457 = vshrl.u32 %v4456, 7
    %v4458 = vsub.s32 0, %v4457
    %v4459 = vrot.slane %v4454, %v4458
    %v4460 = vlaneseq
    %v4461 = vshrl.u32 %v4460, 7
    %v4462 = vsub.s32 1, %v4461
    %v4463 = vrot.slane %v4454, %v4462
    %v4464 = vlaneseq
    %v4465 = vshrl.u32 %v4464, 7
    %v4466 = vsub.s32 2, %v4465
    %v4467 = vrot.slane %v4454, %v4466
    %v4468 = vlaneseq
    %v4469 = vshrl.u32 %v4468, 7
    %v4470 = vsub.s32 3, %v4469
    %v4471 = vrot.slane %v4454, %v4470
    %v4472 = vlaneseq
    %v4473 = vshrl.u32 %v4472, 7
    %v4474 = vsub.s32 4, %v4473
    %v4475 = vrot.slane %v4454, %v4474
    %v4476 = vlaneseq
    %v4477 = vshrl.u32 %v4476, 7
    %v4478 = vsub.s32 5, %v4477
    %v4479 = vrot.slane %v4454, %v4478
    %v4480 = vlaneseq
    %v4481 = vshrl.u32 %v4480, 7
    %v4482 = vsub.s32 6, %v4481
    %v4483 = vrot.slane %v4454, %v4482
    %v4484 = vlaneseq
    %v4485 = vshrl.u32 %v4484, 7
    %v4486 = vsub.s32 7, %v4485
    %v4487 = vrot.slane %v4454, %v4486
    %v5008 = vunpack.c.l.b16 %v3942
    %v5009 = vunpack.c.h.b16 %v3942
    %v5010 = vunpack.c.l.b16 %v3943
    %v5011 = vunpack.c.h.b16 %v3943
    %v5012 = vunpack.c.l.b16 %v3944
    %v5013 = vunpack.c.h.b16 %v3944
    %v5014 = vunpack.c.l.b16 %v3945
    %v5015 = vunpack.c.h.b16 %v3945
    %v5016 = vunpack.c.l.b16 %v3946
    %v5017 = vunpack.c.h.b16 %v3946
    %v5018 = vunpack.c.l.b16 %v3947
    %v5019 = vunpack.c.h.b16 %v3947
    %v5020 = vunpack.c.l.b16 %v3948
    %v5021 = vunpack.c.h.b16 %v3948
    %v5022 = vunpack.c.l.b16 %v3949
    %v5023 = vunpack.c.h.b16 %v3949
    %v5024 = vunpack.c.l.b16 %v3950
    %v5025 = vunpack.c.h.b16 %v3950
    %v5026 = vunpack.c.l.b16 %v3951
    %v5027 = vunpack.c.h.b16 %v3951
    %v5028 = vunpack.c.l.b16 %v3952
    %v5029 = vunpack.c.h.b16 %v3952
    %v5030 = vunpack.c.l.b16 %v3953
    %v5031 = vunpack.c.h.b16 %v3953
    %v5032 = vunpack.c.l.b16 %v3954
    %v5033 = vunpack.c.h.b16 %v3954
    %v5034 = vunpack.c.l.b16 %v3955
    %v5035 = vunpack.c.h.b16 %v3955
    %v5036 = vunpack.c.l.b16 %v3956
    %v5037 = vunpack.c.h.b16 %v3956
    %v5038 = vunpack.c.l.b16 %v3957
    %v5039 = vunpack.c.h.b16 %v3957
    %v5040 = vunpack.c.l.b16 %v3958
    %v5041 = vunpack.c.h.b16 %v3958
    %v5042 = vunpack.c.l.b16 %v3959
    %v5043 = vunpack.c.h.b16 %v3959
    %v5044 = vunpack.c.l.b16 %v3960
    %v5045 = vunpack.c.h.b16 %v3960
    %v5046 = vunpack.c.l.b16 %v3961
    %v5047 = vunpack.c.h.b16 %v3961
    %v5048 = vunpack.c.l.b16 %v3962
    %v5049 = vunpack.c.h.b16 %v3962
    %v5050 = vunpack.c.l.b16 %v3963
    %v5051 = vunpack.c.h.b16 %v3963
    %v5052 = vunpack.c.l.b16 %v3964
    %v5053 = vunpack.c.h.b16 %v3964
    %v5054 = vunpack.c.l.b16 %v3965
    %v5055 = vunpack.c.h.b16 %v3965
    %v5056 = vunpack.c.l.b16 %v3966
    %v5057 = vunpack.c.h.b16 %v3966
    %v5058 = vunpack.c.l.b16 %v3967
    %v5059 = vunpack.c.h.b16 %v3967
    %v5060 = vunpack.c.l.b16 %v3968
    %v5061 = vunpack.c.h.b16 %v3968
    %v5062 = vunpack.c.l.b16 %v3969
    %v5063 = vunpack.c.h.b16 %v3969
    %v5064 = vunpack.c.l.b16 %v3970
    %v5065 = vunpack.c.h.b16 %v3970
    %v5066 = vunpack.c.l.b16 %v3971
    %v5067 = vunpack.c.h.b16 %v3971
    %v5068 = vunpack.c.l.b16 %v3972
    %v5069 = vunpack.c.h.b16 %v3972
    %v5070 = vunpack.c.l.b16 %v3973
    %v5071 = vunpack.c.h.b16 %v3973
    %v5072 = vunpack.c.l.b16 %v3974
    %v5073 = vunpack.c.h.b16 %v3974
    %v5074 = vunpack.c.l.b16 %v3975
    %v5075 = vunpack.c.h.b16 %v3975
    %v5076 = vunpack.c.l.b16 %v3976
    %v5077 = vunpack.c.h.b16 %v3976
    %v5078 = vunpack.c.l.b16 %v3977
    %v5079 = vunpack.c.h.b16 %v3977
    %v5080 = vunpack.c.l.b16 %v3978
    %v5081 = vunpack.c.h.b16 %v3978
    %v5082 = vunpack.c.l.b16 %v3979
    %v5083 = vunpack.c.h.b16 %v3979
    %v5084 = vunpack.c.l.b16 %v3980
    %v5085 = vunpack.c.h.b16 %v3980
    %v5086 = vunpack.c.l.b16 %v3981
    %v5087 = vunpack.c.h.b16 %v3981
    %v5088 = vunpack.c.l.b16 %v3982
    %v5089 = vunpack.c.h.b16 %v3982
    %v5090 = vunpack.c.l.b16 %v3983
    %v5091 = vunpack.c.h.b16 %v3983
    %v5092 = vunpack.c.l.b16 %v3984
    %v5093 = vunpack.c.h.b16 %v3984
    %v5094 = vunpack.c.l.b16 %v3985
    %v5095 = vunpack.c.h.b16 %v3985
    %v5096 = vunpack.c.l.b16 %v3986
    %v5097 = vunpack.c.h.b16 %v3986
    %v5098 = vunpack.c.l.b16 %v3987
    %v5099 = vunpack.c.h.b16 %v3987
    %v5100 = vunpack.c.l.b16 %v3988
    %v5101 = vunpack.c.h.b16 %v3988
    %v5102 = vunpack.c.l.b16 %v3989
    %v5103 = vunpack.c.h.b16 %v3989
    %v5104 = vunpack.c.l.b16 %v3990
    %v5105 = vunpack.c.h.b16 %v3990
    %v5106 = vunpack.c.l.b16 %v3991
    %v5107 = vunpack.c.h.b16 %v3991
    %v5108 = vunpack.c.l.b16 %v3992
    %v5109 = vunpack.c.h.b16 %v3992
    %v5110 = vunpack.c.l.b16 %v3993
    %v5111 = vunpack.c.h.b16 %v3993
    %v5112 = vunpack.c.l.b16 %v3994
    %v5113 = vunpack.c.h.b16 %v3994
    %v5114 = vunpack.c.l.b16 %v3995
    %v5115 = vunpack.c.h.b16 %v3995
    %v5116 = vunpack.c.l.b16 %v3996
    %v5117 = vunpack.c.h.b16 %v3996
    %v5118 = vunpack.c.l.b16 %v3997
    %v5119 = vunpack.c.h.b16 %v3997
    %v5120 = vunpack.c.l.b16 %v3998
    %v5121 = vunpack.c.h.b16 %v3998
    %v5122 = vunpack.c.l.b16 %v3999
    %v5123 = vunpack.c.h.b16 %v3999
    %v5124 = vunpack.c.l.b16 %v4000
    %v5125 = vunpack.c.h.b16 %v4000
    %v5126 = vunpack.c.l.b16 %v4001
    %v5127 = vunpack.c.h.b16 %v4001
    %v5128 = vunpack.c.l.b16 %v4002
    %v5129 = vunpack.c.h.b16 %v4002
    %v5130 = vunpack.c.l.b16 %v4003
    %v5131 = vunpack.c.h.b16 %v4003
    %v5132 = vunpack.c.l.b16 %v4004
    %v5133 = vunpack.c.h.b16 %v4004
    %v5134 = vunpack.c.l.b16 %v4005
    %v5135 = vunpack.c.h.b16 %v4005
    %v5136 = vunpack.c.l.b16 %v4006
    %v5137 = vunpack.c.h.b16 %v4006
    %v5138 = vunpack.c.l.b16 %v4007
    %v5139 = vunpack.c.h.b16 %v4007
    %v5140 = vunpack.c.l.b16 %v4008
    %v5141 = vunpack.c.h.b16 %v4008
    %v5142 = vunpack.c.l.b16 %v4009
    %v5143 = vunpack.c.h.b16 %v4009
    %v5144 = vunpack.c.l.b16 %v4010
    %v5145 = vunpack.c.h.b16 %v4010
    %v5146 = vunpack.c.l.b16 %v4011
    %v5147 = vunpack.c.h.b16 %v4011
    %v5148 = vunpack.c.l.b16 %v4012
    %v5149 = vunpack.c.h.b16 %v4012
    %v5150 = vunpack.c.l.b16 %v4013
    %v5151 = vunpack.c.h.b16 %v4013
    %v5152 = vunpack.c.l.b16 %v4014
    %v5153 = vunpack.c.h.b16 %v4014
    %v5154 = vunpack.c.l.b16 %v4015
    %v5155 = vunpack.c.h.b16 %v4015
    %v5156 = vunpack.c.l.b16 %v4016
    %v5157 = vunpack.c.h.b16 %v4016
    %v5158 = vunpack.c.l.b16 %v4017
    %v5159 = vunpack.c.h.b16 %v4017
    %v5160 = vunpack.c.l.b16 %v4018
    %v5161 = vunpack.c.h.b16 %v4018
    %v5162 = vunpack.c.l.b16 %v4019
    %v5163 = vunpack.c.h.b16 %v4019
    %v5164 = vunpack.c.l.b16 %v4020
    %v5165 = vunpack.c.h.b16 %v4020
    %v5166 = vunpack.c.l.b16 %v4021
    %v5167 = vunpack.c.h.b16 %v4021
    %v5168 = vunpack.c.l.b16 %v4022
    %v5169 = vunpack.c.h.b16 %v4022
    %v5170 = vunpack.c.l.b16 %v4023
    %v5171 = vunpack.c.h.b16 %v4023
    %v5172 = vunpack.c.l.b16 %v4024
    %v5173 = vunpack.c.h.b16 %v4024
    %v5174 = vunpack.c.l.b16 %v4025
    %v5175 = vunpack.c.h.b16 %v4025
    %v5176 = vunpack.c.l.b16 %v4026
    %v5177 = vunpack.c.h.b16 %v4026
    %v5178 = vunpack.c.l.b16 %v4027
    %v5179 = vunpack.c.h.b16 %v4027
    %v5180 = vunpack.c.l.b16 %v4028
    %v5181 = vunpack.c.h.b16 %v4028
    %v5182 = vunpack.c.l.b16 %v4029
    %v5183 = vunpack.c.h.b16 %v4029
    %v5184 = vunpack.c.l.b16 %v4030
    %v5185 = vunpack.c.h.b16 %v4030
    %v5186 = vunpack.c.l.b16 %v4031
    %v5187 = vunpack.c.h.b16 %v4031
    %v5188 = vunpack.c.l.b16 %v4032
    %v5189 = vunpack.c.h.b16 %v4032
    %v5190 = vunpack.c.l.b16 %v4033
    %v5191 = vunpack.c.h.b16 %v4033
    %v5192 = vunpack.c.l.b16 %v4034
    %v5193 = vunpack.c.h.b16 %v4034
    %v5194 = vunpack.c.l.b16 %v4035
    %v5195 = vunpack.c.h.b16 %v4035
    %v5196 = vunpack.c.l.b16 %v4036
    %v5197 = vunpack.c.h.b16 %v4036
    %v5198 = vunpack.c.l.b16 %v4037
    %v5199 = vunpack.c.h.b16 %v4037
    %v5200 = vunpack.c.l.b16 %v4038
    %v5201 = vunpack.c.h.b16 %v4038
    %v5202 = vunpack.c.l.b16 %v4039
    %v5203 = vunpack.c.h.b16 %v4039
    %v5204 = vunpack.c.l.b16 %v4040
    %v5205 = vunpack.c.h.b16 %v4040
    %v5206 = vunpack.c.l.b16 %v4041
    %v5207 = vunpack.c.h.b16 %v4041
    %v5208 = vunpack.c.l.b16 %v4042
    %v5209 = vunpack.c.h.b16 %v4042
    %v5210 = vunpack.c.l.b16 %v4043
    %v5211 = vunpack.c.h.b16 %v4043
    %v5212 = vunpack.c.l.b16 %v4044
    %v5213 = vunpack.c.h.b16 %v4044
    %v5214 = vunpack.c.l.b16 %v4045
    %v5215 = vunpack.c.h.b16 %v4045
    %v5216 = vunpack.c.l.b16 %v4046
    %v5217 = vunpack.c.h.b16 %v4046
    %v5218 = vunpack.c.l.b16 %v4047
    %v5219 = vunpack.c.h.b16 %v4047
    %v5220 = vunpack.c.l.b16 %v4048
    %v5221 = vunpack.c.h.b16 %v4048
    %v5222 = vunpack.c.l.b16 %v4049
    %v5223 = vunpack.c.h.b16 %v4049
    %v5224 = vunpack.c.l.b16 %v4050
    %v5225 = vunpack.c.h.b16 %v4050
    %v5226 = vunpack.c.l.b16 %v4051
    %v5227 = vunpack.c.h.b16 %v4051
    %v5228 = vunpack.c.l.b16 %v4052
    %v5229 = vunpack.c.h.b16 %v4052
    %v5230 = vunpack.c.l.b16 %v4053
    %v5231 = vunpack.c.h.b16 %v4053
    %v5232 = vunpack.c.l.b16 %v4054
    %v5233 = vunpack.c.h.b16 %v4054
    %v5234 = vunpack.c.l.b16 %v4055
    %v5235 = vunpack.c.h.b16 %v4055
    %v5236 = vunpack.c.l.b16 %v4056
    %v5237 = vunpack.c.h.b16 %v4056
    %v5238 = vunpack.c.l.b16 %v4057
    %v5239 = vunpack.c.h.b16 %v4057
    %v5240 = vunpack.c.l.b16 %v4058
    %v5241 = vunpack.c.h.b16 %v4058
    %v5242 = vunpack.c.l.b16 %v4059
    %v5243 = vunpack.c.h.b16 %v4059
    %v5244 = vunpack.c.l.b16 %v4060
    %v5245 = vunpack.c.h.b16 %v4060
    %v5246 = vunpack.c.l.b16 %v4061
    %v5247 = vunpack.c.h.b16 %v4061
    %v5248 = vunpack.c.l.b16 %v4062
    %v5249 = vunpack.c.h.b16 %v4062
    %v5250 = vunpack.c.l.b16 %v4063
    %v5251 = vunpack.c.h.b16 %v4063
    %v5252 = vunpack.c.l.b16 %v4064
    %v5253 = vunpack.c.h.b16 %v4064
    %v5254 = vunpack.c.l.b16 %v4065
    %v5255 = vunpack.c.h.b16 %v4065
    %v5256 = vunpack.c.l.b16 %v4066
    %v5257 = vunpack.c.h.b16 %v4066
    %v5258 = vunpack.c.l.b16 %v4067
    %v5259 = vunpack.c.h.b16 %v4067
    %v5260 = vunpack.c.l.b16 %v4068
    %v5261 = vunpack.c.h.b16 %v4068
    %v5262 = vunpack.c.l.b16 %v4069
    %v5263 = vunpack.c.h.b16 %v4069
    %v5264 = vunpack.c.l.b16 %v4070
    %v5265 = vunpack.c.h.b16 %v4070
    %v5266 = vunpack.c.l.b16 %v4071
    %v5267 = vunpack.c.h.b16 %v4071
    %v5268 = vunpack.c.l.b16 %v4072
    %v5269 = vunpack.c.h.b16 %v4072
    %v5270 = vunpack.c.l.b16 %v4073
    %v5271 = vunpack.c.h.b16 %v4073
    %v5272 = vunpack.c.l.b16 %v4074
    %v5273 = vunpack.c.h.b16 %v4074
    %v5274 = vunpack.c.l.b16 %v4075
    %v5275 = vunpack.c.h.b16 %v4075
    %v5276 = vunpack.c.l.b16 %v4076
    %v5277 = vunpack.c.h.b16 %v4076
    %v5278 = vunpack.c.l.b16 %v4077
    %v5279 = vunpack.c.h.b16 %v4077
    %v5280 = vunpack.c.l.b16 %v4078
    %v5281 = vunpack.c.h.b16 %v4078
    %v5282 = vunpack.c.l.b16 %v4079
    %v5283 = vunpack.c.h.b16 %v4079
    %v5284 = vunpack.c.l.b16 %v4080
    %v5285 = vunpack.c.h.b16 %v4080
    %v5286 = vunpack.c.l.b16 %v4081
    %v5287 = vunpack.c.h.b16 %v4081
    %v5288 = vunpack.c.l.b16 %v4082
    %v5289 = vunpack.c.h.b16 %v4082
    %v5290 = vunpack.c.l.b16 %v4083
    %v5291 = vunpack.c.h.b16 %v4083
    %v5292 = vunpack.c.l.b16 %v4084
    %v5293 = vunpack.c.h.b16 %v4084
    %v5294 = vunpack.c.l.b16 %v4085
    %v5295 = vunpack.c.h.b16 %v4085
    %v5296 = vunpack.c.l.b16 %v4086
    %v5297 = vunpack.c.h.b16 %v4086
    %v5298 = vunpack.c.l.b16 %v4087
    %v5299 = vunpack.c.h.b16 %v4087
    %v5300 = vunpack.c.l.b16 %v4088
    %v5301 = vunpack.c.h.b16 %v4088
    %v5302 = vunpack.c.l.b16 %v4089
    %v5303 = vunpack.c.h.b16 %v4089
    %v5304 = vunpack.c.l.b16 %v4090
    %v5305 = vunpack.c.h.b16 %v4090
    %v5306 = vunpack.c.l.b16 %v4091
    %v5307 = vunpack.c.h.b16 %v4091
    %v5308 = vunpack.c.l.b16 %v4092
    %v5309 = vunpack.c.h.b16 %v4092
    %v5310 = vunpack.c.l.b16 %v4093
    %v5311 = vunpack.c.h.b16 %v4093
    %v5312 = vunpack.c.l.b16 %v4094
    %v5313 = vunpack.c.h.b16 %v4094
    %v5314 = vunpack.c.l.b16 %v4095
    %v5315 = vunpack.c.h.b16 %v4095
    %v5316 = vunpack.c.l.b16 %v4096
    %v5317 = vunpack.c.h.b16 %v4096
    %v5318 = vunpack.c.l.b16 %v4097
    %v5319 = vunpack.c.h.b16 %v4097
    %v5320 = vunpack.c.l.b16 %v4098
    %v5321 = vunpack.c.h.b16 %v4098
    %v5322 = vunpack.c.l.b16 %v4099
    %v5323 = vunpack.c.h.b16 %v4099
    %v5324 = vunpack.c.l.b16 %v4100
    %v5325 = vunpack.c.h.b16 %v4100
    %v5326 = vunpack.c.l.b16 %v4101
    %v5327 = vunpack.c.h.b16 %v4101
    %v5328 = vunpack.c.l.b16 %v4102
    %v5329 = vunpack.c.h.b16 %v4102
    %v5330 = vunpack.c.l.b16 %v4103
    %v5331 = vunpack.c.h.b16 %v4103
    %v5332 = vunpack.c.l.b16 %v4104
    %v5333 = vunpack.c.h.b16 %v4104
    %v5334 = vunpack.c.l.b16 %v4105
    %v5335 = vunpack.c.h.b16 %v4105
    %v5336 = vunpack.c.l.b16 %v4106
    %v5337 = vunpack.c.h.b16 %v4106
    %v5338 = vunpack.c.l.b16 %v4107
    %v5339 = vunpack.c.h.b16 %v4107
    %v5340 = vunpack.c.l.b16 %v4108
    %v5341 = vunpack.c.h.b16 %v4108
    %v5342 = vunpack.c.l.b16 %v4109
    %v5343 = vunpack.c.h.b16 %v4109
    %v5344 = vunpack.c.l.b16 %v4110
    %v5345 = vunpack.c.h.b16 %v4110
    %v5346 = vunpack.c.l.b16 %v4111
    %v5347 = vunpack.c.h.b16 %v4111
    %v5348 = vunpack.c.l.b16 %v4112
    %v5349 = vunpack.c.h.b16 %v4112
    %v5350 = vunpack.c.l.b16 %v4113
    %v5351 = vunpack.c.h.b16 %v4113
    %v5352 = vunpack.c.l.b16 %v4114
    %v5353 = vunpack.c.h.b16 %v4114
    %v5354 = vunpack.c.l.b16 %v4115
    %v5355 = vunpack.c.h.b16 %v4115
    %v5356 = vunpack.c.l.b16 %v4116
    %v5357 = vunpack.c.h.b16 %v4116
    %v5358 = vunpack.c.l.b16 %v4117
    %v5359 = vunpack.c.h.b16 %v4117
    %v5360 = vunpack.c.l.b16 %v4118
    %v5361 = vunpack.c.h.b16 %v4118
    %v5362 = vunpack.c.l.b16 %v4119
    %v5363 = vunpack.c.h.b16 %v4119
    %v5364 = vunpack.c.l.b16 %v4120
    %v5365 = vunpack.c.h.b16 %v4120
    %v5366 = vunpack.c.l.b16 %v4121
    %v5367 = vunpack.c.h.b16 %v4121
    %v5368 = vunpack.c.l.b16 %v4122
    %v5369 = vunpack.c.h.b16 %v4122
    %v5370 = vunpack.c.l.b16 %v4123
    %v5371 = vunpack.c.h.b16 %v4123
    %v5372 = vunpack.c.l.b16 %v4124
    %v5373 = vunpack.c.h.b16 %v4124
    %v5374 = vunpack.c.l.b16 %v4125
    %v5375 = vunpack.c.h.b16 %v4125
    %v5376 = vunpack.c.l.b16 %v4126
    %v5377 = vunpack.c.h.b16 %v4126
    %v5378 = vunpack.c.l.b16 %v4127
    %v5379 = vunpack.c.h.b16 %v4127
    %v5380 = vunpack.c.l.b16 %v4128
    %v5381 = vunpack.c.h.b16 %v4128
    %v5382 = vunpack.c.l.b16 %v4129
    %v5383 = vunpack.c.h.b16 %v4129
    %v5384 = vunpack.c.l.b16 %v4130
    %v5385 = vunpack.c.h.b16 %v4130
    %v5386 = vunpack.c.l.b16 %v4131
    %v5387 = vunpack.c.h.b16 %v4131
    %v5388 = vunpack.c.l.b16 %v4132
    %v5389 = vunpack.c.h.b16 %v4132
    %v5390 = vunpack.c.l.b16 %v4133
    %v5391 = vunpack.c.h.b16 %v4133
    %v5392 = vunpack.c.l.b16 %v4134
    %v5393 = vunpack.c.h.b16 %v4134
    %v5394 = vunpack.c.l.b16 %v4135
    %v5395 = vunpack.c.h.b16 %v4135
    %v5396 = vunpack.c.l.b16 %v4136
    %v5397 = vunpack.c.h.b16 %v4136
    %v5398 = vunpack.c.l.b16 %v4137
    %v5399 = vunpack.c.h.b16 %v4137
    %v5400 = vunpack.c.l.b16 %v4138
    %v5401 = vunpack.c.h.b16 %v4138
    %v5402 = vunpack.c.l.b16 %v4139
    %v5403 = vunpack.c.h.b16 %v4139
    %v5404 = vunpack.c.l.b16 %v4140
    %v5405 = vunpack.c.h.b16 %v4140
    %v5406 = vunpack.c.l.b16 %v4141
    %v5407 = vunpack.c.h.b16 %v4141
    %v5408 = vunpack.c.l.b16 %v4142
    %v5409 = vunpack.c.h.b16 %v4142
    %v5410 = vunpack.c.l.b16 %v4143
    %v5411 = vunpack.c.h.b16 %v4143
    %v5412 = vunpack.c.l.b16 %v4144
    %v5413 = vunpack.c.h.b16 %v4144
    %v5414 = vunpack.c.l.b16 %v4145
    %v5415 = vunpack.c.h.b16 %v4145
    %v5416 = vunpack.c.l.b16 %v4146
    %v5417 = vunpack.c.h.b16 %v4146
    %v5418 = vunpack.c.l.b16 %v4147
    %v5419 = vunpack.c.h.b16 %v4147
    %v5420 = vunpack.c.l.b16 %v4148
    %v5421 = vunpack.c.h.b16 %v4148
    %v5422 = vunpack.c.l.b16 %v4149
    %v5423 = vunpack.c.h.b16 %v4149
    %v5424 = vunpack.c.l.b16 %v4150
    %v5425 = vunpack.c.h.b16 %v4150
    %v5426 = vunpack.c.l.b16 %v4151
    %v5427 = vunpack.c.h.b16 %v4151
    %v5428 = vunpack.c.l.b16 %v4152
    %v5429 = vunpack.c.h.b16 %v4152
    %v5430 = vunpack.c.l.b16 %v4153
    %v5431 = vunpack.c.h.b16 %v4153
    %v5432 = vunpack.c.l.b16 %v4154
    %v5433 = vunpack.c.h.b16 %v4154
    %v5434 = vunpack.c.l.b16 %v4155
    %v5435 = vunpack.c.h.b16 %v4155
    %v5436 = vunpack.c.l.b16 %v4156
    %v5437 = vunpack.c.h.b16 %v4156
    %v5438 = vunpack.c.l.b16 %v4157
    %v5439 = vunpack.c.h.b16 %v4157
    %v5440 = vunpack.c.l.b16 %v4158
    %v5441 = vunpack.c.h.b16 %v4158
    %v5442 = vunpack.c.l.b16 %v4159
    %v5443 = vunpack.c.h.b16 %v4159
    %v5444 = vunpack.c.l.b16 %v4160
    %v5445 = vunpack.c.h.b16 %v4160
    %v5446 = vunpack.c.l.b16 %v4161
    %v5447 = vunpack.c.h.b16 %v4161
    %v5448 = vunpack.c.l.b16 %v4162
    %v5449 = vunpack.c.h.b16 %v4162
    %v5450 = vunpack.c.l.b16 %v4163
    %v5451 = vunpack.c.h.b16 %v4163
    %v5452 = vunpack.c.l.b16 %v4164
    %v5453 = vunpack.c.h.b16 %v4164
    %v5454 = vunpack.c.l.b16 %v4165
    %v5455 = vunpack.c.h.b16 %v4165
    %v5456 = vunpack.c.l.b16 %v4166
    %v5457 = vunpack.c.h.b16 %v4166
    %v5458 = vunpack.c.l.b16 %v4167
    %v5459 = vunpack.c.h.b16 %v4167
    %v5460 = vunpack.c.l.b16 %v4168
    %v5461 = vunpack.c.h.b16 %v4168
    %v5462 = vunpack.c.l.b16 %v4169
    %v5463 = vunpack.c.h.b16 %v4169
    %v5464 = vunpack.c.l.b16 %v4170
    %v5465 = vunpack.c.h.b16 %v4170
    %v5466 = vunpack.c.l.b16 %v4171
    %v5467 = vunpack.c.h.b16 %v4171
    %v5468 = vunpack.c.l.b16 %v4172
    %v5469 = vunpack.c.h.b16 %v4172
    %v5470 = vunpack.c.l.b16 %v4173
    %v5471 = vunpack.c.h.b16 %v4173
    %v5472 = vunpack.c.l.b16 %v4174
    %v5473 = vunpack.c.h.b16 %v4174
    %v5474 = vunpack.c.l.b16 %v4175
    %v5475 = vunpack.c.h.b16 %v4175
    %v5476 = vunpack.c.l.b16 %v4176
    %v5477 = vunpack.c.h.b16 %v4176
    %v5478 = vunpack.c.l.b16 %v4177
    %v5479 = vunpack.c.h.b16 %v4177
    %v5480 = vunpack.c.l.b16 %v4178
    %v5481 = vunpack.c.h.b16 %v4178
    %v5482 = vunpack.c.l.b16 %v4179
    %v5483 = vunpack.c.h.b16 %v4179
    %v5484 = vunpack.c.l.b16 %v4180
    %v5485 = vunpack.c.h.b16 %v4180
    %v5486 = vunpack.c.l.b16 %v4181
    %v5487 = vunpack.c.h.b16 %v4181
    %v5488 = vunpack.c.l.b16 %v4182
    %v5489 = vunpack.c.h.b16 %v4182
    %v5490 = vunpack.c.l.b16 %v4183
    %v5491 = vunpack.c.h.b16 %v4183
    %v5492 = vunpack.c.l.b16 %v4184
    %v5493 = vunpack.c.h.b16 %v4184
    %v5494 = vunpack.c.l.b16 %v4185
    %v5495 = vunpack.c.h.b16 %v4185
    %v5496 = vunpack.c.l.b16 %v4186
    %v5497 = vunpack.c.h.b16 %v4186
    %v5498 = vunpack.c.l.b16 %v4187
    %v5499 = vunpack.c.h.b16 %v4187
    %v5500 = vunpack.c.l.b16 %v4188
    %v5501 = vunpack.c.h.b16 %v4188
    %v5502 = vunpack.c.l.b16 %v4189
    %v5503 = vunpack.c.h.b16 %v4189
    %v5504 = vunpack.c.l.b16 %v4190
    %v5505 = vunpack.c.h.b16 %v4190
    %v5506 = vunpack.c.l.b16 %v4191
    %v5507 = vunpack.c.h.b16 %v4191
    %v5508 = vunpack.c.l.b16 %v4192
    %v5509 = vunpack.c.h.b16 %v4192
    %v5510 = vunpack.c.l.b16 %v4193
    %v5511 = vunpack.c.h.b16 %v4193
    %v5512 = vunpack.c.l.b16 %v4194
    %v5513 = vunpack.c.h.b16 %v4194
    %v5514 = vunpack.c.l.b16 %v4195
    %v5515 = vunpack.c.h.b16 %v4195
    %v5516 = vunpack.c.l.b16 %v4196
    %v5517 = vunpack.c.h.b16 %v4196
    %v5518 = vunpack.c.l.b16 %v4197
    %v5519 = vunpack.c.h.b16 %v4197
    %v5520 = vunpack.c.l.b16 %v4198
    %v5521 = vunpack.c.h.b16 %v4198
    %v5522 = vunpack.c.l.b16 %v4199
    %v5523 = vunpack.c.h.b16 %v4199
    %v5524 = vunpack.c.l.b16 %v4200
    %v5525 = vunpack.c.h.b16 %v4200
    %v5526 = vunpack.c.l.b16 %v4201
    %v5527 = vunpack.c.h.b16 %v4201
    %v5528 = vunpack.c.l.b16 %v4202
    %v5529 = vunpack.c.h.b16 %v4202
    %v5530 = vunpack.c.l.b16 %v4203
    %v5531 = vunpack.c.h.b16 %v4203
    %v5532 = vunpack.c.l.b16 %v4204
    %v5533 = vunpack.c.h.b16 %v4204
    %v5534 = vunpack.c.l.b16 %v4205
    %v5535 = vunpack.c.h.b16 %v4205
    %v5536 = vunpack.c.l.b16 %v4206
    %v5537 = vunpack.c.h.b16 %v4206
    %v5538 = vunpack.c.l.b16 %v4207
    %v5539 = vunpack.c.h.b16 %v4207
    %v5540 = vunpack.c.l.b16 %v4208
    %v5541 = vunpack.c.h.b16 %v4208
    %v5542 = vunpack.c.l.b16 %v4209
    %v5543 = vunpack.c.h.b16 %v4209
    %v5544 = vunpack.c.l.b16 %v4210
    %v5545 = vunpack.c.h.b16 %v4210
    %v5546 = vunpack.c.l.b16 %v4211
    %v5547 = vunpack.c.h.b16 %v4211
    %v5548 = vunpack.c.l.b16 %v4212
    %v5549 = vunpack.c.h.b16 %v4212
    %v5550 = vunpack.c.l.b16 %v4213
    %v5551 = vunpack.c.h.b16 %v4213
    %v5552 = vunpack.c.l.b16 %v4214
    %v5553 = vunpack.c.h.b16 %v4214
    %v5554 = vunpack.c.l.b16 %v4215
    %v5555 = vunpack.c.h.b16 %v4215
    %v5556 = vunpack.c.l.b16 %v4216
    %v5557 = vunpack.c.h.b16 %v4216
    %v5558 = vunpack.c.l.b16 %v4217
    %v5559 = vunpack.c.h.b16 %v4217
    %v5560 = vunpack.c.l.b16 %v4218
    %v5561 = vunpack.c.h.b16 %v4218
    %v5562 = vunpack.c.l.b16 %v4219
    %v5563 = vunpack.c.h.b16 %v4219
    %v5564 = vunpack.c.l.b16 %v4220
    %v5565 = vunpack.c.h.b16 %v4220
    %v5566 = vunpack.c.l.b16 %v4221
    %v5567 = vunpack.c.h.b16 %v4221
    %v5568 = vunpack.c.l.b16 %v4222
    %v5569 = vunpack.c.h.b16 %v4222
    %v5570 = vunpack.c.l.b16 %v4223
    %v5571 = vunpack.c.h.b16 %v4223
    %v5572 = vunpack.c.l.b16 %v4224
    %v5573 = vunpack.c.h.b16 %v4224
    %v5574 = vunpack.c.l.b16 %v4225
    %v5575 = vunpack.c.h.b16 %v4225
    %v5576 = vunpack.c.l.b16 %v4226
    %v5577 = vunpack.c.h.b16 %v4226
    %v5578 = vunpack.c.l.b16 %v4227
    %v5579 = vunpack.c.h.b16 %v4227
    %v5580 = vunpack.c.l.b16 %v4228
    %v5581 = vunpack.c.h.b16 %v4228
    %v5582 = vunpack.c.l.b16 %v4229
    %v5583 = vunpack.c.h.b16 %v4229
    %v5584 = vunpack.c.l.b16 %v4230
    %v5585 = vunpack.c.h.b16 %v4230
    %v5586 = vunpack.c.l.b16 %v4231
    %v5587 = vunpack.c.h.b16 %v4231
    %v5588 = vunpack.c.l.b16 %v4232
    %v5589 = vunpack.c.h.b16 %v4232
    %v5590 = vunpack.c.l.b16 %v4233
    %v5591 = vunpack.c.h.b16 %v4233
    %v5592 = vunpack.c.l.b16 %v4234
    %v5593 = vunpack.c.h.b16 %v4234
    %v5594 = vunpack.c.l.b16 %v4235
    %v5595 = vunpack.c.h.b16 %v4235
    %v5596 = vunpack.c.l.b16 %v4236
    %v5597 = vunpack.c.h.b16 %v4236
    %v5598 = vunpack.c.l.b16 %v4237
    %v5599 = vunpack.c.h.b16 %v4237
    %v5600 = vunpack.c.l.b16 %v4238
    %v5601 = vunpack.c.h.b16 %v4238
    %v5602 = vunpack.c.l.b16 %v4239
    %v5603 = vunpack.c.h.b16 %v4239
    %v5604 = vunpack.c.l.b16 %v4240
    %v5605 = vunpack.c.h.b16 %v4240
    %v5606 = vunpack.c.l.b16 %v4241
    %v5607 = vunpack.c.h.b16 %v4241
    %v5608 = vunpack.c.l.b16 %v4242
    %v5609 = vunpack.c.h.b16 %v4242
    %v5610 = vunpack.c.l.b16 %v4243
    %v5611 = vunpack.c.h.b16 %v4243
    %v5612 = vunpack.c.l.b16 %v4244
    %v5613 = vunpack.c.h.b16 %v4244
    %v5614 = vunpack.c.l.b16 %v4245
    %v5615 = vunpack.c.h.b16 %v4245
    %v5616 = vunpack.c.l.b16 %v4246
    %v5617 = vunpack.c.h.b16 %v4246
    %v5618 = vunpack.c.l.b16 %v4247
    %v5619 = vunpack.c.h.b16 %v4247
    %v5620 = vunpack.c.l.b16 %v4248
    %v5621 = vunpack.c.h.b16 %v4248
    %v5622 = vunpack.c.l.b16 %v4249
    %v5623 = vunpack.c.h.b16 %v4249
    %v5624 = vunpack.c.l.b16 %v4250
    %v5625 = vunpack.c.h.b16 %v4250
    %v5626 = vunpack.c.l.b16 %v4251
    %v5627 = vunpack.c.h.b16 %v4251
    %v5628 = vunpack.c.l.b16 %v4252
    %v5629 = vunpack.c.h.b16 %v4252
    %v5630 = vunpack.c.l.b16 %v4253
    %v5631 = vunpack.c.h.b16 %v4253
    %v5632 = vunpack.c.l.b16 %v4254
    %v5633 = vunpack.c.h.b16 %v4254
    %v5634 = vunpack.c.l.b16 %v4255
    %v5635 = vunpack.c.h.b16 %v4255
    %v5636 = vunpack.c.l.b16 %v4256
    %v5637 = vunpack.c.h.b16 %v4256
    %v5638 = vunpack.c.l.b16 %v4257
    %v5639 = vunpack.c.h.b16 %v4257
    %v5640 = vunpack.c.l.b16 %v4258
    %v5641 = vunpack.c.h.b16 %v4258
    %v5642 = vunpack.c.l.b16 %v4259
    %v5643 = vunpack.c.h.b16 %v4259
    %v5644 = vunpack.c.l.b16 %v4260
    %v5645 = vunpack.c.h.b16 %v4260
    %v5646 = vunpack.c.l.b16 %v4261
    %v5647 = vunpack.c.h.b16 %v4261
    %v5648 = vunpack.c.l.b16 %v4262
    %v5649 = vunpack.c.h.b16 %v4262
    %v5650 = vunpack.c.l.b16 %v4263
    %v5651 = vunpack.c.h.b16 %v4263
    %v5652 = vunpack.c.l.b16 %v4264
    %v5653 = vunpack.c.h.b16 %v4264
    %v5654 = vunpack.c.l.b16 %v4265
    %v5655 = vunpack.c.h.b16 %v4265
    %v5656 = vunpack.c.l.b16 %v4266
    %v5657 = vunpack.c.h.b16 %v4266
    %v5658 = vunpack.c.l.b16 %v4267
    %v5659 = vunpack.c.h.b16 %v4267
    %v5660 = vunpack.c.l.b16 %v4268
    %v5661 = vunpack.c.h.b16 %v4268
    %v5662 = vunpack.c.l.b16 %v4269
    %v5663 = vunpack.c.h.b16 %v4269
    %v5664 = vunpack.c.l.b16 %v4270
    %v5665 = vunpack.c.h.b16 %v4270
    %v5666 = vunpack.c.l.b16 %v4271
    %v5667 = vunpack.c.h.b16 %v4271
    %v5668 = vunpack.c.l.b16 %v4272
    %v5669 = vunpack.c.h.b16 %v4272
    %v5670 = vunpack.c.l.b16 %v4273
    %v5671 = vunpack.c.h.b16 %v4273
    %v5672 = vunpack.c.l.b16 %v4274
    %v5673 = vunpack.c.h.b16 %v4274
    %v5674 = vunpack.c.l.b16 %v4275
    %v5675 = vunpack.c.h.b16 %v4275
    %v5676 = vunpack.c.l.b16 %v4276
    %v5677 = vunpack.c.h.b16 %v4276
    %v5678 = vunpack.c.l.b16 %v4277
    %v5679 = vunpack.c.h.b16 %v4277
    %v5680 = vunpack.c.l.b16 %v4278
    %v5681 = vunpack.c.h.b16 %v4278
    %v5682 = vunpack.c.l.b16 %v4279
    %v5683 = vunpack.c.h.b16 %v4279
    %v5684 = vunpack.c.l.b16 %v4280
    %v5685 = vunpack.c.h.b16 %v4280
    %v5686 = vunpack.c.l.b16 %v4281
    %v5687 = vunpack.c.h.b16 %v4281
    %v5688 = vunpack.c.l.b16 %v4282
    %v5689 = vunpack.c.h.b16 %v4282
    %v5690 = vunpack.c.l.b16 %v4283
    %v5691 = vunpack.c.h.b16 %v4283
    %v5692 = vunpack.c.l.b16 %v4284
    %v5693 = vunpack.c.h.b16 %v4284
    %v5694 = vunpack.c.l.b16 %v4285
    %v5695 = vunpack.c.h.b16 %v4285
    %v5696 = vunpack.c.l.b16 %v4286
    %v5697 = vunpack.c.h.b16 %v4286
    %v5698 = vunpack.c.l.b16 %v4287
    %v5699 = vunpack.c.h.b16 %v4287
    %v5700 = vunpack.c.l.b16 %v4288
    %v5701 = vunpack.c.h.b16 %v4288
    %v5702 = vunpack.c.l.b16 %v4289
    %v5703 = vunpack.c.h.b16 %v4289
    %v5704 = vunpack.c.l.b16 %v4290
    %v5705 = vunpack.c.h.b16 %v4290
    %v5706 = vunpack.c.l.b16 %v4291
    %v5707 = vunpack.c.h.b16 %v4291
    %v5708 = vunpack.c.l.b16 %v4292
    %v5709 = vunpack.c.h.b16 %v4292
    %v5710 = vunpack.c.l.b16 %v4293
    %v5711 = vunpack.c.h.b16 %v4293
    %v5712 = vunpack.c.l.b16 %v4294
    %v5713 = vunpack.c.h.b16 %v4294
    %v5714 = vunpack.c.l.b16 %v4295
    %v5715 = vunpack.c.h.b16 %v4295
    %v5716 = vunpack.c.l.b16 %v4296
    %v5717 = vunpack.c.h.b16 %v4296
    %v5718 = vunpack.c.l.b16 %v4297
    %v5719 = vunpack.c.h.b16 %v4297
    %v5720 = vunpack.c.l.b16 %v4298
    %v5721 = vunpack.c.h.b16 %v4298
    %v5722 = vunpack.c.l.b16 %v4299
    %v5723 = vunpack.c.h.b16 %v4299
    %v5724 = vunpack.c.l.b16 %v4300
    %v5725 = vunpack.c.h.b16 %v4300
    %v5726 = vunpack.c.l.b16 %v4301
    %v5727 = vunpack.c.h.b16 %v4301
    %v5728 = vunpack.c.l.b16 %v4302
    %v5729 = vunpack.c.h.b16 %v4302
    %v5730 = vunpack.c.l.b16 %v4303
    %v5731 = vunpack.c.h.b16 %v4303
    %v5732 = vunpack.c.l.b16 %v4304
    %v5733 = vunpack.c.h.b16 %v4304
    %v5734 = vunpack.c.l.b16 %v4305
    %v5735 = vunpack.c.h.b16 %v4305
    %v5736 = vunpack.c.l.b16 %v4306
    %v5737 = vunpack.c.h.b16 %v4306
    %v5738 = vunpack.c.l.b16 %v4307
    %v5739 = vunpack.c.h.b16 %v4307
    %v5740 = vunpack.c.l.b16 %v4308
    %v5741 = vunpack.c.h.b16 %v4308
    %v5742 = vunpack.c.l.b16 %v4309
    %v5743 = vunpack.c.h.b16 %v4309
    %v5744 = vunpack.c.l.b16 %v4310
    %v5745 = vunpack.c.h.b16 %v4310
    %v5746 = vunpack.c.l.b16 %v4311
    %v5747 = vunpack.c.h.b16 %v4311
    %v5748 = vunpack.c.l.b16 %v4312
    %v5749 = vunpack.c.h.b16 %v4312
    %v5750 = vunpack.c.l.b16 %v4313
    %v5751 = vunpack.c.h.b16 %v4313
    %v5752 = vunpack.c.l.b16 %v4314
    %v5753 = vunpack.c.h.b16 %v4314
    %v5754 = vunpack.c.l.b16 %v4315
    %v5755 = vunpack.c.h.b16 %v4315
    %v5756 = vunpack.c.l.b16 %v4316
    %v5757 = vunpack.c.h.b16 %v4316
    %v5758 = vunpack.c.l.b16 %v4317
    %v5759 = vunpack.c.h.b16 %v4317
    %v5760 = vunpack.c.l.b16 %v4318
    %v5761 = vunpack.c.h.b16 %v4318
    %v5762 = vunpack.c.l.b16 %v4319
    %v5763 = vunpack.c.h.b16 %v4319
    %v5764 = vunpack.c.l.b16 %v4320
    %v5765 = vunpack.c.h.b16 %v4320
    %v5766 = vunpack.c.l.b16 %v4321
    %v5767 = vunpack.c.h.b16 %v4321
    %v5768 = vunpack.c.l.b16 %v4322
    %v5769 = vunpack.c.h.b16 %v4322
    %v5770 = vunpack.c.l.b16 %v4323
    %v5771 = vunpack.c.h.b16 %v4323
    %v5772 = vunpack.c.l.b16 %v4324
    %v5773 = vunpack.c.h.b16 %v4324
    %v5774 = vunpack.c.l.b16 %v4325
    %v5775 = vunpack.c.h.b16 %v4325
    %v5776 = vunpack.c.l.b16 %v4326
    %v5777 = vunpack.c.h.b16 %v4326
    %v5778 = vunpack.c.l.b16 %v4327
    %v5779 = vunpack.c.h.b16 %v4327
    %v5780 = vunpack.c.l.b16 %v4328
    %v5781 = vunpack.c.h.b16 %v4328
    %v5782 = vunpack.c.l.b16 %v4329
    %v5783 = vunpack.c.h.b16 %v4329
    %v5784 = vunpack.c.l.b16 %v4330
    %v5785 = vunpack.c.h.b16 %v4330
    %v5786 = vunpack.c.l.b16 %v4331
    %v5787 = vunpack.c.h.b16 %v4331
    %v5788 = vunpack.c.l.b16 %v4332
    %v5789 = vunpack.c.h.b16 %v4332
    %v5790 = vunpack.c.l.b16 %v4333
    %v5791 = vunpack.c.h.b16 %v4333
    %v5792 = vunpack.c.l.b16 %v4334
    %v5793 = vunpack.c.h.b16 %v4334
    %v5794 = vunpack.c.l.b16 %v4335
    %v5795 = vunpack.c.h.b16 %v4335
    %v5796 = vunpack.c.l.b16 %v4336
    %v5797 = vunpack.c.h.b16 %v4336
    %v5798 = vunpack.c.l.b16 %v4337
    %v5799 = vunpack.c.h.b16 %v4337
    %v5800 = vunpack.c.l.b16 %v4338
    %v5801 = vunpack.c.h.b16 %v4338
    %v5802 = vunpack.c.l.b16 %v4339
    %v5803 = vunpack.c.h.b16 %v4339
    %v5804 = vunpack.c.l.b16 %v4340
    %v5805 = vunpack.c.h.b16 %v4340
    %v5806 = vunpack.c.l.b16 %v4341
    %v5807 = vunpack.c.h.b16 %v4341
    %v5808 = vunpack.c.l.b16 %v4342
    %v5809 = vunpack.c.h.b16 %v4342
    %v5810 = vunpack.c.l.b16 %v4343
    %v5811 = vunpack.c.h.b16 %v4343
    %v5812 = vunpack.c.l.b16 %v4344
    %v5813 = vunpack.c.h.b16 %v4344
    %v5814 = vunpack.c.l.b16 %v4345
    %v5815 = vunpack.c.h.b16 %v4345
    %v5816 = vunpack.c.l.b16 %v4346
    %v5817 = vunpack.c.h.b16 %v4346
    %v5818 = vunpack.c.l.b16 %v4347
    %v5819 = vunpack.c.h.b16 %v4347
    %v5820 = vunpack.c.l.b16 %v4348
    %v5821 = vunpack.c.h.b16 %v4348
    %v5822 = vunpack.c.l.b16 %v4349
    %v5823 = vunpack.c.h.b16 %v4349
    %v5824 = vunpack.c.l.b16 %v4350
    %v5825 = vunpack.c.h.b16 %v4350
    %v5826 = vunpack.c.l.b16 %v4351
    %v5827 = vunpack.c.h.b16 %v4351
    %v5828 = vunpack.c.l.b16 %v4352
    %v5829 = vunpack.c.h.b16 %v4352
    %v5830 = vunpack.c.l.b16 %v4353
    %v5831 = vunpack.c.h.b16 %v4353
    %v5832 = vunpack.c.l.b16 %v4354
    %v5833 = vunpack.c.h.b16 %v4354
    %v5834 = vunpack.c.l.b16 %v4355
    %v5835 = vunpack.c.h.b16 %v4355
    %v5836 = vunpack.c.l.b16 %v4356
    %v5837 = vunpack.c.h.b16 %v4356
    %v5838 = vunpack.c.l.b16 %v4357
    %v5839 = vunpack.c.h.b16 %v4357
    %v5840 = vunpack.c.l.b16 %v4358
    %v5841 = vunpack.c.h.b16 %v4358
    %v5842 = vunpack.c.l.b16 %v4359
    %v5843 = vunpack.c.h.b16 %v4359
    %v5844 = vunpack.c.l.b16 %v4360
    %v5845 = vunpack.c.h.b16 %v4360
    %v5846 = vunpack.c.l.b16 %v4361
    %v5847 = vunpack.c.h.b16 %v4361
    %v5848 = vunpack.c.l.b16 %v4362
    %v5849 = vunpack.c.h.b16 %v4362
    %v5850 = vunpack.c.l.b16 %v4363
    %v5851 = vunpack.c.h.b16 %v4363
    %v5852 = vunpack.c.l.b16 %v4364
    %v5853 = vunpack.c.h.b16 %v4364
    %v5854 = vunpack.c.l.b16 %v4365
    %v5855 = vunpack.c.h.b16 %v4365
    %v5856 = vunpack.c.l.b16 %v4366
    %v5857 = vunpack.c.h.b16 %v4366
    %v5858 = vunpack.c.l.b16 %v4367
    %v5859 = vunpack.c.h.b16 %v4367
    %v5860 = vunpack.c.l.b16 %v4368
    %v5861 = vunpack.c.h.b16 %v4368
    %v5862 = vunpack.c.l.b16 %v4369
    %v5863 = vunpack.c.h.b16 %v4369
    %v5864 = vunpack.c.l.b16 %v4370
    %v5865 = vunpack.c.h.b16 %v4370
    %v5866 = vunpack.c.l.b16 %v4371
    %v5867 = vunpack.c.h.b16 %v4371
    %v5868 = vunpack.c.l.b16 %v4372
    %v5869 = vunpack.c.h.b16 %v4372
    %v5870 = vunpack.c.l.b16 %v4373
    %v5871 = vunpack.c.h.b16 %v4373
    %v5872 = vunpack.c.l.b16 %v4374
    %v5873 = vunpack.c.h.b16 %v4374
    %v5874 = vunpack.c.l.b16 %v4375
    %v5875 = vunpack.c.h.b16 %v4375
    %v5876 = vunpack.c.l.b16 %v4376
    %v5877 = vunpack.c.h.b16 %v4376
    %v5878 = vunpack.c.l.b16 %v4377
    %v5879 = vunpack.c.h.b16 %v4377
    %v5880 = vunpack.c.l.b16 %v4378
    %v5881 = vunpack.c.h.b16 %v4378
    %v5882 = vunpack.c.l.b16 %v4379
    %v5883 = vunpack.c.h.b16 %v4379
    %v5884 = vunpack.c.l.b16 %v4380
    %v5885 = vunpack.c.h.b16 %v4380
    %v5886 = vunpack.c.l.b16 %v4381
    %v5887 = vunpack.c.h.b16 %v4381
    %v5888 = vunpack.c.l.b16 %v4382
    %v5889 = vunpack.c.h.b16 %v4382
    %v5890 = vunpack.c.l.b16 %v4383
    %v5891 = vunpack.c.h.b16 %v4383
    %v5892 = vunpack.c.l.b16 %v4384
    %v5893 = vunpack.c.h.b16 %v4384
    %v5894 = vunpack.c.l.b16 %v4385
    %v5895 = vunpack.c.h.b16 %v4385
    %v5896 = vunpack.c.l.b16 %v4386
    %v5897 = vunpack.c.h.b16 %v4386
    %v5898 = vunpack.c.l.b16 %v4387
    %v5899 = vunpack.c.h.b16 %v4387
    %v5900 = vunpack.c.l.b16 %v4388
    %v5901 = vunpack.c.h.b16 %v4388
    %v5902 = vunpack.c.l.b16 %v4389
    %v5903 = vunpack.c.h.b16 %v4389
    %v5904 = vunpack.c.l.b16 %v4390
    %v5905 = vunpack.c.h.b16 %v4390
    %v5906 = vunpack.c.l.b16 %v4391
    %v5907 = vunpack.c.h.b16 %v4391
    %v5908 = vunpack.c.l.b16 %v4392
    %v5909 = vunpack.c.h.b16 %v4392
    %v5910 = vunpack.c.l.b16 %v4393
    %v5911 = vunpack.c.h.b16 %v4393
    %v5912 = vunpack.c.l.b16 %v4394
    %v5913 = vunpack.c.h.b16 %v4394
    %v5914 = vunpack.c.l.b16 %v4395
    %v5915 = vunpack.c.h.b16 %v4395
    %v5916 = vunpack.c.l.b16 %v4396
    %v5917 = vunpack.c.h.b16 %v4396
    %v5918 = vunpack.c.l.b16 %v4397
    %v5919 = vunpack.c.h.b16 %v4397
    %v5920 = vunpack.c.l.b16 %v4398
    %v5921 = vunpack.c.h.b16 %v4398
    %v5922 = vunpack.c.l.b16 %v4399
    %v5923 = vunpack.c.h.b16 %v4399
    %v5924 = vunpack.c.l.b16 %v4400
    %v5925 = vunpack.c.h.b16 %v4400
    %v5926 = vunpack.c.l.b16 %v4401
    %v5927 = vunpack.c.h.b16 %v4401
    %v5928 = vunpack.c.l.b16 %v4402
    %v5929 = vunpack.c.h.b16 %v4402
    %v5930 = vunpack.c.l.b16 %v4403
    %v5931 = vunpack.c.h.b16 %v4403
    %v5932 = vunpack.c.l.b16 %v4404
    %v5933 = vunpack.c.h.b16 %v4404
    %v5934 = vunpack.c.l.b16 %v4405
    %v5935 = vunpack.c.h.b16 %v4405
    %v5936 = vunpack.c.l.b16 %v4406
    %v5937 = vunpack.c.h.b16 %v4406
    %v5938 = vunpack.c.l.b16 %v4407
    %v5939 = vunpack.c.h.b16 %v4407
    %v5940 = vunpack.c.l.b16 %v4408
    %v5941 = vunpack.c.h.b16 %v4408
    %v5942 = vunpack.c.l.b16 %v4409
    %v5943 = vunpack.c.h.b16 %v4409
    %v5944 = vunpack.c.l.b16 %v4410
    %v5945 = vunpack.c.h.b16 %v4410
    %v5946 = vunpack.c.l.b16 %v4411
    %v5947 = vunpack.c.h.b16 %v4411
    %v5948 = vunpack.c.l.b16 %v4412
    %v5949 = vunpack.c.h.b16 %v4412
    %v5950 = vunpack.c.l.b16 %v4413
    %v5951 = vunpack.c.h.b16 %v4413
    %v5952 = vunpack.c.l.b16 %v4414
    %v5953 = vunpack.c.h.b16 %v4414
    %v5954 = vunpack.c.l.b16 %v4415
    %v5955 = vunpack.c.h.b16 %v4415
    %v5956 = vunpack.c.l.b16 %v4416
    %v5957 = vunpack.c.h.b16 %v4416
    %v5958 = vunpack.c.l.b16 %v4417
    %v5959 = vunpack.c.h.b16 %v4417
    %v5960 = vunpack.c.l.b16 %v4418
    %v5961 = vunpack.c.h.b16 %v4418
    %v5962 = vunpack.c.l.b16 %v4419
    %v5963 = vunpack.c.h.b16 %v4419
    %v5964 = vunpack.c.l.b16 %v4420
    %v5965 = vunpack.c.h.b16 %v4420
    %v5966 = vunpack.c.l.b16 %v4421
    %v5967 = vunpack.c.h.b16 %v4421
    %v5968 = vunpack.c.l.b16 %v4422
    %v5969 = vunpack.c.h.b16 %v4422
    %v5970 = vunpack.c.l.b16 %v4423
    %v5971 = vunpack.c.h.b16 %v4423
    %v5972 = vunpack.c.l.b16 %v4424
    %v5973 = vunpack.c.h.b16 %v4424
    %v5974 = vunpack.c.l.b16 %v4425
    %v5975 = vunpack.c.h.b16 %v4425
    %v5976 = vunpack.c.l.b16 %v4426
    %v5977 = vunpack.c.h.b16 %v4426
    %v5978 = vunpack.c.l.b16 %v4427
    %v5979 = vunpack.c.h.b16 %v4427
    %v5980 = vunpack.c.l.b16 %v4428
    %v5981 = vunpack.c.h.b16 %v4428
    %v5982 = vunpack.c.l.b16 %v4429
    %v5983 = vunpack.c.h.b16 %v4429
    %v5984 = vunpack.c.l.b16 %v4430
    %v5985 = vunpack.c.h.b16 %v4430
    %v5986 = vunpack.c.l.b16 %v4431
    %v5987 = vunpack.c.h.b16 %v4431
    %v5988 = vunpack.c.l.b16 %v4432
    %v5989 = vunpack.c.h.b16 %v4432
    %v5990 = vunpack.c.l.b16 %v4433
    %v5991 = vunpack.c.h.b16 %v4433
    %v5992 = vunpack.c.l.b16 %v4434
    %v5993 = vunpack.c.h.b16 %v4434
    %v5994 = vunpack.c.l.b16 %v4435
    %v5995 = vunpack.c.h.b16 %v4435
    %v5996 = vunpack.c.l.b16 %v4436
    %v5997 = vunpack.c.h.b16 %v4436
    %v5998 = vunpack.c.l.b16 %v4437
    %v5999 = vunpack.c.h.b16 %v4437
    %v6000 = vunpack.c.l.b16 %v4438
    %v6001 = vunpack.c.h.b16 %v4438
    %v6002 = vunpack.c.l.b16 %v4439
    %v6003 = vunpack.c.h.b16 %v4439
    %v6004 = vunpack.c.l.b16 %v4440
    %v6005 = vunpack.c.h.b16 %v4440
    %v6006 = vunpack.c.l.b16 %v4441
    %v6007 = vunpack.c.h.b16 %v4441
    %v6008 = vunpack.c.l.b16 %v4442
    %v6009 = vunpack.c.h.b16 %v4442
    %v6010 = vunpack.c.l.b16 %v4443
    %v6011 = vunpack.c.h.b16 %v4443
    %v6012 = vunpack.c.l.b16 %v4444
    %v6013 = vunpack.c.h.b16 %v4444
    %v6014 = vunpack.c.l.b16 %v4445
    %v6015 = vunpack.c.h.b16 %v4445
    %v6016 = vunpack.c.l.b16 %v4446
    %v6017 = vunpack.c.h.b16 %v4446
    %v6018 = vunpack.c.l.b16 %v4447
    %v6019 = vunpack.c.h.b16 %v4447
    %v6020 = vunpack.c.l.b16 %v4448
    %v6021 = vunpack.c.h.b16 %v4448
    %v6022 = vunpack.c.l.b16 %v4449
    %v6023 = vunpack.c.h.b16 %v4449
    %v6024 = vunpack.c.l.b16 %v4450
    %v6025 = vunpack.c.h.b16 %v4450
    %v6026 = vunpack.c.l.b16 %v4451
    %v6027 = vunpack.c.h.b16 %v4451
    %v6028 = vunpack.c.l.b16 %v4452
    %v6029 = vunpack.c.h.b16 %v4452
    %v6030 = vunpack.c.l.b16 %v4453
    %v6031 = vunpack.c.h.b16 %v4453
    %v6032 = vpack.c.b16 %v5016, %v5008
    %v6033 = vpack.c.b16 %v5017, %v5009
    %v6034 = vpack.c.b16 %v5018, %v5010
    %v6035 = vpack.c.b16 %v5019, %v5011
    %v6036 = vpack.c.b16 %v5020, %v5012
    %v6037 = vpack.c.b16 %v5021, %v5013
    %v6038 = vpack.c.b16 %v5022, %v5014
    %v6039 = vpack.c.b16 %v5023, %v5015
    %v6040 = vpack.c.b16 %v5032, %v5024
    %v6041 = vpack.c.b16 %v5033, %v5025
    %v6042 = vpack.c.b16 %v5034, %v5026
    %v6043 = vpack.c.b16 %v5035, %v5027
    %v6044 = vpack.c.b16 %v5036, %v5028
    %v6045 = vpack.c.b16 %v5037, %v5029
    %v6046 = vpack.c.b16 %v5038, %v5030
    %v6047 = vpack.c.b16 %v5039, %v5031
    %v6048 = vpack.c.b16 %v5048, %v5040
    %v6049 = vpack.c.b16 %v5049, %v5041
    %v6050 = vpack.c.b16 %v5050, %v5042
    %v6051 = vpack.c.b16 %v5051, %v5043
    %v6052 = vpack.c.b16 %v5052, %v5044
    %v6053 = vpack.c.b16 %v5053, %v5045
    %v6054 = vpack.c.b16 %v5054, %v5046
    %v6055 = vpack.c.b16 %v5055, %v5047
    %v6056 = vpack.c.b16 %v5064, %v5056
    %v6057 = vpack.c.b16 %v5065, %v5057
    %v6058 = vpack.c.b16 %v5066, %v5058
    %v6059 = vpack.c.b16 %v5067, %v5059
    %v6060 = vpack.c.b16 %v5068, %v5060
    %v6061 = vpack.c.b16 %v5069, %v5061
    %v6062 = vpack.c.b16 %v5070, %v5062
    %v6063 = vpack.c.b16 %v5071, %v5063
    %v6064 = vpack.c.b16 %v5080, %v5072
    %v6065 = vpack.c.b16 %v5081, %v5073
    %v6066 = vpack.c.b16 %v5082, %v5074
    %v6067 = vpack.c.b16 %v5083, %v5075
    %v6068 = vpack.c.b16 %v5084, %v5076
    %v6069 = vpack.c.b16 %v5085, %v5077
    %v6070 = vpack.c.b16 %v5086, %v5078
    %v6071 = vpack.c.b16 %v5087, %v5079
    %v6072 = vpack.c.b16 %v5096, %v5088
    %v6073 = vpack.c.b16 %v5097, %v5089
    %v6074 = vpack.c.b16 %v5098, %v5090
    %v6075 = vpack.c.b16 %v5099, %v5091
    %v6076 = vpack.c.b16 %v5100, %v5092
    %v6077 = vpack.c.b16 %v5101, %v5093
    %v6078 = vpack.c.b16 %v5102, %v5094
    %v6079 = vpack.c.b16 %v5103, %v5095
    %v6080 = vpack.c.b16 %v5112, %v5104
    %v6081 = vpack.c.b16 %v5113, %v5105
    %v6082 = vpack.c.b16 %v5114, %v5106
    %v6083 = vpack.c.b16 %v5115, %v5107
    %v6084 = vpack.c.b16 %v5116, %v5108
    %v6085 = vpack.c.b16 %v5117, %v5109
    %v6086 = vpack.c.b16 %v5118, %v5110
    %v6087 = vpack.c.b16 %v5119, %v5111
    %v6088 = vpack.c.b16 %v5128, %v5120
    %v6089 = vpack.c.b16 %v5129, %v5121
    %v6090 = vpack.c.b16 %v5130, %v5122
    %v6091 = vpack.c.b16 %v5131, %v5123
    %v6092 = vpack.c.b16 %v5132, %v5124
    %v6093 = vpack.c.b16 %v5133, %v5125
    %v6094 = vpack.c.b16 %v5134, %v5126
    %v6095 = vpack.c.b16 %v5135, %v5127
    %v6096 = vpack.c.b16 %v5144, %v5136
    %v6097 = vpack.c.b16 %v5145, %v5137
    %v6098 = vpack.c.b16 %v5146, %v5138
    %v6099 = vpack.c.b16 %v5147, %v5139
    %v6100 = vpack.c.b16 %v5148, %v5140
    %v6101 = vpack.c.b16 %v5149, %v5141
    %v6102 = vpack.c.b16 %v5150, %v5142
    %v6103 = vpack.c.b16 %v5151, %v5143
    %v6104 = vpack.c.b16 %v5160, %v5152
    %v6105 = vpack.c.b16 %v5161, %v5153
    %v6106 = vpack.c.b16 %v5162, %v5154
    %v6107 = vpack.c.b16 %v5163, %v5155
    %v6108 = vpack.c.b16 %v5164, %v5156
    %v6109 = vpack.c.b16 %v5165, %v5157
    %v6110 = vpack.c.b16 %v5166, %v5158
    %v6111 = vpack.c.b16 %v5167, %v5159
    %v6112 = vpack.c.b16 %v5176, %v5168
    %v6113 = vpack.c.b16 %v5177, %v5169
    %v6114 = vpack.c.b16 %v5178, %v5170
    %v6115 = vpack.c.b16 %v5179, %v5171
    %v6116 = vpack.c.b16 %v5180, %v5172
    %v6117 = vpack.c.b16 %v5181, %v5173
    %v6118 = vpack.c.b16 %v5182, %v5174
    %v6119 = vpack.c.b16 %v5183, %v5175
    %v6120 = vpack.c.b16 %v5192, %v5184
    %v6121 = vpack.c.b16 %v5193, %v5185
    %v6122 = vpack.c.b16 %v5194, %v5186
    %v6123 = vpack.c.b16 %v5195, %v5187
    %v6124 = vpack.c.b16 %v5196, %v5188
    %v6125 = vpack.c.b16 %v5197, %v5189
    %v6126 = vpack.c.b16 %v5198, %v5190
    %v6127 = vpack.c.b16 %v5199, %v5191
    %v6128 = vpack.c.b16 %v5208, %v5200
    %v6129 = vpack.c.b16 %v5209, %v5201
    %v6130 = vpack.c.b16 %v5210, %v5202
    %v6131 = vpack.c.b16 %v5211, %v5203
    %v6132 = vpack.c.b16 %v5212, %v5204
    %v6133 = vpack.c.b16 %v5213, %v5205
    %v6134 = vpack.c.b16 %v5214, %v5206
    %v6135 = vpack.c.b16 %v5215, %v5207
    %v6136 = vpack.c.b16 %v5224, %v5216
    %v6137 = vpack.c.b16 %v5225, %v5217
    %v6138 = vpack.c.b16 %v5226, %v5218
    %v6139 = vpack.c.b16 %v5227, %v5219
    %v6140 = vpack.c.b16 %v5228, %v5220
    %v6141 = vpack.c.b16 %v5229, %v5221
    %v6142 = vpack.c.b16 %v5230, %v5222
    %v6143 = vpack.c.b16 %v5231, %v5223
    %v6144 = vpack.c.b16 %v5240, %v5232
    %v6145 = vpack.c.b16 %v5241, %v5233
    %v6146 = vpack.c.b16 %v5242, %v5234
    %v6147 = vpack.c.b16 %v5243, %v5235
    %v6148 = vpack.c.b16 %v5244, %v5236
    %v6149 = vpack.c.b16 %v5245, %v5237
    %v6150 = vpack.c.b16 %v5246, %v5238
    %v6151 = vpack.c.b16 %v5247, %v5239
    %v6152 = vpack.c.b16 %v5256, %v5248
    %v6153 = vpack.c.b16 %v5257, %v5249
    %v6154 = vpack.c.b16 %v5258, %v5250
    %v6155 = vpack.c.b16 %v5259, %v5251
    %v6156 = vpack.c.b16 %v5260, %v5252
    %v6157 = vpack.c.b16 %v5261, %v5253
    %v6158 = vpack.c.b16 %v5262, %v5254
    %v6159 = vpack.c.b16 %v5263, %v5255
    %v6160 = vpack.c.b16 %v5272, %v5264
    %v6161 = vpack.c.b16 %v5273, %v5265
    %v6162 = vpack.c.b16 %v5274, %v5266
    %v6163 = vpack.c.b16 %v5275, %v5267
    %v6164 = vpack.c.b16 %v5276, %v5268
    %v6165 = vpack.c.b16 %v5277, %v5269
    %v6166 = vpack.c.b16 %v5278, %v5270
    %v6167 = vpack.c.b16 %v5279, %v5271
    %v6168 = vpack.c.b16 %v5288, %v5280
    %v6169 = vpack.c.b16 %v5289, %v5281
    %v6170 = vpack.c.b16 %v5290, %v5282
    %v6171 = vpack.c.b16 %v5291, %v5283
    %v6172 = vpack.c.b16 %v5292, %v5284
    %v6173 = vpack.c.b16 %v5293, %v5285
    %v6174 = vpack.c.b16 %v5294, %v5286
    %v6175 = vpack.c.b16 %v5295, %v5287
    %v6176 = vpack.c.b16 %v5304, %v5296
    %v6177 = vpack.c.b16 %v5305, %v5297
    %v6178 = vpack.c.b16 %v5306, %v5298
    %v6179 = vpack.c.b16 %v5307, %v5299
    %v6180 = vpack.c.b16 %v5308, %v5300
    %v6181 = vpack.c.b16 %v5309, %v5301
    %v6182 = vpack.c.b16 %v5310, %v5302
    %v6183 = vpack.c.b16 %v5311, %v5303
    %v6184 = vpack.c.b16 %v5320, %v5312
    %v6185 = vpack.c.b16 %v5321, %v5313
    %v6186 = vpack.c.b16 %v5322, %v5314
    %v6187 = vpack.c.b16 %v5323, %v5315
    %v6188 = vpack.c.b16 %v5324, %v5316
    %v6189 = vpack.c.b16 %v5325, %v5317
    %v6190 = vpack.c.b16 %v5326, %v5318
    %v6191 = vpack.c.b16 %v5327, %v5319
    %v6192 = vpack.c.b16 %v5336, %v5328
    %v6193 = vpack.c.b16 %v5337, %v5329
    %v6194 = vpack.c.b16 %v5338, %v5330
    %v6195 = vpack.c.b16 %v5339, %v5331
    %v6196 = vpack.c.b16 %v5340, %v5332
    %v6197 = vpack.c.b16 %v5341, %v5333
    %v6198 = vpack.c.b16 %v5342, %v5334
    %v6199 = vpack.c.b16 %v5343, %v5335
    %v6200 = vpack.c.b16 %v5352, %v5344
    %v6201 = vpack.c.b16 %v5353, %v5345
    %v6202 = vpack.c.b16 %v5354, %v5346
    %v6203 = vpack.c.b16 %v5355, %v5347
    %v6204 = vpack.c.b16 %v5356, %v5348
    %v6205 = vpack.c.b16 %v5357, %v5349
    %v6206 = vpack.c.b16 %v5358, %v5350
    %v6207 = vpack.c.b16 %v5359, %v5351
    %v6208 = vpack.c.b16 %v5368, %v5360
    %v6209 = vpack.c.b16 %v5369, %v5361
    %v6210 = vpack.c.b16 %v5370, %v5362
    %v6211 = vpack.c.b16 %v5371, %v5363
    %v6212 = vpack.c.b16 %v5372, %v5364
    %v6213 = vpack.c.b16 %v5373, %v5365
    %v6214 = vpack.c.b16 %v5374, %v5366
    %v6215 = vpack.c.b16 %v5375, %v5367
    %v6216 = vpack.c.b16 %v5384, %v5376
    %v6217 = vpack.c.b16 %v5385, %v5377
    %v6218 = vpack.c.b16 %v5386, %v5378
    %v6219 = vpack.c.b16 %v5387, %v5379
    %v6220 = vpack.c.b16 %v5388, %v5380
    %v6221 = vpack.c.b16 %v5389, %v5381
    %v6222 = vpack.c.b16 %v5390, %v5382
    %v6223 = vpack.c.b16 %v5391, %v5383
    %v6224 = vpack.c.b16 %v5400, %v5392
    %v6225 = vpack.c.b16 %v5401, %v5393
    %v6226 = vpack.c.b16 %v5402, %v5394
    %v6227 = vpack.c.b16 %v5403, %v5395
    %v6228 = vpack.c.b16 %v5404, %v5396
    %v6229 = vpack.c.b16 %v5405, %v5397
    %v6230 = vpack.c.b16 %v5406, %v5398
    %v6231 = vpack.c.b16 %v5407, %v5399
    %v6232 = vpack.c.b16 %v5416, %v5408
    %v6233 = vpack.c.b16 %v5417, %v5409
    %v6234 = vpack.c.b16 %v5418, %v5410
    %v6235 = vpack.c.b16 %v5419, %v5411
    %v6236 = vpack.c.b16 %v5420, %v5412
    %v6237 = vpack.c.b16 %v5421, %v5413
    %v6238 = vpack.c.b16 %v5422, %v5414
    %v6239 = vpack.c.b16 %v5423, %v5415
    %v6240 = vpack.c.b16 %v5432, %v5424
    %v6241 = vpack.c.b16 %v5433, %v5425
    %v6242 = vpack.c.b16 %v5434, %v5426
    %v6243 = vpack.c.b16 %v5435, %v5427
    %v6244 = vpack.c.b16 %v5436, %v5428
    %v6245 = vpack.c.b16 %v5437, %v5429
    %v6246 = vpack.c.b16 %v5438, %v5430
    %v6247 = vpack.c.b16 %v5439, %v5431
    %v6248 = vpack.c.b16 %v5448, %v5440
    %v6249 = vpack.c.b16 %v5449, %v5441
    %v6250 = vpack.c.b16 %v5450, %v5442
    %v6251 = vpack.c.b16 %v5451, %v5443
    %v6252 = vpack.c.b16 %v5452, %v5444
    %v6253 = vpack.c.b16 %v5453, %v5445
    %v6254 = vpack.c.b16 %v5454, %v5446
    %v6255 = vpack.c.b16 %v5455, %v5447
    %v6256 = vpack.c.b16 %v5464, %v5456
    %v6257 = vpack.c.b16 %v5465, %v5457
    %v6258 = vpack.c.b16 %v5466, %v5458
    %v6259 = vpack.c.b16 %v5467, %v5459
    %v6260 = vpack.c.b16 %v5468, %v5460
    %v6261 = vpack.c.b16 %v5469, %v5461
    %v6262 = vpack.c.b16 %v5470, %v5462
    %v6263 = vpack.c.b16 %v5471, %v5463
    %v6264 = vpack.c.b16 %v5480, %v5472
    %v6265 = vpack.c.b16 %v5481, %v5473
    %v6266 = vpack.c.b16 %v5482, %v5474
    %v6267 = vpack.c.b16 %v5483, %v5475
    %v6268 = vpack.c.b16 %v5484, %v5476
    %v6269 = vpack.c.b16 %v5485, %v5477
    %v6270 = vpack.c.b16 %v5486, %v5478
    %v6271 = vpack.c.b16 %v5487, %v5479
    %v6272 = vpack.c.b16 %v5496, %v5488
    %v6273 = vpack.c.b16 %v5497, %v5489
    %v6274 = vpack.c.b16 %v5498, %v5490
    %v6275 = vpack.c.b16 %v5499, %v5491
    %v6276 = vpack.c.b16 %v5500, %v5492
    %v6277 = vpack.c.b16 %v5501, %v5493
    %v6278 = vpack.c.b16 %v5502, %v5494
    %v6279 = vpack.c.b16 %v5503, %v5495
    %v6280 = vpack.c.b16 %v5512, %v5504
    %v6281 = vpack.c.b16 %v5513, %v5505
    %v6282 = vpack.c.b16 %v5514, %v5506
    %v6283 = vpack.c.b16 %v5515, %v5507
    %v6284 = vpack.c.b16 %v5516, %v5508
    %v6285 = vpack.c.b16 %v5517, %v5509
    %v6286 = vpack.c.b16 %v5518, %v5510
    %v6287 = vpack.c.b16 %v5519, %v5511
    %v6288 = vpack.c.b16 %v5528, %v5520
    %v6289 = vpack.c.b16 %v5529, %v5521
    %v6290 = vpack.c.b16 %v5530, %v5522
    %v6291 = vpack.c.b16 %v5531, %v5523
    %v6292 = vpack.c.b16 %v5532, %v5524
    %v6293 = vpack.c.b16 %v5533, %v5525
    %v6294 = vpack.c.b16 %v5534, %v5526
    %v6295 = vpack.c.b16 %v5535, %v5527
    %v6296 = vpack.c.b16 %v5544, %v5536
    %v6297 = vpack.c.b16 %v5545, %v5537
    %v6298 = vpack.c.b16 %v5546, %v5538
    %v6299 = vpack.c.b16 %v5547, %v5539
    %v6300 = vpack.c.b16 %v5548, %v5540
    %v6301 = vpack.c.b16 %v5549, %v5541
    %v6302 = vpack.c.b16 %v5550, %v5542
    %v6303 = vpack.c.b16 %v5551, %v5543
    %v6304 = vpack.c.b16 %v5560, %v5552
    %v6305 = vpack.c.b16 %v5561, %v5553
    %v6306 = vpack.c.b16 %v5562, %v5554
    %v6307 = vpack.c.b16 %v5563, %v5555
    %v6308 = vpack.c.b16 %v5564, %v5556
    %v6309 = vpack.c.b16 %v5565, %v5557
    %v6310 = vpack.c.b16 %v5566, %v5558
    %v6311 = vpack.c.b16 %v5567, %v5559
    %v6312 = vpack.c.b16 %v5576, %v5568
    %v6313 = vpack.c.b16 %v5577, %v5569
    %v6314 = vpack.c.b16 %v5578, %v5570
    %v6315 = vpack.c.b16 %v5579, %v5571
    %v6316 = vpack.c.b16 %v5580, %v5572
    %v6317 = vpack.c.b16 %v5581, %v5573
    %v6318 = vpack.c.b16 %v5582, %v5574
    %v6319 = vpack.c.b16 %v5583, %v5575
    %v6320 = vpack.c.b16 %v5592, %v5584
    %v6321 = vpack.c.b16 %v5593, %v5585
    %v6322 = vpack.c.b16 %v5594, %v5586
    %v6323 = vpack.c.b16 %v5595, %v5587
    %v6324 = vpack.c.b16 %v5596, %v5588
    %v6325 = vpack.c.b16 %v5597, %v5589
    %v6326 = vpack.c.b16 %v5598, %v5590
    %v6327 = vpack.c.b16 %v5599, %v5591
    %v6328 = vpack.c.b16 %v5608, %v5600
    %v6329 = vpack.c.b16 %v5609, %v5601
    %v6330 = vpack.c.b16 %v5610, %v5602
    %v6331 = vpack.c.b16 %v5611, %v5603
    %v6332 = vpack.c.b16 %v5612, %v5604
    %v6333 = vpack.c.b16 %v5613, %v5605
    %v6334 = vpack.c.b16 %v5614, %v5606
    %v6335 = vpack.c.b16 %v5615, %v5607
    %v6336 = vpack.c.b16 %v5624, %v5616
    %v6337 = vpack.c.b16 %v5625, %v5617
    %v6338 = vpack.c.b16 %v5626, %v5618
    %v6339 = vpack.c.b16 %v5627, %v5619
    %v6340 = vpack.c.b16 %v5628, %v5620
    %v6341 = vpack.c.b16 %v5629, %v5621
    %v6342 = vpack.c.b16 %v5630, %v5622
    %v6343 = vpack.c.b16 %v5631, %v5623
    %v6344 = vpack.c.b16 %v5640, %v5632
    %v6345 = vpack.c.b16 %v5641, %v5633
    %v6346 = vpack.c.b16 %v5642, %v5634
    %v6347 = vpack.c.b16 %v5643, %v5635
    %v6348 = vpack.c.b16 %v5644, %v5636
    %v6349 = vpack.c.b16 %v5645, %v5637
    %v6350 = vpack.c.b16 %v5646, %v5638
    %v6351 = vpack.c.b16 %v5647, %v5639
    %v6352 = vpack.c.b16 %v5656, %v5648
    %v6353 = vpack.c.b16 %v5657, %v5649
    %v6354 = vpack.c.b16 %v5658, %v5650
    %v6355 = vpack.c.b16 %v5659, %v5651
    %v6356 = vpack.c.b16 %v5660, %v5652
    %v6357 = vpack.c.b16 %v5661, %v5653
    %v6358 = vpack.c.b16 %v5662, %v5654
    %v6359 = vpack.c.b16 %v5663, %v5655
    %v6360 = vpack.c.b16 %v5672, %v5664
    %v6361 = vpack.c.b16 %v5673, %v5665
    %v6362 = vpack.c.b16 %v5674, %v5666
    %v6363 = vpack.c.b16 %v5675, %v5667
    %v6364 = vpack.c.b16 %v5676, %v5668
    %v6365 = vpack.c.b16 %v5677, %v5669
    %v6366 = vpack.c.b16 %v5678, %v5670
    %v6367 = vpack.c.b16 %v5679, %v5671
    %v6368 = vpack.c.b16 %v5688, %v5680
    %v6369 = vpack.c.b16 %v5689, %v5681
    %v6370 = vpack.c.b16 %v5690, %v5682
    %v6371 = vpack.c.b16 %v5691, %v5683
    %v6372 = vpack.c.b16 %v5692, %v5684
    %v6373 = vpack.c.b16 %v5693, %v5685
    %v6374 = vpack.c.b16 %v5694, %v5686
    %v6375 = vpack.c.b16 %v5695, %v5687
    %v6376 = vpack.c.b16 %v5704, %v5696
    %v6377 = vpack.c.b16 %v5705, %v5697
    %v6378 = vpack.c.b16 %v5706, %v5698
    %v6379 = vpack.c.b16 %v5707, %v5699
    %v6380 = vpack.c.b16 %v5708, %v5700
    %v6381 = vpack.c.b16 %v5709, %v5701
    %v6382 = vpack.c.b16 %v5710, %v5702
    %v6383 = vpack.c.b16 %v5711, %v5703
    %v6384 = vpack.c.b16 %v5720, %v5712
    %v6385 = vpack.c.b16 %v5721, %v5713
    %v6386 = vpack.c.b16 %v5722, %v5714
    %v6387 = vpack.c.b16 %v5723, %v5715
    %v6388 = vpack.c.b16 %v5724, %v5716
    %v6389 = vpack.c.b16 %v5725, %v5717
    %v6390 = vpack.c.b16 %v5726, %v5718
    %v6391 = vpack.c.b16 %v5727, %v5719
    %v6392 = vpack.c.b16 %v5736, %v5728
    %v6393 = vpack.c.b16 %v5737, %v5729
    %v6394 = vpack.c.b16 %v5738, %v5730
    %v6395 = vpack.c.b16 %v5739, %v5731
    %v6396 = vpack.c.b16 %v5740, %v5732
    %v6397 = vpack.c.b16 %v5741, %v5733
    %v6398 = vpack.c.b16 %v5742, %v5734
    %v6399 = vpack.c.b16 %v5743, %v5735
    %v6400 = vpack.c.b16 %v5752, %v5744
    %v6401 = vpack.c.b16 %v5753, %v5745
    %v6402 = vpack.c.b16 %v5754, %v5746
    %v6403 = vpack.c.b16 %v5755, %v5747
    %v6404 = vpack.c.b16 %v5756, %v5748
    %v6405 = vpack.c.b16 %v5757, %v5749
    %v6406 = vpack.c.b16 %v5758, %v5750
    %v6407 = vpack.c.b16 %v5759, %v5751
    %v6408 = vpack.c.b16 %v5768, %v5760
    %v6409 = vpack.c.b16 %v5769, %v5761
    %v6410 = vpack.c.b16 %v5770, %v5762
    %v6411 = vpack.c.b16 %v5771, %v5763
    %v6412 = vpack.c.b16 %v5772, %v5764
    %v6413 = vpack.c.b16 %v5773, %v5765
    %v6414 = vpack.c.b16 %v5774, %v5766
    %v6415 = vpack.c.b16 %v5775, %v5767
    %v6416 = vpack.c.b16 %v5784, %v5776
    %v6417 = vpack.c.b16 %v5785, %v5777
    %v6418 = vpack.c.b16 %v5786, %v5778
    %v6419 = vpack.c.b16 %v5787, %v5779
    %v6420 = vpack.c.b16 %v5788, %v5780
    %v6421 = vpack.c.b16 %v5789, %v5781
    %v6422 = vpack.c.b16 %v5790, %v5782
    %v6423 = vpack.c.b16 %v5791, %v5783
    %v6424 = vpack.c.b16 %v5800, %v5792
    %v6425 = vpack.c.b16 %v5801, %v5793
    %v6426 = vpack.c.b16 %v5802, %v5794
    %v6427 = vpack.c.b16 %v5803, %v5795
    %v6428 = vpack.c.b16 %v5804, %v5796
    %v6429 = vpack.c.b16 %v5805, %v5797
    %v6430 = vpack.c.b16 %v5806, %v5798
    %v6431 = vpack.c.b16 %v5807, %v5799
    %v6432 = vpack.c.b16 %v5816, %v5808
    %v6433 = vpack.c.b16 %v5817, %v5809
    %v6434 = vpack.c.b16 %v5818, %v5810
    %v6435 = vpack.c.b16 %v5819, %v5811
    %v6436 = vpack.c.b16 %v5820, %v5812
    %v6437 = vpack.c.b16 %v5821, %v5813
    %v6438 = vpack.c.b16 %v5822, %v5814
    %v6439 = vpack.c.b16 %v5823, %v5815
    %v6440 = vpack.c.b16 %v5832, %v5824
    %v6441 = vpack.c.b16 %v5833, %v5825
    %v6442 = vpack.c.b16 %v5834, %v5826
    %v6443 = vpack.c.b16 %v5835, %v5827
    %v6444 = vpack.c.b16 %v5836, %v5828
    %v6445 = vpack.c.b16 %v5837, %v5829
    %v6446 = vpack.c.b16 %v5838, %v5830
    %v6447 = vpack.c.b16 %v5839, %v5831
    %v6448 = vpack.c.b16 %v5848, %v5840
    %v6449 = vpack.c.b16 %v5849, %v5841
    %v6450 = vpack.c.b16 %v5850, %v5842
    %v6451 = vpack.c.b16 %v5851, %v5843
    %v6452 = vpack.c.b16 %v5852, %v5844
    %v6453 = vpack.c.b16 %v5853, %v5845
    %v6454 = vpack.c.b16 %v5854, %v5846
    %v6455 = vpack.c.b16 %v5855, %v5847
    %v6456 = vpack.c.b16 %v5864, %v5856
    %v6457 = vpack.c.b16 %v5865, %v5857
    %v6458 = vpack.c.b16 %v5866, %v5858
    %v6459 = vpack.c.b16 %v5867, %v5859
    %v6460 = vpack.c.b16 %v5868, %v5860
    %v6461 = vpack.c.b16 %v5869, %v5861
    %v6462 = vpack.c.b16 %v5870, %v5862
    %v6463 = vpack.c.b16 %v5871, %v5863
    %v6464 = vpack.c.b16 %v5880, %v5872
    %v6465 = vpack.c.b16 %v5881, %v5873
    %v6466 = vpack.c.b16 %v5882, %v5874
    %v6467 = vpack.c.b16 %v5883, %v5875
    %v6468 = vpack.c.b16 %v5884, %v5876
    %v6469 = vpack.c.b16 %v5885, %v5877
    %v6470 = vpack.c.b16 %v5886, %v5878
    %v6471 = vpack.c.b16 %v5887, %v5879
    %v6472 = vpack.c.b16 %v5896, %v5888
    %v6473 = vpack.c.b16 %v5897, %v5889
    %v6474 = vpack.c.b16 %v5898, %v5890
    %v6475 = vpack.c.b16 %v5899, %v5891
    %v6476 = vpack.c.b16 %v5900, %v5892
    %v6477 = vpack.c.b16 %v5901, %v5893
    %v6478 = vpack.c.b16 %v5902, %v5894
    %v6479 = vpack.c.b16 %v5903, %v5895
    %v6480 = vpack.c.b16 %v5912, %v5904
    %v6481 = vpack.c.b16 %v5913, %v5905
    %v6482 = vpack.c.b16 %v5914, %v5906
    %v6483 = vpack.c.b16 %v5915, %v5907
    %v6484 = vpack.c.b16 %v5916, %v5908
    %v6485 = vpack.c.b16 %v5917, %v5909
    %v6486 = vpack.c.b16 %v5918, %v5910
    %v6487 = vpack.c.b16 %v5919, %v5911
    %v6488 = vpack.c.b16 %v5928, %v5920
    %v6489 = vpack.c.b16 %v5929, %v5921
    %v6490 = vpack.c.b16 %v5930, %v5922
    %v6491 = vpack.c.b16 %v5931, %v5923
    %v6492 = vpack.c.b16 %v5932, %v5924
    %v6493 = vpack.c.b16 %v5933, %v5925
    %v6494 = vpack.c.b16 %v5934, %v5926
    %v6495 = vpack.c.b16 %v5935, %v5927
    %v6496 = vpack.c.b16 %v5944, %v5936
    %v6497 = vpack.c.b16 %v5945, %v5937
    %v6498 = vpack.c.b16 %v5946, %v5938
    %v6499 = vpack.c.b16 %v5947, %v5939
    %v6500 = vpack.c.b16 %v5948, %v5940
    %v6501 = vpack.c.b16 %v5949, %v5941
    %v6502 = vpack.c.b16 %v5950, %v5942
    %v6503 = vpack.c.b16 %v5951, %v5943
    %v6504 = vpack.c.b16 %v5960, %v5952
    %v6505 = vpack.c.b16 %v5961, %v5953
    %v6506 = vpack.c.b16 %v5962, %v5954
    %v6507 = vpack.c.b16 %v5963, %v5955
    %v6508 = vpack.c.b16 %v5964, %v5956
    %v6509 = vpack.c.b16 %v5965, %v5957
    %v6510 = vpack.c.b16 %v5966, %v5958
    %v6511 = vpack.c.b16 %v5967, %v5959
    %v6512 = vpack.c.b16 %v5976, %v5968
    %v6513 = vpack.c.b16 %v5977, %v5969
    %v6514 = vpack.c.b16 %v5978, %v5970
    %v6515 = vpack.c.b16 %v5979, %v5971
    %v6516 = vpack.c.b16 %v5980, %v5972
    %v6517 = vpack.c.b16 %v5981, %v5973
    %v6518 = vpack.c.b16 %v5982, %v5974
    %v6519 = vpack.c.b16 %v5983, %v5975
    %v6520 = vpack.c.b16 %v5992, %v5984
    %v6521 = vpack.c.b16 %v5993, %v5985
    %v6522 = vpack.c.b16 %v5994, %v5986
    %v6523 = vpack.c.b16 %v5995, %v5987
    %v6524 = vpack.c.b16 %v5996, %v5988
    %v6525 = vpack.c.b16 %v5997, %v5989
    %v6526 = vpack.c.b16 %v5998, %v5990
    %v6527 = vpack.c.b16 %v5999, %v5991
    %v6528 = vpack.c.b16 %v6008, %v6000
    %v6529 = vpack.c.b16 %v6009, %v6001
    %v6530 = vpack.c.b16 %v6010, %v6002
    %v6531 = vpack.c.b16 %v6011, %v6003
    %v6532 = vpack.c.b16 %v6012, %v6004
    %v6533 = vpack.c.b16 %v6013, %v6005
    %v6534 = vpack.c.b16 %v6014, %v6006
    %v6535 = vpack.c.b16 %v6015, %v6007
    %v6536 = vpack.c.b16 %v6024, %v6016
    %v6537 = vpack.c.b16 %v6025, %v6017
    %v6538 = vpack.c.b16 %v6026, %v6018
    %v6539 = vpack.c.b16 %v6027, %v6019
    %v6540 = vpack.c.b16 %v6028, %v6020
    %v6541 = vpack.c.b16 %v6029, %v6021
    %v6542 = vpack.c.b16 %v6030, %v6022
    %v6543 = vpack.c.b16 %v6031, %v6023
    %7056 = vmatprep.subr.bf16.mxu0 %v6033
    %7057 = vmatpush1.bf16.msra.mxu0 %v6032
    %7058 = vmatprep.subr.bf16.mxu0 %v6041
    %7059 = vmatpush1.bf16.msra.mxu0 %v6040
    %7060 = vmatprep.subr.bf16.mxu0 %v6049
    %7061 = vmatpush1.bf16.msra.mxu0 %v6048
    %7062 = vmatprep.subr.bf16.mxu0 %v6057
    %7063 = vmatpush1.bf16.msra.mxu0 %v6056
    %7064 = vmatprep.subr.bf16.mxu0 %v6065
    %7065 = vmatpush1.bf16.msra.mxu0 %v6064
    %7066 = vmatprep.subr.bf16.mxu0 %v6073
    %7067 = vmatpush1.bf16.msra.mxu0 %v6072
    %7068 = vmatprep.subr.bf16.mxu0 %v6081
    %7069 = vmatpush1.bf16.msra.mxu0 %v6080
    %7070 = vmatprep.subr.bf16.mxu0 %v6089
    %7071 = vmatpush1.bf16.msra.mxu0 %v6088
    %7072 = vmatprep.subr.bf16.mxu0 %v6097
    %7073 = vmatpush1.bf16.msra.mxu0 %v6096
    %7074 = vmatprep.subr.bf16.mxu0 %v6105
    %7075 = vmatpush1.bf16.msra.mxu0 %v6104
    %7076 = vmatprep.subr.bf16.mxu0 %v6113
    %7077 = vmatpush1.bf16.msra.mxu0 %v6112
    %7078 = vmatprep.subr.bf16.mxu0 %v6121
    %7079 = vmatpush1.bf16.msra.mxu0 %v6120
    %7080 = vmatprep.subr.bf16.mxu0 %v6129
    %7081 = vmatpush1.bf16.msra.mxu0 %v6128
    %7082 = vmatprep.subr.bf16.mxu0 %v6137
    %7083 = vmatpush1.bf16.msra.mxu0 %v6136
    %7084 = vmatprep.subr.bf16.mxu0 %v6145
    %7085 = vmatpush1.bf16.msra.mxu0 %v6144
    %7086 = vmatprep.subr.bf16.mxu0 %v6153
    %7087 = vmatpush1.bf16.msra.mxu0 %v6152
    %7088 = vmatprep.mubr.bf16.mxu0 %v3935
    %7089 = vmatmul.mubr.bf16.gmra.mrb[0].mxu0 %v3934
    %v7090 = vpop.f32.mrb[0].mxu0
    %v7091 = vadd.f32 %v4459, %v7090
    %v7092 = vpop.f32.mrb[0].mxu0
    %v7093 = vadd.f32 %v4463, %v7092
    %v7094 = vpop.f32.mrb[0].mxu0
    %v7095 = vpop.f32.mrb[0].mxu0
    %7096 = vdwg.mxu0
    %7097 = vmatprep.subr.bf16.mxu0 %v6161
    %7098 = vmatpush1.bf16.msra.mxu0 %v6160
    %7099 = vmatprep.subr.bf16.mxu0 %v6169
    %7100 = vmatpush1.bf16.msra.mxu0 %v6168
    %7101 = vmatprep.subr.bf16.mxu0 %v6177
    %7102 = vmatpush1.bf16.msra.mxu0 %v6176
    %7103 = vmatprep.subr.bf16.mxu0 %v6185
    %7104 = vmatpush1.bf16.msra.mxu0 %v6184
    %7105 = vmatprep.subr.bf16.mxu0 %v6193
    %7106 = vmatpush1.bf16.msra.mxu0 %v6192
    %7107 = vmatprep.subr.bf16.mxu0 %v6201
    %7108 = vmatpush1.bf16.msra.mxu0 %v6200
    %7109 = vmatprep.subr.bf16.mxu0 %v6209
    %7110 = vmatpush1.bf16.msra.mxu0 %v6208
    %7111 = vmatprep.subr.bf16.mxu0 %v6217
    %7112 = vmatpush1.bf16.msra.mxu0 %v6216
    %7113 = vmatprep.subr.bf16.mxu0 %v6225
    %7114 = vmatpush1.bf16.msra.mxu0 %v6224
    %7115 = vmatprep.subr.bf16.mxu0 %v6233
    %7116 = vmatpush1.bf16.msra.mxu0 %v6232
    %7117 = vmatprep.subr.bf16.mxu0 %v6241
    %7118 = vmatpush1.bf16.msra.mxu0 %v6240
    %7119 = vmatprep.subr.bf16.mxu0 %v6249
    %7120 = vmatpush1.bf16.msra.mxu0 %v6248
    %7121 = vmatprep.subr.bf16.mxu0 %v6257
    %7122 = vmatpush1.bf16.msra.mxu0 %v6256
    %7123 = vmatprep.subr.bf16.mxu0 %v6265
    %7124 = vmatpush1.bf16.msra.mxu0 %v6264
    %7125 = vmatprep.subr.bf16.mxu0 %v6273
    %7126 = vmatpush1.bf16.msra.mxu0 %v6272
    %7127 = vmatprep.subr.bf16.mxu0 %v6281
    %7128 = vmatpush1.bf16.msra.mxu0 %v6280
    %7129 = vmatprep.mubr.bf16.mxu0 %v3937
    %7130 = vmatmul.mubr.bf16.gmra.mrb[0].mxu0 %v3936
    %v7131 = vpop.f32.mrb[0].mxu0
    %v7132 = vadd.f32 %v7091, %v7131
    %v7133 = vpop.f32.mrb[0].mxu0
    %v7134 = vadd.f32 %v7093, %v7133
    %v7135 = vpop.f32.mrb[0].mxu0
    %v7136 = vpop.f32.mrb[0].mxu0
    %7137 = vdwg.mxu0
    %7138 = vmatprep.subr.bf16.mxu0 %v6289
    %7139 = vmatpush1.bf16.msra.mxu0 %v6288
    %7140 = vmatprep.subr.bf16.mxu0 %v6297
    %7141 = vmatpush1.bf16.msra.mxu0 %v6296
    %7142 = vmatprep.subr.bf16.mxu0 %v6305
    %7143 = vmatpush1.bf16.msra.mxu0 %v6304
    %7144 = vmatprep.subr.bf16.mxu0 %v6313
    %7145 = vmatpush1.bf16.msra.mxu0 %v6312
    %7146 = vmatprep.subr.bf16.mxu0 %v6321
    %7147 = vmatpush1.bf16.msra.mxu0 %v6320
    %7148 = vmatprep.subr.bf16.mxu0 %v6329
    %7149 = vmatpush1.bf16.msra.mxu0 %v6328
    %7150 = vmatprep.subr.bf16.mxu0 %v6337
    %7151 = vmatpush1.bf16.msra.mxu0 %v6336
    %7152 = vmatprep.subr.bf16.mxu0 %v6345
    %7153 = vmatpush1.bf16.msra.mxu0 %v6344
    %7154 = vmatprep.subr.bf16.mxu0 %v6353
    %7155 = vmatpush1.bf16.msra.mxu0 %v6352
    %7156 = vmatprep.subr.bf16.mxu0 %v6361
    %7157 = vmatpush1.bf16.msra.mxu0 %v6360
    %7158 = vmatprep.subr.bf16.mxu0 %v6369
    %7159 = vmatpush1.bf16.msra.mxu0 %v6368
    %7160 = vmatprep.subr.bf16.mxu0 %v6377
    %7161 = vmatpush1.bf16.msra.mxu0 %v6376
    %7162 = vmatprep.subr.bf16.mxu0 %v6385
    %7163 = vmatpush1.bf16.msra.mxu0 %v6384
    %7164 = vmatprep.subr.bf16.mxu0 %v6393
    %7165 = vmatpush1.bf16.msra.mxu0 %v6392
    %7166 = vmatprep.subr.bf16.mxu0 %v6401
    %7167 = vmatpush1.bf16.msra.mxu0 %v6400
    %7168 = vmatprep.subr.bf16.mxu0 %v6409
    %7169 = vmatpush1.bf16.msra.mxu0 %v6408
    %7170 = vmatprep.mubr.bf16.mxu0 %v3939
    %7171 = vmatmul.mubr.bf16.gmra.mrb[0].mxu0 %v3938
    %v7172 = vpop.f32.mrb[0].mxu0
    %v7173 = vadd.f32 %v7132, %v7172
    %v7174 = vpop.f32.mrb[0].mxu0
    %v7175 = vadd.f32 %v7134, %v7174
    %v7176 = vpop.f32.mrb[0].mxu0
    %v7177 = vpop.f32.mrb[0].mxu0
    %7178 = vdwg.mxu0
    %7179 = vmatprep.subr.bf16.mxu0 %v6417
    %7180 = vmatpush1.bf16.msra.mxu0 %v6416
    %7181 = vmatprep.subr.bf16.mxu0 %v6425
    %7182 = vmatpush1.bf16.msra.mxu0 %v6424
    %7183 = vmatprep.subr.bf16.mxu0 %v6433
    %7184 = vmatpush1.bf16.msra.mxu0 %v6432
    %7185 = vmatprep.subr.bf16.mxu0 %v6441
    %7186 = vmatpush1.bf16.msra.mxu0 %v6440
    %7187 = vmatprep.subr.bf16.mxu0 %v6449
    %7188 = vmatpush1.bf16.msra.mxu0 %v6448
    %7189 = vmatprep.subr.bf16.mxu0 %v6457
    %7190 = vmatpush1.bf16.msra.mxu0 %v6456
    %7191 = vmatprep.subr.bf16.mxu0 %v6465
    %7192 = vmatpush1.bf16.msra.mxu0 %v6464
    %7193 = vmatprep.subr.bf16.mxu0 %v6473
    %7194 = vmatpush1.bf16.msra.mxu0 %v6472
    %7195 = vmatprep.subr.bf16.mxu0 %v6481
    %7196 = vmatpush1.bf16.msra.mxu0 %v6480
    %7197 = vmatprep.subr.bf16.mxu0 %v6489
    %7198 = vmatpush1.bf16.msra.mxu0 %v6488
    %7199 = vmatprep.subr.bf16.mxu0 %v6497
    %7200 = vmatpush1.bf16.msra.mxu0 %v6496
    %7201 = vmatprep.subr.bf16.mxu0 %v6505
    %7202 = vmatpush1.bf16.msra.mxu0 %v6504
    %7203 = vmatprep.subr.bf16.mxu0 %v6513
    %7204 = vmatpush1.bf16.msra.mxu0 %v6512
    %7205 = vmatprep.subr.bf16.mxu0 %v6521
    %7206 = vmatpush1.bf16.msra.mxu0 %v6520
    %7207 = vmatprep.subr.bf16.mxu0 %v6529
    %7208 = vmatpush1.bf16.msra.mxu0 %v6528
    %7209 = vmatprep.subr.bf16.mxu0 %v6537
    %7210 = vmatpush1.bf16.msra.mxu0 %v6536
    %7211 = vmatprep.mubr.bf16.mxu0 %v3941
    %7212 = vmatmul.mubr.bf16.gmra.mrb[0].mxu0 %v3940
    %v7213 = vpop.f32.mrb[0].mxu0
    %v7214 = vadd.f32 %v7173, %v7213
    %v7215 = vpop.f32.mrb[0].mxu0
    %v7216 = vadd.f32 %v7175, %v7215
    %v7217 = vpop.f32.mrb[0].mxu0
    %v7218 = vpop.f32.mrb[0].mxu0
    %7219 = vdwg.mxu0
    %7220 = vmatprep.subr.bf16.mxu0 %v6035
    %7221 = vmatpush1.bf16.msra.mxu0 %v6034
    %7222 = vmatprep.subr.bf16.mxu0 %v6043
    %7223 = vmatpush1.bf16.msra.mxu0 %v6042
    %7224 = vmatprep.subr.bf16.mxu0 %v6051
    %7225 = vmatpush1.bf16.msra.mxu0 %v6050
    %7226 = vmatprep.subr.bf16.mxu0 %v6059
    %7227 = vmatpush1.bf16.msra.mxu0 %v6058
    %7228 = vmatprep.subr.bf16.mxu0 %v6067
    %7229 = vmatpush1.bf16.msra.mxu0 %v6066
    %7230 = vmatprep.subr.bf16.mxu0 %v6075
    %7231 = vmatpush1.bf16.msra.mxu0 %v6074
    %7232 = vmatprep.subr.bf16.mxu0 %v6083
    %7233 = vmatpush1.bf16.msra.mxu0 %v6082
    %7234 = vmatprep.subr.bf16.mxu0 %v6091
    %7235 = vmatpush1.bf16.msra.mxu0 %v6090
    %7236 = vmatprep.subr.bf16.mxu0 %v6099
    %7237 = vmatpush1.bf16.msra.mxu0 %v6098
    %7238 = vmatprep.subr.bf16.mxu0 %v6107
    %7239 = vmatpush1.bf16.msra.mxu0 %v6106
    %7240 = vmatprep.subr.bf16.mxu0 %v6115
    %7241 = vmatpush1.bf16.msra.mxu0 %v6114
    %7242 = vmatprep.subr.bf16.mxu0 %v6123
    %7243 = vmatpush1.bf16.msra.mxu0 %v6122
    %7244 = vmatprep.subr.bf16.mxu0 %v6131
    %7245 = vmatpush1.bf16.msra.mxu0 %v6130
    %7246 = vmatprep.subr.bf16.mxu0 %v6139
    %7247 = vmatpush1.bf16.msra.mxu0 %v6138
    %7248 = vmatprep.subr.bf16.mxu0 %v6147
    %7249 = vmatpush1.bf16.msra.mxu0 %v6146
    %7250 = vmatprep.subr.bf16.mxu0 %v6155
    %7251 = vmatpush1.bf16.msra.mxu0 %v6154
    %7252 = vmatprep.mubr.bf16.mxu0 %v3935
    %7253 = vmatmul.mubr.bf16.gmra.mrb[0].mxu0 %v3934
    %v7254 = vpop.f32.mrb[0].mxu0
    %v7255 = vadd.f32 %v4467, %v7254
    %v7256 = vpop.f32.mrb[0].mxu0
    %v7257 = vadd.f32 %v4471, %v7256
    %v7258 = vpop.f32.mrb[0].mxu0
    %v7259 = vpop.f32.mrb[0].mxu0
    %7260 = vdwg.mxu0
    %7261 = vmatprep.subr.bf16.mxu0 %v6163
    %7262 = vmatpush1.bf16.msra.mxu0 %v6162
    %7263 = vmatprep.subr.bf16.mxu0 %v6171
    %7264 = vmatpush1.bf16.msra.mxu0 %v6170
    %7265 = vmatprep.subr.bf16.mxu0 %v6179
    %7266 = vmatpush1.bf16.msra.mxu0 %v6178
    %7267 = vmatprep.subr.bf16.mxu0 %v6187
    %7268 = vmatpush1.bf16.msra.mxu0 %v6186
    %7269 = vmatprep.subr.bf16.mxu0 %v6195
    %7270 = vmatpush1.bf16.msra.mxu0 %v6194
    %7271 = vmatprep.subr.bf16.mxu0 %v6203
    %7272 = vmatpush1.bf16.msra.mxu0 %v6202
    %7273 = vmatprep.subr.bf16.mxu0 %v6211
    %7274 = vmatpush1.bf16.msra.mxu0 %v6210
    %7275 = vmatprep.subr.bf16.mxu0 %v6219
    %7276 = vmatpush1.bf16.msra.mxu0 %v6218
    %7277 = vmatprep.subr.bf16.mxu0 %v6227
    %7278 = vmatpush1.bf16.msra.mxu0 %v6226
    %7279 = vmatprep.subr.bf16.mxu0 %v6235
    %7280 = vmatpush1.bf16.msra.mxu0 %v6234
    %7281 = vmatprep.subr.bf16.mxu0 %v6243
    %7282 = vmatpush1.bf16.msra.mxu0 %v6242
    %7283 = vmatprep.subr.bf16.mxu0 %v6251
    %7284 = vmatpush1.bf16.msra.mxu0 %v6250
    %7285 = vmatprep.subr.bf16.mxu0 %v6259
    %7286 = vmatpush1.bf16.msra.mxu0 %v6258
    %7287 = vmatprep.subr.bf16.mxu0 %v6267
    %7288 = vmatpush1.bf16.msra.mxu0 %v6266
    %7289 = vmatprep.subr.bf16.mxu0 %v6275
    %7290 = vmatpush1.bf16.msra.mxu0 %v6274
    %7291 = vmatprep.subr.bf16.mxu0 %v6283
    %7292 = vmatpush1.bf16.msra.mxu0 %v6282
    %7293 = vmatprep.mubr.bf16.mxu0 %v3937
    %7294 = vmatmul.mubr.bf16.gmra.mrb[0].mxu0 %v3936
    %v7295 = vpop.f32.mrb[0].mxu0
    %v7296 = vadd.f32 %v7255, %v7295
    %v7297 = vpop.f32.mrb[0].mxu0
    %v7298 = vadd.f32 %v7257, %v7297
    %v7299 = vpop.f32.mrb[0].mxu0
    %v7300 = vpop.f32.mrb[0].mxu0
    %7301 = vdwg.mxu0
    %7302 = vmatprep.subr.bf16.mxu0 %v6291
    %7303 = vmatpush1.bf16.msra.mxu0 %v6290
    %7304 = vmatprep.subr.bf16.mxu0 %v6299
    %7305 = vmatpush1.bf16.msra.mxu0 %v6298
    %7306 = vmatprep.subr.bf16.mxu0 %v6307
    %7307 = vmatpush1.bf16.msra.mxu0 %v6306
    %7308 = vmatprep.subr.bf16.mxu0 %v6315
    %7309 = vmatpush1.bf16.msra.mxu0 %v6314
    %7310 = vmatprep.subr.bf16.mxu0 %v6323
    %7311 = vmatpush1.bf16.msra.mxu0 %v6322
    %7312 = vmatprep.subr.bf16.mxu0 %v6331
    %7313 = vmatpush1.bf16.msra.mxu0 %v6330
    %7314 = vmatprep.subr.bf16.mxu0 %v6339
    %7315 = vmatpush1.bf16.msra.mxu0 %v6338
    %7316 = vmatprep.subr.bf16.mxu0 %v6347
    %7317 = vmatpush1.bf16.msra.mxu0 %v6346
    %7318 = vmatprep.subr.bf16.mxu0 %v6355
    %7319 = vmatpush1.bf16.msra.mxu0 %v6354
    %7320 = vmatprep.subr.bf16.mxu0 %v6363
    %7321 = vmatpush1.bf16.msra.mxu0 %v6362
    %7322 = vmatprep.subr.bf16.mxu0 %v6371
    %7323 = vmatpush1.bf16.msra.mxu0 %v6370
    %7324 = vmatprep.subr.bf16.mxu0 %v6379
    %7325 = vmatpush1.bf16.msra.mxu0 %v6378
    %7326 = vmatprep.subr.bf16.mxu0 %v6387
    %7327 = vmatpush1.bf16.msra.mxu0 %v6386
    %7328 = vmatprep.subr.bf16.mxu0 %v6395
    %7329 = vmatpush1.bf16.msra.mxu0 %v6394
    %7330 = vmatprep.subr.bf16.mxu0 %v6403
    %7331 = vmatpush1.bf16.msra.mxu0 %v6402
    %7332 = vmatprep.subr.bf16.mxu0 %v6411
    %7333 = vmatpush1.bf16.msra.mxu0 %v6410
    %7334 = vmatprep.mubr.bf16.mxu0 %v3939
    %7335 = vmatmul.mubr.bf16.gmra.mrb[0].mxu0 %v3938
    %v7336 = vpop.f32.mrb[0].mxu0
    %v7337 = vadd.f32 %v7296, %v7336
    %v7338 = vpop.f32.mrb[0].mxu0
    %v7339 = vadd.f32 %v7298, %v7338
    %v7340 = vpop.f32.mrb[0].mxu0
    %v7341 = vpop.f32.mrb[0].mxu0
    %7342 = vdwg.mxu0
    %7343 = vmatprep.subr.bf16.mxu0 %v6419
    %7344 = vmatpush1.bf16.msra.mxu0 %v6418
    %7345 = vmatprep.subr.bf16.mxu0 %v6427
    %7346 = vmatpush1.bf16.msra.mxu0 %v6426
    %7347 = vmatprep.subr.bf16.mxu0 %v6435
    %7348 = vmatpush1.bf16.msra.mxu0 %v6434
    %7349 = vmatprep.subr.bf16.mxu0 %v6443
    %7350 = vmatpush1.bf16.msra.mxu0 %v6442
    %7351 = vmatprep.subr.bf16.mxu0 %v6451
    %7352 = vmatpush1.bf16.msra.mxu0 %v6450
    %7353 = vmatprep.subr.bf16.mxu0 %v6459
    %7354 = vmatpush1.bf16.msra.mxu0 %v6458
    %7355 = vmatprep.subr.bf16.mxu0 %v6467
    %7356 = vmatpush1.bf16.msra.mxu0 %v6466
    %7357 = vmatprep.subr.bf16.mxu0 %v6475
    %7358 = vmatpush1.bf16.msra.mxu0 %v6474
    %7359 = vmatprep.subr.bf16.mxu0 %v6483
    %7360 = vmatpush1.bf16.msra.mxu0 %v6482
    %7361 = vmatprep.subr.bf16.mxu0 %v6491
    %7362 = vmatpush1.bf16.msra.mxu0 %v6490
    %7363 = vmatprep.subr.bf16.mxu0 %v6499
    %7364 = vmatpush1.bf16.msra.mxu0 %v6498
    %7365 = vmatprep.subr.bf16.mxu0 %v6507
    %7366 = vmatpush1.bf16.msra.mxu0 %v6506
    %7367 = vmatprep.subr.bf16.mxu0 %v6515
    %7368 = vmatpush1.bf16.msra.mxu0 %v6514
    %7369 = vmatprep.subr.bf16.mxu0 %v6523
    %7370 = vmatpush1.bf16.msra.mxu0 %v6522
    %7371 = vmatprep.subr.bf16.mxu0 %v6531
    %7372 = vmatpush1.bf16.msra.mxu0 %v6530
    %7373 = vmatprep.subr.bf16.mxu0 %v6539
    %7374 = vmatpush1.bf16.msra.mxu0 %v6538
    %7375 = vmatprep.mubr.bf16.mxu0 %v3941
    %7376 = vmatmul.mubr.bf16.gmra.mrb[0].mxu0 %v3940
    %v7377 = vpop.f32.mrb[0].mxu0
    %v7378 = vadd.f32 %v7337, %v7377
    %v7379 = vpop.f32.mrb[0].mxu0
    %v7380 = vadd.f32 %v7339, %v7379
    %v7381 = vpop.f32.mrb[0].mxu0
    %v7382 = vpop.f32.mrb[0].mxu0
    %7383 = vdwg.mxu0
    %7384 = vmatprep.subr.bf16.mxu0 %v6037
    %7385 = vmatpush1.bf16.msra.mxu0 %v6036
    %7386 = vmatprep.subr.bf16.mxu0 %v6045
    %7387 = vmatpush1.bf16.msra.mxu0 %v6044
    %7388 = vmatprep.subr.bf16.mxu0 %v6053
    %7389 = vmatpush1.bf16.msra.mxu0 %v6052
    %7390 = vmatprep.subr.bf16.mxu0 %v6061
    %7391 = vmatpush1.bf16.msra.mxu0 %v6060
    %7392 = vmatprep.subr.bf16.mxu0 %v6069
    %7393 = vmatpush1.bf16.msra.mxu0 %v6068
    %7394 = vmatprep.subr.bf16.mxu0 %v6077
    %7395 = vmatpush1.bf16.msra.mxu0 %v6076
    %7396 = vmatprep.subr.bf16.mxu0 %v6085
    %7397 = vmatpush1.bf16.msra.mxu0 %v6084
    %7398 = vmatprep.subr.bf16.mxu0 %v6093
    %7399 = vmatpush1.bf16.msra.mxu0 %v6092
    %7400 = vmatprep.subr.bf16.mxu0 %v6101
    %7401 = vmatpush1.bf16.msra.mxu0 %v6100
    %7402 = vmatprep.subr.bf16.mxu0 %v6109
    %7403 = vmatpush1.bf16.msra.mxu0 %v6108
    %7404 = vmatprep.subr.bf16.mxu0 %v6117
    %7405 = vmatpush1.bf16.msra.mxu0 %v6116
    %7406 = vmatprep.subr.bf16.mxu0 %v6125
    %7407 = vmatpush1.bf16.msra.mxu0 %v6124
    %7408 = vmatprep.subr.bf16.mxu0 %v6133
    %7409 = vmatpush1.bf16.msra.mxu0 %v6132
    %7410 = vmatprep.subr.bf16.mxu0 %v6141
    %7411 = vmatpush1.bf16.msra.mxu0 %v6140
    %7412 = vmatprep.subr.bf16.mxu0 %v6149
    %7413 = vmatpush1.bf16.msra.mxu0 %v6148
    %7414 = vmatprep.subr.bf16.mxu0 %v6157
    %7415 = vmatpush1.bf16.msra.mxu0 %v6156
    %7416 = vmatprep.mubr.bf16.mxu0 %v3935
    %7417 = vmatmul.mubr.bf16.gmra.mrb[0].mxu0 %v3934
    %v7418 = vpop.f32.mrb[0].mxu0
    %v7419 = vadd.f32 %v4475, %v7418
    %v7420 = vpop.f32.mrb[0].mxu0
    %v7421 = vadd.f32 %v4479, %v7420
    %v7422 = vpop.f32.mrb[0].mxu0
    %v7423 = vpop.f32.mrb[0].mxu0
    %7424 = vdwg.mxu0
    %7425 = vmatprep.subr.bf16.mxu0 %v6165
    %7426 = vmatpush1.bf16.msra.mxu0 %v6164
    %7427 = vmatprep.subr.bf16.mxu0 %v6173
    %7428 = vmatpush1.bf16.msra.mxu0 %v6172
    %7429 = vmatprep.subr.bf16.mxu0 %v6181
    %7430 = vmatpush1.bf16.msra.mxu0 %v6180
    %7431 = vmatprep.subr.bf16.mxu0 %v6189
    %7432 = vmatpush1.bf16.msra.mxu0 %v6188
    %7433 = vmatprep.subr.bf16.mxu0 %v6197
    %7434 = vmatpush1.bf16.msra.mxu0 %v6196
    %7435 = vmatprep.subr.bf16.mxu0 %v6205
    %7436 = vmatpush1.bf16.msra.mxu0 %v6204
    %7437 = vmatprep.subr.bf16.mxu0 %v6213
    %7438 = vmatpush1.bf16.msra.mxu0 %v6212
    %7439 = vmatprep.subr.bf16.mxu0 %v6221
    %7440 = vmatpush1.bf16.msra.mxu0 %v6220
    %7441 = vmatprep.subr.bf16.mxu0 %v6229
    %7442 = vmatpush1.bf16.msra.mxu0 %v6228
    %7443 = vmatprep.subr.bf16.mxu0 %v6237
    %7444 = vmatpush1.bf16.msra.mxu0 %v6236
    %7445 = vmatprep.subr.bf16.mxu0 %v6245
    %7446 = vmatpush1.bf16.msra.mxu0 %v6244
    %7447 = vmatprep.subr.bf16.mxu0 %v6253
    %7448 = vmatpush1.bf16.msra.mxu0 %v6252
    %7449 = vmatprep.subr.bf16.mxu0 %v6261
    %7450 = vmatpush1.bf16.msra.mxu0 %v6260
    %7451 = vmatprep.subr.bf16.mxu0 %v6269
    %7452 = vmatpush1.bf16.msra.mxu0 %v6268
    %7453 = vmatprep.subr.bf16.mxu0 %v6277
    %7454 = vmatpush1.bf16.msra.mxu0 %v6276
    %7455 = vmatprep.subr.bf16.mxu0 %v6285
    %7456 = vmatpush1.bf16.msra.mxu0 %v6284
    %7457 = vmatprep.mubr.bf16.mxu0 %v3937
    %7458 = vmatmul.mubr.bf16.gmra.mrb[0].mxu0 %v3936
    %v7459 = vpop.f32.mrb[0].mxu0
    %v7460 = vadd.f32 %v7419, %v7459
    %v7461 = vpop.f32.mrb[0].mxu0
    %v7462 = vadd.f32 %v7421, %v7461
    %v7463 = vpop.f32.mrb[0].mxu0
    %v7464 = vpop.f32.mrb[0].mxu0
    %7465 = vdwg.mxu0
    %7466 = vmatprep.subr.bf16.mxu0 %v6293
    %7467 = vmatpush1.bf16.msra.mxu0 %v6292
    %7468 = vmatprep.subr.bf16.mxu0 %v6301
    %7469 = vmatpush1.bf16.msra.mxu0 %v6300
    %7470 = vmatprep.subr.bf16.mxu0 %v6309
    %7471 = vmatpush1.bf16.msra.mxu0 %v6308
    %7472 = vmatprep.subr.bf16.mxu0 %v6317
    %7473 = vmatpush1.bf16.msra.mxu0 %v6316
    %7474 = vmatprep.subr.bf16.mxu0 %v6325
    %7475 = vmatpush1.bf16.msra.mxu0 %v6324
    %7476 = vmatprep.subr.bf16.mxu0 %v6333
    %7477 = vmatpush1.bf16.msra.mxu0 %v6332
    %7478 = vmatprep.subr.bf16.mxu0 %v6341
    %7479 = vmatpush1.bf16.msra.mxu0 %v6340
    %7480 = vmatprep.subr.bf16.mxu0 %v6349
    %7481 = vmatpush1.bf16.msra.mxu0 %v6348
    %7482 = vmatprep.subr.bf16.mxu0 %v6357
    %7483 = vmatpush1.bf16.msra.mxu0 %v6356
    %7484 = vmatprep.subr.bf16.mxu0 %v6365
    %7485 = vmatpush1.bf16.msra.mxu0 %v6364
    %7486 = vmatprep.subr.bf16.mxu0 %v6373
    %7487 = vmatpush1.bf16.msra.mxu0 %v6372
    %7488 = vmatprep.subr.bf16.mxu0 %v6381
    %7489 = vmatpush1.bf16.msra.mxu0 %v6380
    %7490 = vmatprep.subr.bf16.mxu0 %v6389
    %7491 = vmatpush1.bf16.msra.mxu0 %v6388
    %7492 = vmatprep.subr.bf16.mxu0 %v6397
    %7493 = vmatpush1.bf16.msra.mxu0 %v6396
    %7494 = vmatprep.subr.bf16.mxu0 %v6405
    %7495 = vmatpush1.bf16.msra.mxu0 %v6404
    %7496 = vmatprep.subr.bf16.mxu0 %v6413
    %7497 = vmatpush1.bf16.msra.mxu0 %v6412
    %7498 = vmatprep.mubr.bf16.mxu0 %v3939
    %7499 = vmatmul.mubr.bf16.gmra.mrb[0].mxu0 %v3938
    %v7500 = vpop.f32.mrb[0].mxu0
    %v7501 = vadd.f32 %v7460, %v7500
    %v7502 = vpop.f32.mrb[0].mxu0
    %v7503 = vadd.f32 %v7462, %v7502
    %v7504 = vpop.f32.mrb[0].mxu0
    %v7505 = vpop.f32.mrb[0].mxu0
    %7506 = vdwg.mxu0
    %7507 = vmatprep.subr.bf16.mxu0 %v6421
    %7508 = vmatpush1.bf16.msra.mxu0 %v6420
    %7509 = vmatprep.subr.bf16.mxu0 %v6429
    %7510 = vmatpush1.bf16.msra.mxu0 %v6428
    %7511 = vmatprep.subr.bf16.mxu0 %v6437
    %7512 = vmatpush1.bf16.msra.mxu0 %v6436
    %7513 = vmatprep.subr.bf16.mxu0 %v6445
    %7514 = vmatpush1.bf16.msra.mxu0 %v6444
    %7515 = vmatprep.subr.bf16.mxu0 %v6453
    %7516 = vmatpush1.bf16.msra.mxu0 %v6452
    %7517 = vmatprep.subr.bf16.mxu0 %v6461
    %7518 = vmatpush1.bf16.msra.mxu0 %v6460
    %7519 = vmatprep.subr.bf16.mxu0 %v6469
    %7520 = vmatpush1.bf16.msra.mxu0 %v6468
    %7521 = vmatprep.subr.bf16.mxu0 %v6477
    %7522 = vmatpush1.bf16.msra.mxu0 %v6476
    %7523 = vmatprep.subr.bf16.mxu0 %v6485
    %7524 = vmatpush1.bf16.msra.mxu0 %v6484
    %7525 = vmatprep.subr.bf16.mxu0 %v6493
    %7526 = vmatpush1.bf16.msra.mxu0 %v6492
    %7527 = vmatprep.subr.bf16.mxu0 %v6501
    %7528 = vmatpush1.bf16.msra.mxu0 %v6500
    %7529 = vmatprep.subr.bf16.mxu0 %v6509
    %7530 = vmatpush1.bf16.msra.mxu0 %v6508
    %7531 = vmatprep.subr.bf16.mxu0 %v6517
    %7532 = vmatpush1.bf16.msra.mxu0 %v6516
    %7533 = vmatprep.subr.bf16.mxu0 %v6525
    %7534 = vmatpush1.bf16.msra.mxu0 %v6524
    %7535 = vmatprep.subr.bf16.mxu0 %v6533
    %7536 = vmatpush1.bf16.msra.mxu0 %v6532
    %7537 = vmatprep.subr.bf16.mxu0 %v6541
    %7538 = vmatpush1.bf16.msra.mxu0 %v6540
    %7539 = vmatprep.mubr.bf16.mxu0 %v3941
    %7540 = vmatmul.mubr.bf16.gmra.mrb[0].mxu0 %v3940
    %v7541 = vpop.f32.mrb[0].mxu0
    %v7542 = vadd.f32 %v7501, %v7541
    %v7543 = vpop.f32.mrb[0].mxu0
    %v7544 = vadd.f32 %v7503, %v7543
    %v7545 = vpop.f32.mrb[0].mxu0
    %v7546 = vpop.f32.mrb[0].mxu0
    %7547 = vdwg.mxu0
    %7548 = vmatprep.subr.bf16.mxu0 %v6039
    %7549 = vmatpush1.bf16.msra.mxu0 %v6038
    %7550 = vmatprep.subr.bf16.mxu0 %v6047
    %7551 = vmatpush1.bf16.msra.mxu0 %v6046
    %7552 = vmatprep.subr.bf16.mxu0 %v6055
    %7553 = vmatpush1.bf16.msra.mxu0 %v6054
    %7554 = vmatprep.subr.bf16.mxu0 %v6063
    %7555 = vmatpush1.bf16.msra.mxu0 %v6062
    %7556 = vmatprep.subr.bf16.mxu0 %v6071
    %7557 = vmatpush1.bf16.msra.mxu0 %v6070
    %7558 = vmatprep.subr.bf16.mxu0 %v6079
    %7559 = vmatpush1.bf16.msra.mxu0 %v6078
    %7560 = vmatprep.subr.bf16.mxu0 %v6087
    %7561 = vmatpush1.bf16.msra.mxu0 %v6086
    %7562 = vmatprep.subr.bf16.mxu0 %v6095
    %7563 = vmatpush1.bf16.msra.mxu0 %v6094
    %7564 = vmatprep.subr.bf16.mxu0 %v6103
    %7565 = vmatpush1.bf16.msra.mxu0 %v6102
    %7566 = vmatprep.subr.bf16.mxu0 %v6111
    %7567 = vmatpush1.bf16.msra.mxu0 %v6110
    %7568 = vmatprep.subr.bf16.mxu0 %v6119
    %7569 = vmatpush1.bf16.msra.mxu0 %v6118
    %7570 = vmatprep.subr.bf16.mxu0 %v6127
    %7571 = vmatpush1.bf16.msra.mxu0 %v6126
    %7572 = vmatprep.subr.bf16.mxu0 %v6135
    %7573 = vmatpush1.bf16.msra.mxu0 %v6134
    %7574 = vmatprep.subr.bf16.mxu0 %v6143
    %7575 = vmatpush1.bf16.msra.mxu0 %v6142
    %7576 = vmatprep.subr.bf16.mxu0 %v6151
    %7577 = vmatpush1.bf16.msra.mxu0 %v6150
    %7578 = vmatprep.subr.bf16.mxu0 %v6159
    %7579 = vmatpush1.bf16.msra.mxu0 %v6158
    %7580 = vmatprep.mubr.bf16.mxu0 %v3935
    %7581 = vmatmul.mubr.bf16.gmra.mrb[0].mxu0 %v3934
    %v7582 = vpop.f32.mrb[0].mxu0
    %v7583 = vadd.f32 %v4483, %v7582
    %v7584 = vpop.f32.mrb[0].mxu0
    %v7585 = vadd.f32 %v4487, %v7584
    %v7586 = vpop.f32.mrb[0].mxu0
    %v7587 = vpop.f32.mrb[0].mxu0
    %7588 = vdwg.mxu0
    %7589 = vmatprep.subr.bf16.mxu0 %v6167
    %7590 = vmatpush1.bf16.msra.mxu0 %v6166
    %7591 = vmatprep.subr.bf16.mxu0 %v6175
    %7592 = vmatpush1.bf16.msra.mxu0 %v6174
    %7593 = vmatprep.subr.bf16.mxu0 %v6183
    %7594 = vmatpush1.bf16.msra.mxu0 %v6182
    %7595 = vmatprep.subr.bf16.mxu0 %v6191
    %7596 = vmatpush1.bf16.msra.mxu0 %v6190
    %7597 = vmatprep.subr.bf16.mxu0 %v6199
    %7598 = vmatpush1.bf16.msra.mxu0 %v6198
    %7599 = vmatprep.subr.bf16.mxu0 %v6207
    %7600 = vmatpush1.bf16.msra.mxu0 %v6206
    %7601 = vmatprep.subr.bf16.mxu0 %v6215
    %7602 = vmatpush1.bf16.msra.mxu0 %v6214
    %7603 = vmatprep.subr.bf16.mxu0 %v6223
    %7604 = vmatpush1.bf16.msra.mxu0 %v6222
    %7605 = vmatprep.subr.bf16.mxu0 %v6231
    %7606 = vmatpush1.bf16.msra.mxu0 %v6230
    %7607 = vmatprep.subr.bf16.mxu0 %v6239
    %7608 = vmatpush1.bf16.msra.mxu0 %v6238
    %7609 = vmatprep.subr.bf16.mxu0 %v6247
    %7610 = vmatpush1.bf16.msra.mxu0 %v6246
    %7611 = vmatprep.subr.bf16.mxu0 %v6255
    %7612 = vmatpush1.bf16.msra.mxu0 %v6254
    %7613 = vmatprep.subr.bf16.mxu0 %v6263
    %7614 = vmatpush1.bf16.msra.mxu0 %v6262
    %7615 = vmatprep.subr.bf16.mxu0 %v6271
    %7616 = vmatpush1.bf16.msra.mxu0 %v6270
    %7617 = vmatprep.subr.bf16.mxu0 %v6279
    %7618 = vmatpush1.bf16.msra.mxu0 %v6278
    %7619 = vmatprep.subr.bf16.mxu0 %v6287
    %7620 = vmatpush1.bf16.msra.mxu0 %v6286
    %7621 = vmatprep.mubr.bf16.mxu0 %v3937
    %7622 = vmatmul.mubr.bf16.gmra.mrb[0].mxu0 %v3936
    %v7623 = vpop.f32.mrb[0].mxu0
    %v7624 = vadd.f32 %v7583, %v7623
    %v7625 = vpop.f32.mrb[0].mxu0
    %v7626 = vadd.f32 %v7585, %v7625
    %v7627 = vpop.f32.mrb[0].mxu0
    %v7628 = vpop.f32.mrb[0].mxu0
    %7629 = vdwg.mxu0
    %7630 = vmatprep.subr.bf16.mxu0 %v6295
    %7631 = vmatpush1.bf16.msra.mxu0 %v6294
    %7632 = vmatprep.subr.bf16.mxu0 %v6303
    %7633 = vmatpush1.bf16.msra.mxu0 %v6302
    %7634 = vmatprep.subr.bf16.mxu0 %v6311
    %7635 = vmatpush1.bf16.msra.mxu0 %v6310
    %7636 = vmatprep.subr.bf16.mxu0 %v6319
    %7637 = vmatpush1.bf16.msra.mxu0 %v6318
    %7638 = vmatprep.subr.bf16.mxu0 %v6327
    %7639 = vmatpush1.bf16.msra.mxu0 %v6326
    %7640 = vmatprep.subr.bf16.mxu0 %v6335
    %7641 = vmatpush1.bf16.msra.mxu0 %v6334
    %7642 = vmatprep.subr.bf16.mxu0 %v6343
    %7643 = vmatpush1.bf16.msra.mxu0 %v6342
    %7644 = vmatprep.subr.bf16.mxu0 %v6351
    %7645 = vmatpush1.bf16.msra.mxu0 %v6350
    %7646 = vmatprep.subr.bf16.mxu0 %v6359
    %7647 = vmatpush1.bf16.msra.mxu0 %v6358
    %7648 = vmatprep.subr.bf16.mxu0 %v6367
    %7649 = vmatpush1.bf16.msra.mxu0 %v6366
    %7650 = vmatprep.subr.bf16.mxu0 %v6375
    %7651 = vmatpush1.bf16.msra.mxu0 %v6374
    %7652 = vmatprep.subr.bf16.mxu0 %v6383
    %7653 = vmatpush1.bf16.msra.mxu0 %v6382
    %7654 = vmatprep.subr.bf16.mxu0 %v6391
    %7655 = vmatpush1.bf16.msra.mxu0 %v6390
    %7656 = vmatprep.subr.bf16.mxu0 %v6399
    %7657 = vmatpush1.bf16.msra.mxu0 %v6398
    %7658 = vmatprep.subr.bf16.mxu0 %v6407
    %7659 = vmatpush1.bf16.msra.mxu0 %v6406
    %7660 = vmatprep.subr.bf16.mxu0 %v6415
    %7661 = vmatpush1.bf16.msra.mxu0 %v6414
    %7662 = vmatprep.mubr.bf16.mxu0 %v3939
    %7663 = vmatmul.mubr.bf16.gmra.mrb[0].mxu0 %v3938
    %v7664 = vpop.f32.mrb[0].mxu0
    %v7665 = vadd.f32 %v7624, %v7664
    %v7666 = vpop.f32.mrb[0].mxu0
    %v7667 = vadd.f32 %v7626, %v7666
    %v7668 = vpop.f32.mrb[0].mxu0
    %v7669 = vpop.f32.mrb[0].mxu0
    %7670 = vdwg.mxu0
    %7671 = vmatprep.subr.bf16.mxu0 %v6423
    %7672 = vmatpush1.bf16.msra.mxu0 %v6422
    %7673 = vmatprep.subr.bf16.mxu0 %v6431
    %7674 = vmatpush1.bf16.msra.mxu0 %v6430
    %7675 = vmatprep.subr.bf16.mxu0 %v6439
    %7676 = vmatpush1.bf16.msra.mxu0 %v6438
    %7677 = vmatprep.subr.bf16.mxu0 %v6447
    %7678 = vmatpush1.bf16.msra.mxu0 %v6446
    %7679 = vmatprep.subr.bf16.mxu0 %v6455
    %7680 = vmatpush1.bf16.msra.mxu0 %v6454
    %7681 = vmatprep.subr.bf16.mxu0 %v6463
    %7682 = vmatpush1.bf16.msra.mxu0 %v6462
    %7683 = vmatprep.subr.bf16.mxu0 %v6471
    %7684 = vmatpush1.bf16.msra.mxu0 %v6470
    %7685 = vmatprep.subr.bf16.mxu0 %v6479
    %7686 = vmatpush1.bf16.msra.mxu0 %v6478
    %7687 = vmatprep.subr.bf16.mxu0 %v6487
    %7688 = vmatpush1.bf16.msra.mxu0 %v6486
    %7689 = vmatprep.subr.bf16.mxu0 %v6495
    %7690 = vmatpush1.bf16.msra.mxu0 %v6494
    %7691 = vmatprep.subr.bf16.mxu0 %v6503
    %7692 = vmatpush1.bf16.msra.mxu0 %v6502
    %7693 = vmatprep.subr.bf16.mxu0 %v6511
    %7694 = vmatpush1.bf16.msra.mxu0 %v6510
    %7695 = vmatprep.subr.bf16.mxu0 %v6519
    %7696 = vmatpush1.bf16.msra.mxu0 %v6518
    %7697 = vmatprep.subr.bf16.mxu0 %v6527
    %7698 = vmatpush1.bf16.msra.mxu0 %v6526
    %7699 = vmatprep.subr.bf16.mxu0 %v6535
    %7700 = vmatpush1.bf16.msra.mxu0 %v6534
    %7701 = vmatprep.subr.bf16.mxu0 %v6543
    %7702 = vmatpush1.bf16.msra.mxu0 %v6542
    %7703 = vmatprep.mubr.bf16.mxu0 %v3941
    %7704 = vmatmul.mubr.bf16.gmra.mrb[0].mxu0 %v3940
    %v7705 = vpop.f32.mrb[0].mxu0
    %v7706 = vadd.f32 %v7665, %v7705
    %v7707 = vpop.f32.mrb[0].mxu0
    %v7708 = vadd.f32 %v7667, %v7707
    %v7709 = vpop.f32.mrb[0].mxu0
    %v7710 = vpop.f32.mrb[0].mxu0
    %7711 = vdwg.mxu0
    %v7712 = vmax.f32 %v7214, 0.0
    %v7713 = vmax.f32 %v7216, 0.0
    %v7714 = vmax.f32 %v7378, 0.0
    %v7715 = vmax.f32 %v7380, 0.0
    %v7716 = vmax.f32 %v7542, 0.0
    %v7717 = vmax.f32 %v7544, 0.0
    %v7718 = vmax.f32 %v7706, 0.0
    %v7719 = vmax.f32 %v7708, 0.0
    %v7720 = vld [vmem:[#allocation13] sm:$0xff]
    %v7722 = vlaneseq
    %v7723 = vshrl.u32 %v7722, 7
    %v7724 = vsub.s32 0, %v7723
    %v7725 = vrot.slane %v7720, %v7724
    %v7726 = vlaneseq
    %v7727 = vshrl.u32 %v7726, 7
    %v7728 = vsub.s32 1, %v7727
    %v7729 = vrot.slane %v7720, %v7728
    %v7730 = vlaneseq
    %v7731 = vshrl.u32 %v7730, 7
    %v7732 = vsub.s32 2, %v7731
    %v7733 = vrot.slane %v7720, %v7732
    %v7734 = vlaneseq
    %v7735 = vshrl.u32 %v7734, 7
    %v7736 = vsub.s32 3, %v7735
    %v7737 = vrot.slane %v7720, %v7736
    %v7738 = vlaneseq
    %v7739 = vshrl.u32 %v7738, 7
    %v7740 = vsub.s32 4, %v7739
    %v7741 = vrot.slane %v7720, %v7740
    %v7742 = vlaneseq
    %v7743 = vshrl.u32 %v7742, 7
    %v7744 = vsub.s32 5, %v7743
    %v7745 = vrot.slane %v7720, %v7744
    %v7746 = vlaneseq
    %v7747 = vshrl.u32 %v7746, 7
    %v7748 = vsub.s32 6, %v7747
    %v7749 = vrot.slane %v7720, %v7748
    %v7750 = vlaneseq
    %v7751 = vshrl.u32 %v7750, 7
    %v7752 = vsub.s32 7, %v7751
    %v7753 = vrot.slane %v7720, %v7752
    %v7762 = vmul.f32 %v7712, %v7725
    %v7763 = vmul.f32 %v7713, %v7729
    %v7764 = vmul.f32 %v7714, %v7733
    %v7765 = vmul.f32 %v7715, %v7737
    %v7766 = vmul.f32 %v7716, %v7741
    %v7767 = vmul.f32 %v7717, %v7745
    %v7768 = vmul.f32 %v7718, %v7749
    %v7769 = vmul.f32 %v7719, %v7753
    %v7770 = vadd.f32 %v7762, %v7763
    %v7771 = vadd.f32 %v7770, %v7764
    %v7772 = vadd.f32 %v7771, %v7765
    %v7773 = vadd.f32 %v7772, %v7766
    %v7774 = vadd.f32 %v7773, %v7767
    %v7775 = vadd.f32 %v7774, %v7768
    %v7776 = vadd.f32 %v7775, %v7769
    %7777 = vadd.xlane.f32.xlu0 %v7776
    %v7778 = vpop.xlane.xlu0 %7777
    %v7779 = vld [vmem:[#allocation2] sm:$0x1]
    %v7781 = vlaneseq
    %v7782 = vshrl.u32 %v7781, 7
    %v7783 = vsub.s32 0, %v7782
    %v7784 = vrot.slane %v7779, %v7783
    %v7786 = vadd.f32 %v7778, %v7784
    %v7787 = vxor.u32 %v7786, 2147483648
    %v7788 = vmul.f32 %v7787, 1.442695
    %v7789 = vpow.pop %v7788
    %v7790 = vadd.f32 %v7789, 1.0
    %v7791 = vrcp.pop %v7790
    %v7792 = vmul.f32 1.0, %v7791
    %vm7793 = vcmask 7168
    %7794 = vst.msk [vmem:[%s8] sm:$0xff] %vm7793, %v7792
    // Predicated region
    $region62: #{tpu_custom_call.1} parent=1 // pred_check
      _
    $region63: #{tpu_custom_call.1} parent=1 // pred_check_branch
      %7796 = sbr.rel (0) target = $region65
    $region64: #{tpu_custom_call.1} parent=1 // pred_region
      _
    $region65: #{tpu_custom_call.1} parent=1 // pred_fallthru
      _
    // Predicated region
    $region66: #{tpu_custom_call.1} parent=1 // pred_check
      _
    $region67: #{tpu_custom_call.1} parent=1 // pred_check_branch
      %7798 = sbr.rel (0) target = $region69
    $region68: #{tpu_custom_call.1} parent=1 // pred_region
      _
    $region69: #{tpu_custom_call.1} parent=1 // pred_fallthru
      _
    %7799 = vsyncpa [#allocation4], 1
    %7800 = vsyncpa [#allocation6], 1
    %7801 = vsyncpa [#allocation9], 1
    %7802 = vsyncpa [#allocation12], 1

</llo_original>
